<compile_context>
chip_gen: v7x
topology: tpu7x:2x2x1
jax: 0.10.0
libtpu: 0.0.40
codegen_flags: <defaults>
</compile_context>

<pallas_src>
import functools

import jax
import jax.numpy as jnp
from jax import lax
from jax.experimental import pallas as pl
from jax.experimental.pallas import tpu as pltpu

EPS = 1e-5
LANES = 128
NUM_PHASES = 5          # 4 BN-statistics sweeps + 1 output sweep


def _round8(n):
    return -(-n // 8) * 8


# ----------------------------------------------------------------------------
# Parameter slab layout / packing (feature-major)
# ----------------------------------------------------------------------------
def _param_layout(input_dim, latent_dim):
    """Row layout of the packed [R, 128] parameter slab.

    Weights are stored [C_out, C_in] (PyTorch nn.Linear convention), biases and
    BN gammas/betas as [C, 1] columns.  Every block starts 8-row aligned so all
    in-kernel slices are sublane-tile aligned.
    """
    order = [
        ("w1", 32, input_dim), ("b1", 32, 1), ("g1", 32, 1), ("be1", 32, 1),
        ("w2", 16, 32), ("b2", 16, 1), ("g2", 16, 1), ("be2", 16, 1),
        ("w3", latent_dim, 16), ("b3", latent_dim, 1),
        ("w4", 16, latent_dim), ("b4", 16, 1), ("g3", 16, 1), ("be3", 16, 1),
        ("w5", 32, 16), ("b5", 32, 1), ("g4", 32, 1), ("be4", 32, 1),
        ("w6", input_dim, 32), ("b6", input_dim, 1),
    ]
    layout, off = {}, 0
    for name, r, c in order:
        layout[name] = (off, r, c)
        off += _round8(r)
    return layout, off


def pack_params(params, input_dim, latent_dim):
    """Pack all parameters into a single zero-padded [R, 128] f32 slab.

    `params` uses PyTorch conventions: weights [out_features, in_features],
    biases / gammas / betas 1-D [C].
    """
    layout, rows = _param_layout(input_dim, latent_dim)
    slab = jnp.zeros((rows, LANES), jnp.float32)
    for name, (off, r, c) in layout.items():
        slab = slab.at[off:off + r, :c].set(
            jnp.asarray(params[name], jnp.float32).reshape(r, c))
    return slab


# ----------------------------------------------------------------------------
# Kernel
# ----------------------------------------------------------------------------
def _make_kernel(layout, batch, input_dim, latent_dim, tile_b):
    inv_b = 1.0 / batch
    relu = lambda a: jnp.maximum(a, 0.0)

    def kernel(x_ref, p_ref, enc_ref, dec_ref, s1_ref, s2_ref, s3_ref, s4_ref):
        phase = pl.program_id(0)
        tile = pl.program_id(1)

        def weight(name):
            off, r, c = layout[name]
            return p_ref[off:off + r, 0:c]          # [C_out, C_in]

        def col(name):
            off, r, _ = layout[name]
            return p_ref[off:off + r, 0:1]          # [C, 1]

        # Valid-lane mask for this batch tile: makes the BN statistics exact
        # for ragged / padded batches.
        lane = lax.broadcasted_iota(jnp.int32, (1, tile_b), 1) + tile * tile_b
        maskrow = (lane < batch).astype(jnp.float32)            # [1, tile_b]

        def accum_stats(h, s_ref):
            # sum(h) and sum(h*h) in one fused lane reduction of the stacked
            # [h ; h*h] block (batch is the lane axis in this layout).
            hh = jnp.concatenate([h, h * h], axis=0)             # [2C, tile_b]
            part = jnp.sum(hh * maskrow, axis=1, keepdims=True)  # [2C, 1]

            @pl.when(tile == 0)
            def _():
                s_ref[...] = jnp.zeros_like(s_ref)

            s_ref[...] += part

        def bn(a, s_ref, c, gname, bename):
            s = s_ref[...]                                       # [2C, 1]
            mu = s[0:c] * inv_b
            var = jnp.maximum(s[c:2 * c] * inv_b - mu * mu, 0.0)  # biased var
            scale = col(gname) * lax.rsqrt(var + EPS)            # [C, 1]
            shift = col(bename) - mu * scale
            return a * scale + shift                              # [C, tile_b]

        def linear(a, wname, bname):
            return jnp.dot(weight(wname), a,
                           preferred_element_type=jnp.float32) + col(bname)

        x = x_ref[...]                                            # [in, tile_b]

        def f_h1():
            return relu(linear(x, "w1", "b1"))

        def f_h2(a):
            return relu(linear(bn(a, s1_ref, 32, "g1", "be1"), "w2", "b2"))

        def f_enc(a):
            return relu(linear(bn(a, s2_ref, 16, "g2", "be2"), "w3", "b3"))

        def f_h4(a):
            return relu(linear(a, "w4", "b4"))

        def f_h5(a):
            return relu(linear(bn(a, s3_ref, 16, "g3", "be3"), "w5", "b5"))

        def f_dec(a):
            return linear(bn(a, s4_ref, 32, "g4", "be4"), "w6", "b6")

        # Phases 0-3: accumulate whole-batch BN statistics (one BN per sweep).
        @pl.when(phase == 0)
        def _():
            accum_stats(f_h1(), s1_ref)

        @pl.when(phase == 1)
        def _():
            accum_stats(f_h2(f_h1()), s2_ref)

        @pl.when(phase == 2)
        def _():
            accum_stats(f_h4(f_enc(f_h2(f_h1()))), s3_ref)

        @pl.when(phase == 3)
        def _():
            accum_stats(f_h5(f_h4(f_enc(f_h2(f_h1())))), s4_ref)

        # Phase 4: full forward with all BN statistics known; store outputs.
        @pl.when(phase == NUM_PHASES - 1)
        def _():
            e = f_enc(f_h2(f_h1()))
            d = f_dec(f_h5(f_h4(e)))
            enc_ref[...] = e.astype(enc_ref.dtype)
            dec_ref[...] = d.astype(dec_ref.dtype)

    return kernel


# ----------------------------------------------------------------------------
# Wrapper
# ----------------------------------------------------------------------------
@functools.partial(jax.jit, static_argnames=("input_dim", "latent_dim", "tile_b"))
def refined_transaction_autoencoder(x, slab, *, input_dim, latent_dim,
                                    tile_b=128):
    """x: [batch, input_dim] (module convention). Returns (encoded, decoded).

    For large batches sweep tile_b over ~1024-4096 (multiples of 128); the
    default scoped-VMEM limits (16 MiB v5e / 32 MiB v6e,v7x) are more than
    enough for this kernel's footprint, so no vmem_limit_bytes is requested.
    """
    batch = x.shape[0]
    layout, slab_rows = _param_layout(input_dim, latent_dim)

    # Feature-major (lane-dense) layout for the kernel: [C, B].  A caller that
    # keeps its data feature-major end-to-end can skip these relayouts.
    xt = x.astype(jnp.float32).T                                  # [in, batch]
    n_tiles = pl.cdiv(batch, tile_b)
    b_pad = n_tiles * tile_b
    if b_pad != batch:
        xt = jnp.pad(xt, ((0, 0), (0, b_pad - batch)))

    kernel = _make_kernel(layout, batch, input_dim, latent_dim, tile_b)

    def x_map(p, i):
        return (0, i)

    def slab_map(p, i):                     # constant -> fetched once, resident
        return (0, 0)

    def out_map(p, i):
        # Park on block 0 during the stats phases so no garbage is written
        # back to HBM; real write-backs only happen during the final phase.
        return (0, jnp.where(p == NUM_PHASES - 1, i, 0))

    enc_fm, dec_fm = pl.pallas_call(
        kernel,
        out_shape=(jax.ShapeDtypeStruct((latent_dim, b_pad), jnp.float32),
                   jax.ShapeDtypeStruct((input_dim, b_pad), jnp.float32)),
        grid_spec=pltpu.PrefetchScalarGridSpec(
            num_scalar_prefetch=0,
            grid=(NUM_PHASES, n_tiles),
            in_specs=[pl.BlockSpec((input_dim, tile_b), x_map),
                      pl.BlockSpec((slab_rows, LANES), slab_map)],
            out_specs=[pl.BlockSpec((latent_dim, tile_b), out_map),
                       pl.BlockSpec((input_dim, tile_b), out_map)],
            scratch_shapes=[pltpu.VMEM((64, 1), jnp.float32),   # BN1 sum|sumsq
                            pltpu.VMEM((32, 1), jnp.float32),   # BN2
                            pltpu.VMEM((32, 1), jnp.float32),   # BN3
                            pltpu.VMEM((64, 1), jnp.float32)]), # BN4
        compiler_params=pltpu.CompilerParams(
            # Whole-batch BN stats make both axes sequential dependencies.
            dimension_semantics=("arbitrary", "arbitrary")),
    )(xt, slab)

    # Back to the module's batch-major convention (no-op slices when the batch
    # is already a multiple of tile_b).
    return enc_fm[:, :batch].T, dec_fm[:, :batch].T


# ----------------------------------------------------------------------------
# Parameter init + pure-JAX reference (mirrors the PyTorch forward)
# ----------------------------------------------------------------------------
def init_params(key, input_dim, latent_dim=8):
    """Deterministic synthetic parameters (PyTorch-convention shapes)."""
    dims = [
        (input_dim, 32), (32, 16), (16, latent_dim),      # encoder linears
        (latent_dim, 16), (16, 32), (32, input_dim),      # decoder linears
    ]
    keys = jax.random.split(key, 2 * len(dims))
    params = {}
    for i, (din, dout) in enumerate(dims):
        bound = 1.0 / float(jnp.sqrt(jnp.float32(din)))
        params[f"w{i + 1}"] = jax.random.uniform(
            keys[2 * i], (dout, din), jnp.float32, -bound, bound)   # [out, in]
        params[f"b{i + 1}"] = jax.random.uniform(
            keys[2 * i + 1], (dout,), jnp.float32, -bound, bound)
    # BatchNorm1d affine params: gamma=1, beta=0 (PyTorch default init).
    for j, c in enumerate([32, 16, 16, 32]):
        params[f"g{j + 1}"] = jnp.ones((c,), jnp.float32)
        params[f"be{j + 1}"] = jnp.zeros((c,), jnp.float32)
    return params


def reference_forward(x, params):
    """Pure-JAX reference mirroring the PyTorch forward (training-mode BN)."""
    def lin(h, w, b):
        return h @ w.T + b

    def bn(h, g, b):
        mu = h.mean(0, keepdims=True)
        var = ((h - mu) ** 2).mean(0, keepdims=True)     # biased batch variance
        return (h - mu) / jnp.sqrt(var + EPS) * g + b

    h = jax.nn.relu(lin(x, params["w1"], params["b1"]))
    h = bn(h, params["g1"], params["be1"])
    h = jax.nn.relu(lin(h, params["w2"], params["b2"]))
    h = bn(h, params["g2"], params["be2"])
    enc = jax.nn.relu(lin(h, params["w3"], params["b3"]))
    h = jax.nn.relu(lin(enc, params["w4"], params["b4"]))
    h = bn(h, params["g3"], params["be3"])
    h = jax.nn.relu(lin(h, params["w5"], params["b5"]))
    h = bn(h, params["g4"], params["be4"])
    dec = lin(h, params["w6"], params["b6"])
    return enc, dec


if __name__ == "__main__":
    # Small but non-trivial: 200 rows -> 2 batch tiles of 128 (second ragged),
    # exercising the multi-tile BN-stat accumulation and the valid-lane mask.
    B, INPUT_DIM, LATENT_DIM = 200, 16, 8

    key = jax.random.PRNGKey(0)
    k_x, k_p = jax.random.split(key)
    x = jax.random.normal(k_x, (B, INPUT_DIM), jnp.float32)
    params = init_params(k_p, INPUT_DIM, LATENT_DIM)
    slab = pack_params(params, INPUT_DIM, LATENT_DIM)

    encoded, decoded = refined_transaction_autoencoder(
        x, slab, input_dim=INPUT_DIM, latent_dim=LATENT_DIM, tile_b=128)
    jax.block_until_ready((encoded, decoded))

    enc_ref, dec_ref = reference_forward(x, params)
    assert encoded.shape == (B, LATENT_DIM) and decoded.shape == (B, INPUT_DIM)
    assert jnp.allclose(encoded, enc_ref, atol=1e-4, rtol=1e-4), \
        float(jnp.max(jnp.abs(encoded - enc_ref)))
    assert jnp.allclose(decoded, dec_ref, atol=1e-4, rtol=1e-4), \
        float(jnp.max(jnp.abs(decoded - dec_ref)))

    print("KERNEL_OK")
</pallas_src>

<mosaic_0001>
module attributes {stable_mosaic.version = 11 : i64} {
  func.func @kernel(%arg0: i32, %arg1: i32, %arg2: memref<16x128xf32, #tpu.memory_space<vmem>>, %arg3: memref<432x128xf32, #tpu.memory_space<vmem>>, %arg4: memref<8x128xf32, #tpu.memory_space<vmem>>, %arg5: memref<16x128xf32, #tpu.memory_space<vmem>>, %arg6: memref<64x1xf32, #tpu.memory_space<vmem>>, %arg7: memref<32x1xf32, #tpu.memory_space<vmem>>, %arg8: memref<32x1xf32, #tpu.memory_space<vmem>>, %arg9: memref<64x1xf32, #tpu.memory_space<vmem>>) attributes {dimension_semantics = [#tpu.dimension_semantics<arbitrary>, #tpu.dimension_semantics<arbitrary>], iteration_bounds = array<i64: 5, 2>, scalar_prefetch = 0 : i64, scratch_operands = 4 : i64, tpu.core_type = #tpu.core_type<tc>, window_params = [{transform_indices = @transform_0, window_bounds = array<i64: 16, 128>}, {pipeline_mode = #tpu.pipeline_mode<synchronous>, transform_indices = @transform_1, window_bounds = array<i64: 432, 128>}, {transform_indices = @transform_2, window_bounds = array<i64: 8, 128>}, {transform_indices = @transform_3, window_bounds = array<i64: 16, 128>}]} {
    %0 = tpu.iota {dimensions = array<i32: 1>} : vector<1x128xi32>
    %c128_i32 = arith.constant 128 : i32
    %1 = arith.muli %arg1, %c128_i32 : i32
    %2 = vector.broadcast %1 : i32 to vector<1x128xi32>
    %3 = arith.addi %0, %2 : vector<1x128xi32>
    %c200_i32 = arith.constant 200 : i32
    %4 = vector.broadcast %c200_i32 : i32 to vector<1x128xi32>
    %5 = arith.cmpi slt, %3, %4 : vector<1x128xi32>
    %6 = arith.extui %5 : vector<1x128xi1> to vector<1x128xi32>
    %7 = arith.sitofp %6 : vector<1x128xi32> to vector<1x128xf32>
    %c0 = arith.constant 0 : index
    %c0_0 = arith.constant 0 : index
    %8 = vector.load %arg2[%c0, %c0_0] : memref<16x128xf32, #tpu.memory_space<vmem>>, vector<16x128xf32>
    %c0_i32 = arith.constant 0 : i32
    %9 = arith.cmpi eq, %arg0, %c0_i32 : i32
    %10 = arith.extui %9 : i1 to i32
    %c0_i32_1 = arith.constant 0 : i32
    %11 = arith.cmpi ne, %10, %c0_i32_1 : i32
    scf.if %11 {
      %c0_6 = arith.constant 0 : index
      %c0_7 = arith.constant 0 : index
      %24 = vector.load %arg3[%c0_6, %c0_7] : memref<432x128xf32, #tpu.memory_space<vmem>>, vector<32x16xf32>
      %cst = arith.constant dense<0.000000e+00> : vector<32x128xf32>
      %25 = tpu.matmul %24, %8, %cst {dimension_numbers = #tpu.dot_dimension_numbers<[1], [0], [0], [1], [0, 0, 1, 1], [], []>} : vector<32x16xf32>, vector<16x128xf32>, vector<32x128xf32> -> vector<32x128xf32>
      %c32 = arith.constant 32 : index
      %c0_8 = arith.constant 0 : index
      %26 = vector.load %arg3[%c32, %c0_8] : memref<432x128xf32, #tpu.memory_space<vmem>>, vector<32x1xf32>
      %27 = vector.broadcast %26 : vector<32x1xf32> to vector<32x128xf32>
      %28 = arith.addf %25, %27 : vector<32x128xf32>
      %cst_9 = arith.constant 0.000000e+00 : f32
      %29 = vector.broadcast %cst_9 : f32 to vector<32x128xf32>
      %30 = arith.maximumf %28, %29 : vector<32x128xf32>
      %31 = arith.mulf %30, %30 : vector<32x128xf32>
      %32 = tpu.concatenate %30, %31 in 0 : vector<32x128xf32>, vector<32x128xf32> -> vector<64x128xf32>
      %33 = vector.broadcast %7 : vector<1x128xf32> to vector<64x128xf32>
      %34 = arith.mulf %32, %33 : vector<64x128xf32>
      %cst_10 = arith.constant dense<0.000000e+00> : vector<64xf32>
      %35 = vector.multi_reduction <add>, %34, %cst_10 [1] : vector<64x128xf32> to vector<64xf32>
      %36 = vector.shape_cast %35 : vector<64xf32> to vector<64x1xf32>
      %c0_i32_11 = arith.constant 0 : i32
      %37 = arith.cmpi eq, %arg1, %c0_i32_11 : i32
      %38 = arith.extui %37 : i1 to i32
      %c0_i32_12 = arith.constant 0 : i32
      %39 = arith.cmpi ne, %38, %c0_i32_12 : i32
      scf.if %39 {
        %cst_17 = arith.constant 0.000000e+00 : f32
        %43 = vector.broadcast %cst_17 : f32 to vector<64x1xf32>
        %c0_18 = arith.constant 0 : index
        %c0_19 = arith.constant 0 : index
        %44 = vector.load %arg6[%c0_18, %c0_19] : memref<64x1xf32, #tpu.memory_space<vmem>>, vector<64x1xf32>
        tpu.vector_store %arg6[%c0_18, %c0_19], %43 {strides = array<i32>} : memref<64x1xf32, #tpu.memory_space<vmem>>, vector<64x1xf32>,
      } else {
      }
      %c0_13 = arith.constant 0 : index
      %c0_14 = arith.constant 0 : index
      %40 = vector.load %arg6[%c0_13, %c0_14] : memref<64x1xf32, #tpu.memory_space<vmem>>, vector<64x1xf32>
      %41 = arith.addf %40, %36 : vector<64x1xf32>
      %c0_15 = arith.constant 0 : index
      %c0_16 = arith.constant 0 : index
      %42 = vector.load %arg6[%c0_15, %c0_16] : memref<64x1xf32, #tpu.memory_space<vmem>>, vector<64x1xf32>
      tpu.vector_store %arg6[%c0_15, %c0_16], %41 {strides = array<i32>} : memref<64x1xf32, #tpu.memory_space<vmem>>, vector<64x1xf32>,
    } else {
    }
    %c1_i32 = arith.constant 1 : i32
    %12 = arith.cmpi eq, %arg0, %c1_i32 : i32
    %13 = arith.extui %12 : i1 to i32
    %c0_i32_2 = arith.constant 0 : i32
    %14 = arith.cmpi ne, %13, %c0_i32_2 : i32
    scf.if %14 {
      %c0_6 = arith.constant 0 : index
      %c0_7 = arith.constant 0 : index
      %24 = vector.load %arg3[%c0_6, %c0_7] : memref<432x128xf32, #tpu.memory_space<vmem>>, vector<32x16xf32>
      %cst = arith.constant dense<0.000000e+00> : vector<32x128xf32>
      %25 = tpu.matmul %24, %8, %cst {dimension_numbers = #tpu.dot_dimension_numbers<[1], [0], [0], [1], [0, 0, 1, 1], [], []>} : vector<32x16xf32>, vector<16x128xf32>, vector<32x128xf32> -> vector<32x128xf32>
      %c32 = arith.constant 32 : index
      %c0_8 = arith.constant 0 : index
      %26 = vector.load %arg3[%c32, %c0_8] : memref<432x128xf32, #tpu.memory_space<vmem>>, vector<32x1xf32>
      %27 = vector.broadcast %26 : vector<32x1xf32> to vector<32x128xf32>
      %28 = arith.addf %25, %27 : vector<32x128xf32>
      %cst_9 = arith.constant 0.000000e+00 : f32
      %29 = vector.broadcast %cst_9 : f32 to vector<32x128xf32>
      %30 = arith.maximumf %28, %29 : vector<32x128xf32>
      %c0_10 = arith.constant 0 : index
      %c0_11 = arith.constant 0 : index
      %31 = vector.load %arg6[%c0_10, %c0_11] : memref<64x1xf32, #tpu.memory_space<vmem>>, vector<64x1xf32>
      %32 = vector.extract_strided_slice %31 {offsets = [0, 0], sizes = [32, 1], strides = [1, 1]} : vector<64x1xf32> to vector<32x1xf32>
      %cst_12 = arith.constant 5.000000e-03 : f32
      %33 = vector.broadcast %cst_12 : f32 to vector<32x1xf32>
      %34 = arith.mulf %32, %33 : vector<32x1xf32>
      %35 = vector.extract_strided_slice %31 {offsets = [32, 0], sizes = [32, 1], strides = [1, 1]} : vector<64x1xf32> to vector<32x1xf32>
      %cst_13 = arith.constant 5.000000e-03 : f32
      %36 = vector.broadcast %cst_13 : f32 to vector<32x1xf32>
      %37 = arith.mulf %35, %36 : vector<32x1xf32>
      %38 = arith.mulf %34, %34 : vector<32x1xf32>
      %39 = arith.subf %37, %38 : vector<32x1xf32>
      %cst_14 = arith.constant 0.000000e+00 : f32
      %40 = vector.broadcast %cst_14 : f32 to vector<32x1xf32>
      %41 = arith.maximumf %39, %40 : vector<32x1xf32>
      %c64 = arith.constant 64 : index
      %c0_15 = arith.constant 0 : index
      %42 = vector.load %arg3[%c64, %c0_15] : memref<432x128xf32, #tpu.memory_space<vmem>>, vector<32x1xf32>
      %cst_16 = arith.constant 9.99999974E-6 : f32
      %43 = vector.broadcast %cst_16 : f32 to vector<32x1xf32>
      %44 = arith.addf %41, %43 : vector<32x1xf32>
      %45 = math.rsqrt %44 : vector<32x1xf32>
      %46 = arith.mulf %42, %45 : vector<32x1xf32>
      %c96 = arith.constant 96 : index
      %c0_17 = arith.constant 0 : index
      %47 = vector.load %arg3[%c96, %c0_17] : memref<432x128xf32, #tpu.memory_space<vmem>>, vector<32x1xf32>
      %48 = arith.mulf %34, %46 : vector<32x1xf32>
      %49 = arith.subf %47, %48 : vector<32x1xf32>
      %50 = vector.broadcast %46 : vector<32x1xf32> to vector<32x128xf32>
      %51 = arith.mulf %30, %50 : vector<32x128xf32>
      %52 = vector.broadcast %49 : vector<32x1xf32> to vector<32x128xf32>
      %53 = arith.addf %51, %52 : vector<32x128xf32>
      %c128 = arith.constant 128 : index
      %c0_18 = arith.constant 0 : index
      %54 = vector.load %arg3[%c128, %c0_18] : memref<432x128xf32, #tpu.memory_space<vmem>>, vector<16x32xf32>
      %cst_19 = arith.constant dense<0.000000e+00> : vector<16x128xf32>
      %55 = tpu.matmul %54, %53, %cst_19 {dimension_numbers = #tpu.dot_dimension_numbers<[1], [0], [0], [1], [0, 0, 1, 1], [], []>} : vector<16x32xf32>, vector<32x128xf32>, vector<16x128xf32> -> vector<16x128xf32>
      %c144 = arith.constant 144 : index
      %c0_20 = arith.constant 0 : index
      %56 = vector.load %arg3[%c144, %c0_20] : memref<432x128xf32, #tpu.memory_space<vmem>>, vector<16x1xf32>
      %57 = vector.broadcast %56 : vector<16x1xf32> to vector<16x128xf32>
      %58 = arith.addf %55, %57 : vector<16x128xf32>
      %cst_21 = arith.constant 0.000000e+00 : f32
      %59 = vector.broadcast %cst_21 : f32 to vector<16x128xf32>
      %60 = arith.maximumf %58, %59 : vector<16x128xf32>
      %61 = arith.mulf %60, %60 : vector<16x128xf32>
      %62 = tpu.concatenate %60, %61 in 0 : vector<16x128xf32>, vector<16x128xf32> -> vector<32x128xf32>
      %63 = vector.broadcast %7 : vector<1x128xf32> to vector<32x128xf32>
      %64 = arith.mulf %62, %63 : vector<32x128xf32>
      %cst_22 = arith.constant dense<0.000000e+00> : vector<32xf32>
      %65 = vector.multi_reduction <add>, %64, %cst_22 [1] : vector<32x128xf32> to vector<32xf32>
      %66 = vector.shape_cast %65 : vector<32xf32> to vector<32x1xf32>
      %c0_i32_23 = arith.constant 0 : i32
      %67 = arith.cmpi eq, %arg1, %c0_i32_23 : i32
      %68 = arith.extui %67 : i1 to i32
      %c0_i32_24 = arith.constant 0 : i32
      %69 = arith.cmpi ne, %68, %c0_i32_24 : i32
      scf.if %69 {
        %cst_29 = arith.constant 0.000000e+00 : f32
        %73 = vector.broadcast %cst_29 : f32 to vector<32x1xf32>
        %c0_30 = arith.constant 0 : index
        %c0_31 = arith.constant 0 : index
        %74 = vector.load %arg7[%c0_30, %c0_31] : memref<32x1xf32, #tpu.memory_space<vmem>>, vector<32x1xf32>
        tpu.vector_store %arg7[%c0_30, %c0_31], %73 {strides = array<i32>} : memref<32x1xf32, #tpu.memory_space<vmem>>, vector<32x1xf32>,
      } else {
      }
      %c0_25 = arith.constant 0 : index
      %c0_26 = arith.constant 0 : index
      %70 = vector.load %arg7[%c0_25, %c0_26] : memref<32x1xf32, #tpu.memory_space<vmem>>, vector<32x1xf32>
      %71 = arith.addf %70, %66 : vector<32x1xf32>
      %c0_27 = arith.constant 0 : index
      %c0_28 = arith.constant 0 : index
      %72 = vector.load %arg7[%c0_27, %c0_28] : memref<32x1xf32, #tpu.memory_space<vmem>>, vector<32x1xf32>
      tpu.vector_store %arg7[%c0_27, %c0_28], %71 {strides = array<i32>} : memref<32x1xf32, #tpu.memory_space<vmem>>, vector<32x1xf32>,
    } else {
    }
    %c2_i32 = arith.constant 2 : i32
    %15 = arith.cmpi eq, %arg0, %c2_i32 : i32
    %16 = arith.extui %15 : i1 to i32
    %c0_i32_3 = arith.constant 0 : i32
    %17 = arith.cmpi ne, %16, %c0_i32_3 : i32
    scf.if %17 {
      %c0_6 = arith.constant 0 : index
      %c0_7 = arith.constant 0 : index
      %24 = vector.load %arg3[%c0_6, %c0_7] : memref<432x128xf32, #tpu.memory_space<vmem>>, vector<32x16xf32>
      %cst = arith.constant dense<0.000000e+00> : vector<32x128xf32>
      %25 = tpu.matmul %24, %8, %cst {dimension_numbers = #tpu.dot_dimension_numbers<[1], [0], [0], [1], [0, 0, 1, 1], [], []>} : vector<32x16xf32>, vector<16x128xf32>, vector<32x128xf32> -> vector<32x128xf32>
      %c32 = arith.constant 32 : index
      %c0_8 = arith.constant 0 : index
      %26 = vector.load %arg3[%c32, %c0_8] : memref<432x128xf32, #tpu.memory_space<vmem>>, vector<32x1xf32>
      %27 = vector.broadcast %26 : vector<32x1xf32> to vector<32x128xf32>
      %28 = arith.addf %25, %27 : vector<32x128xf32>
      %cst_9 = arith.constant 0.000000e+00 : f32
      %29 = vector.broadcast %cst_9 : f32 to vector<32x128xf32>
      %30 = arith.maximumf %28, %29 : vector<32x128xf32>
      %c0_10 = arith.constant 0 : index
      %c0_11 = arith.constant 0 : index
      %31 = vector.load %arg6[%c0_10, %c0_11] : memref<64x1xf32, #tpu.memory_space<vmem>>, vector<64x1xf32>
      %32 = vector.extract_strided_slice %31 {offsets = [0, 0], sizes = [32, 1], strides = [1, 1]} : vector<64x1xf32> to vector<32x1xf32>
      %cst_12 = arith.constant 5.000000e-03 : f32
      %33 = vector.broadcast %cst_12 : f32 to vector<32x1xf32>
      %34 = arith.mulf %32, %33 : vector<32x1xf32>
      %35 = vector.extract_strided_slice %31 {offsets = [32, 0], sizes = [32, 1], strides = [1, 1]} : vector<64x1xf32> to vector<32x1xf32>
      %cst_13 = arith.constant 5.000000e-03 : f32
      %36 = vector.broadcast %cst_13 : f32 to vector<32x1xf32>
      %37 = arith.mulf %35, %36 : vector<32x1xf32>
      %38 = arith.mulf %34, %34 : vector<32x1xf32>
      %39 = arith.subf %37, %38 : vector<32x1xf32>
      %cst_14 = arith.constant 0.000000e+00 : f32
      %40 = vector.broadcast %cst_14 : f32 to vector<32x1xf32>
      %41 = arith.maximumf %39, %40 : vector<32x1xf32>
      %c64 = arith.constant 64 : index
      %c0_15 = arith.constant 0 : index
      %42 = vector.load %arg3[%c64, %c0_15] : memref<432x128xf32, #tpu.memory_space<vmem>>, vector<32x1xf32>
      %cst_16 = arith.constant 9.99999974E-6 : f32
      %43 = vector.broadcast %cst_16 : f32 to vector<32x1xf32>
      %44 = arith.addf %41, %43 : vector<32x1xf32>
      %45 = math.rsqrt %44 : vector<32x1xf32>
      %46 = arith.mulf %42, %45 : vector<32x1xf32>
      %c96 = arith.constant 96 : index
      %c0_17 = arith.constant 0 : index
      %47 = vector.load %arg3[%c96, %c0_17] : memref<432x128xf32, #tpu.memory_space<vmem>>, vector<32x1xf32>
      %48 = arith.mulf %34, %46 : vector<32x1xf32>
      %49 = arith.subf %47, %48 : vector<32x1xf32>
      %50 = vector.broadcast %46 : vector<32x1xf32> to vector<32x128xf32>
      %51 = arith.mulf %30, %50 : vector<32x128xf32>
      %52 = vector.broadcast %49 : vector<32x1xf32> to vector<32x128xf32>
      %53 = arith.addf %51, %52 : vector<32x128xf32>
      %c128 = arith.constant 128 : index
      %c0_18 = arith.constant 0 : index
      %54 = vector.load %arg3[%c128, %c0_18] : memref<432x128xf32, #tpu.memory_space<vmem>>, vector<16x32xf32>
      %cst_19 = arith.constant dense<0.000000e+00> : vector<16x128xf32>
      %55 = tpu.matmul %54, %53, %cst_19 {dimension_numbers = #tpu.dot_dimension_numbers<[1], [0], [0], [1], [0, 0, 1, 1], [], []>} : vector<16x32xf32>, vector<32x128xf32>, vector<16x128xf32> -> vector<16x128xf32>
      %c144 = arith.constant 144 : index
      %c0_20 = arith.constant 0 : index
      %56 = vector.load %arg3[%c144, %c0_20] : memref<432x128xf32, #tpu.memory_space<vmem>>, vector<16x1xf32>
      %57 = vector.broadcast %56 : vector<16x1xf32> to vector<16x128xf32>
      %58 = arith.addf %55, %57 : vector<16x128xf32>
      %cst_21 = arith.constant 0.000000e+00 : f32
      %59 = vector.broadcast %cst_21 : f32 to vector<16x128xf32>
      %60 = arith.maximumf %58, %59 : vector<16x128xf32>
      %c0_22 = arith.constant 0 : index
      %c0_23 = arith.constant 0 : index
      %61 = vector.load %arg7[%c0_22, %c0_23] : memref<32x1xf32, #tpu.memory_space<vmem>>, vector<32x1xf32>
      %62 = vector.extract_strided_slice %61 {offsets = [0, 0], sizes = [16, 1], strides = [1, 1]} : vector<32x1xf32> to vector<16x1xf32>
      %cst_24 = arith.constant 5.000000e-03 : f32
      %63 = vector.broadcast %cst_24 : f32 to vector<16x1xf32>
      %64 = arith.mulf %62, %63 : vector<16x1xf32>
      %65 = vector.extract_strided_slice %61 {offsets = [16, 0], sizes = [16, 1], strides = [1, 1]} : vector<32x1xf32> to vector<16x1xf32>
      %cst_25 = arith.constant 5.000000e-03 : f32
      %66 = vector.broadcast %cst_25 : f32 to vector<16x1xf32>
      %67 = arith.mulf %65, %66 : vector<16x1xf32>
      %68 = arith.mulf %64, %64 : vector<16x1xf32>
      %69 = arith.subf %67, %68 : vector<16x1xf32>
      %cst_26 = arith.constant 0.000000e+00 : f32
      %70 = vector.broadcast %cst_26 : f32 to vector<16x1xf32>
      %71 = arith.maximumf %69, %70 : vector<16x1xf32>
      %c160 = arith.constant 160 : index
      %c0_27 = arith.constant 0 : index
      %72 = vector.load %arg3[%c160, %c0_27] : memref<432x128xf32, #tpu.memory_space<vmem>>, vector<16x1xf32>
      %cst_28 = arith.constant 9.99999974E-6 : f32
      %73 = vector.broadcast %cst_28 : f32 to vector<16x1xf32>
      %74 = arith.addf %71, %73 : vector<16x1xf32>
      %75 = math.rsqrt %74 : vector<16x1xf32>
      %76 = arith.mulf %72, %75 : vector<16x1xf32>
      %c176 = arith.constant 176 : index
      %c0_29 = arith.constant 0 : index
      %77 = vector.load %arg3[%c176, %c0_29] : memref<432x128xf32, #tpu.memory_space<vmem>>, vector<16x1xf32>
      %78 = arith.mulf %64, %76 : vector<16x1xf32>
      %79 = arith.subf %77, %78 : vector<16x1xf32>
      %80 = vector.broadcast %76 : vector<16x1xf32> to vector<16x128xf32>
      %81 = arith.mulf %60, %80 : vector<16x128xf32>
      %82 = vector.broadcast %79 : vector<16x1xf32> to vector<16x128xf32>
      %83 = arith.addf %81, %82 : vector<16x128xf32>
      %c192 = arith.constant 192 : index
      %c0_30 = arith.constant 0 : index
      %84 = vector.load %arg3[%c192, %c0_30] : memref<432x128xf32, #tpu.memory_space<vmem>>, vector<8x16xf32>
      %cst_31 = arith.constant dense<0.000000e+00> : vector<8x128xf32>
      %85 = tpu.matmul %84, %83, %cst_31 {dimension_numbers = #tpu.dot_dimension_numbers<[1], [0], [0], [1], [0, 0, 1, 1], [], []>} : vector<8x16xf32>, vector<16x128xf32>, vector<8x128xf32> -> vector<8x128xf32>
      %c200 = arith.constant 200 : index
      %c0_32 = arith.constant 0 : index
      %86 = vector.load %arg3[%c200, %c0_32] : memref<432x128xf32, #tpu.memory_space<vmem>>, vector<8x1xf32>
      %87 = vector.broadcast %86 : vector<8x1xf32> to vector<8x128xf32>
      %88 = arith.addf %85, %87 : vector<8x128xf32>
      %cst_33 = arith.constant 0.000000e+00 : f32
      %89 = vector.broadcast %cst_33 : f32 to vector<8x128xf32>
      %90 = arith.maximumf %88, %89 : vector<8x128xf32>
      %c208 = arith.constant 208 : index
      %c0_34 = arith.constant 0 : index
      %91 = vector.load %arg3[%c208, %c0_34] : memref<432x128xf32, #tpu.memory_space<vmem>>, vector<16x8xf32>
      %cst_35 = arith.constant dense<0.000000e+00> : vector<16x128xf32>
      %92 = tpu.matmul %91, %90, %cst_35 {dimension_numbers = #tpu.dot_dimension_numbers<[1], [0], [0], [1], [0, 0, 1, 1], [], []>} : vector<16x8xf32>, vector<8x128xf32>, vector<16x128xf32> -> vector<16x128xf32>
      %c224 = arith.constant 224 : index
      %c0_36 = arith.constant 0 : index
      %93 = vector.load %arg3[%c224, %c0_36] : memref<432x128xf32, #tpu.memory_space<vmem>>, vector<16x1xf32>
      %94 = vector.broadcast %93 : vector<16x1xf32> to vector<16x128xf32>
      %95 = arith.addf %92, %94 : vector<16x128xf32>
      %cst_37 = arith.constant 0.000000e+00 : f32
      %96 = vector.broadcast %cst_37 : f32 to vector<16x128xf32>
      %97 = arith.maximumf %95, %96 : vector<16x128xf32>
      %98 = arith.mulf %97, %97 : vector<16x128xf32>
      %99 = tpu.concatenate %97, %98 in 0 : vector<16x128xf32>, vector<16x128xf32> -> vector<32x128xf32>
      %100 = vector.broadcast %7 : vector<1x128xf32> to vector<32x128xf32>
      %101 = arith.mulf %99, %100 : vector<32x128xf32>
      %cst_38 = arith.constant dense<0.000000e+00> : vector<32xf32>
      %102 = vector.multi_reduction <add>, %101, %cst_38 [1] : vector<32x128xf32> to vector<32xf32>
      %103 = vector.shape_cast %102 : vector<32xf32> to vector<32x1xf32>
      %c0_i32_39 = arith.constant 0 : i32
      %104 = arith.cmpi eq, %arg1, %c0_i32_39 : i32
      %105 = arith.extui %104 : i1 to i32
      %c0_i32_40 = arith.constant 0 : i32
      %106 = arith.cmpi ne, %105, %c0_i32_40 : i32
      scf.if %106 {
        %cst_45 = arith.constant 0.000000e+00 : f32
        %110 = vector.broadcast %cst_45 : f32 to vector<32x1xf32>
        %c0_46 = arith.constant 0 : index
        %c0_47 = arith.constant 0 : index
        %111 = vector.load %arg8[%c0_46, %c0_47] : memref<32x1xf32, #tpu.memory_space<vmem>>, vector<32x1xf32>
        tpu.vector_store %arg8[%c0_46, %c0_47], %110 {strides = array<i32>} : memref<32x1xf32, #tpu.memory_space<vmem>>, vector<32x1xf32>,
      } else {
      }
      %c0_41 = arith.constant 0 : index
      %c0_42 = arith.constant 0 : index
      %107 = vector.load %arg8[%c0_41, %c0_42] : memref<32x1xf32, #tpu.memory_space<vmem>>, vector<32x1xf32>
      %108 = arith.addf %107, %103 : vector<32x1xf32>
      %c0_43 = arith.constant 0 : index
      %c0_44 = arith.constant 0 : index
      %109 = vector.load %arg8[%c0_43, %c0_44] : memref<32x1xf32, #tpu.memory_space<vmem>>, vector<32x1xf32>
      tpu.vector_store %arg8[%c0_43, %c0_44], %108 {strides = array<i32>} : memref<32x1xf32, #tpu.memory_space<vmem>>, vector<32x1xf32>,
    } else {
    }
    %c3_i32 = arith.constant 3 : i32
    %18 = arith.cmpi eq, %arg0, %c3_i32 : i32
    %19 = arith.extui %18 : i1 to i32
    %c0_i32_4 = arith.constant 0 : i32
    %20 = arith.cmpi ne, %19, %c0_i32_4 : i32
    scf.if %20 {
      %c0_6 = arith.constant 0 : index
      %c0_7 = arith.constant 0 : index
      %24 = vector.load %arg3[%c0_6, %c0_7] : memref<432x128xf32, #tpu.memory_space<vmem>>, vector<32x16xf32>
      %cst = arith.constant dense<0.000000e+00> : vector<32x128xf32>
      %25 = tpu.matmul %24, %8, %cst {dimension_numbers = #tpu.dot_dimension_numbers<[1], [0], [0], [1], [0, 0, 1, 1], [], []>} : vector<32x16xf32>, vector<16x128xf32>, vector<32x128xf32> -> vector<32x128xf32>
      %c32 = arith.constant 32 : index
      %c0_8 = arith.constant 0 : index
      %26 = vector.load %arg3[%c32, %c0_8] : memref<432x128xf32, #tpu.memory_space<vmem>>, vector<32x1xf32>
      %27 = vector.broadcast %26 : vector<32x1xf32> to vector<32x128xf32>
      %28 = arith.addf %25, %27 : vector<32x128xf32>
      %cst_9 = arith.constant 0.000000e+00 : f32
      %29 = vector.broadcast %cst_9 : f32 to vector<32x128xf32>
      %30 = arith.maximumf %28, %29 : vector<32x128xf32>
      %c0_10 = arith.constant 0 : index
      %c0_11 = arith.constant 0 : index
      %31 = vector.load %arg6[%c0_10, %c0_11] : memref<64x1xf32, #tpu.memory_space<vmem>>, vector<64x1xf32>
      %32 = vector.extract_strided_slice %31 {offsets = [0, 0], sizes = [32, 1], strides = [1, 1]} : vector<64x1xf32> to vector<32x1xf32>
      %cst_12 = arith.constant 5.000000e-03 : f32
      %33 = vector.broadcast %cst_12 : f32 to vector<32x1xf32>
      %34 = arith.mulf %32, %33 : vector<32x1xf32>
      %35 = vector.extract_strided_slice %31 {offsets = [32, 0], sizes = [32, 1], strides = [1, 1]} : vector<64x1xf32> to vector<32x1xf32>
      %cst_13 = arith.constant 5.000000e-03 : f32
      %36 = vector.broadcast %cst_13 : f32 to vector<32x1xf32>
      %37 = arith.mulf %35, %36 : vector<32x1xf32>
      %38 = arith.mulf %34, %34 : vector<32x1xf32>
      %39 = arith.subf %37, %38 : vector<32x1xf32>
      %cst_14 = arith.constant 0.000000e+00 : f32
      %40 = vector.broadcast %cst_14 : f32 to vector<32x1xf32>
      %41 = arith.maximumf %39, %40 : vector<32x1xf32>
      %c64 = arith.constant 64 : index
      %c0_15 = arith.constant 0 : index
      %42 = vector.load %arg3[%c64, %c0_15] : memref<432x128xf32, #tpu.memory_space<vmem>>, vector<32x1xf32>
      %cst_16 = arith.constant 9.99999974E-6 : f32
      %43 = vector.broadcast %cst_16 : f32 to vector<32x1xf32>
      %44 = arith.addf %41, %43 : vector<32x1xf32>
      %45 = math.rsqrt %44 : vector<32x1xf32>
      %46 = arith.mulf %42, %45 : vector<32x1xf32>
      %c96 = arith.constant 96 : index
      %c0_17 = arith.constant 0 : index
      %47 = vector.load %arg3[%c96, %c0_17] : memref<432x128xf32, #tpu.memory_space<vmem>>, vector<32x1xf32>
      %48 = arith.mulf %34, %46 : vector<32x1xf32>
      %49 = arith.subf %47, %48 : vector<32x1xf32>
      %50 = vector.broadcast %46 : vector<32x1xf32> to vector<32x128xf32>
      %51 = arith.mulf %30, %50 : vector<32x128xf32>
      %52 = vector.broadcast %49 : vector<32x1xf32> to vector<32x128xf32>
      %53 = arith.addf %51, %52 : vector<32x128xf32>
      %c128 = arith.constant 128 : index
      %c0_18 = arith.constant 0 : index
      %54 = vector.load %arg3[%c128, %c0_18] : memref<432x128xf32, #tpu.memory_space<vmem>>, vector<16x32xf32>
      %cst_19 = arith.constant dense<0.000000e+00> : vector<16x128xf32>
      %55 = tpu.matmul %54, %53, %cst_19 {dimension_numbers = #tpu.dot_dimension_numbers<[1], [0], [0], [1], [0, 0, 1, 1], [], []>} : vector<16x32xf32>, vector<32x128xf32>, vector<16x128xf32> -> vector<16x128xf32>
      %c144 = arith.constant 144 : index
      %c0_20 = arith.constant 0 : index
      %56 = vector.load %arg3[%c144, %c0_20] : memref<432x128xf32, #tpu.memory_space<vmem>>, vector<16x1xf32>
      %57 = vector.broadcast %56 : vector<16x1xf32> to vector<16x128xf32>
      %58 = arith.addf %55, %57 : vector<16x128xf32>
      %cst_21 = arith.constant 0.000000e+00 : f32
      %59 = vector.broadcast %cst_21 : f32 to vector<16x128xf32>
      %60 = arith.maximumf %58, %59 : vector<16x128xf32>
      %c0_22 = arith.constant 0 : index
      %c0_23 = arith.constant 0 : index
      %61 = vector.load %arg7[%c0_22, %c0_23] : memref<32x1xf32, #tpu.memory_space<vmem>>, vector<32x1xf32>
      %62 = vector.extract_strided_slice %61 {offsets = [0, 0], sizes = [16, 1], strides = [1, 1]} : vector<32x1xf32> to vector<16x1xf32>
      %cst_24 = arith.constant 5.000000e-03 : f32
      %63 = vector.broadcast %cst_24 : f32 to vector<16x1xf32>
      %64 = arith.mulf %62, %63 : vector<16x1xf32>
      %65 = vector.extract_strided_slice %61 {offsets = [16, 0], sizes = [16, 1], strides = [1, 1]} : vector<32x1xf32> to vector<16x1xf32>
      %cst_25 = arith.constant 5.000000e-03 : f32
      %66 = vector.broadcast %cst_25 : f32 to vector<16x1xf32>
      %67 = arith.mulf %65, %66 : vector<16x1xf32>
      %68 = arith.mulf %64, %64 : vector<16x1xf32>
      %69 = arith.subf %67, %68 : vector<16x1xf32>
      %cst_26 = arith.constant 0.000000e+00 : f32
      %70 = vector.broadcast %cst_26 : f32 to vector<16x1xf32>
      %71 = arith.maximumf %69, %70 : vector<16x1xf32>
      %c160 = arith.constant 160 : index
      %c0_27 = arith.constant 0 : index
      %72 = vector.load %arg3[%c160, %c0_27] : memref<432x128xf32, #tpu.memory_space<vmem>>, vector<16x1xf32>
      %cst_28 = arith.constant 9.99999974E-6 : f32
      %73 = vector.broadcast %cst_28 : f32 to vector<16x1xf32>
      %74 = arith.addf %71, %73 : vector<16x1xf32>
      %75 = math.rsqrt %74 : vector<16x1xf32>
      %76 = arith.mulf %72, %75 : vector<16x1xf32>
      %c176 = arith.constant 176 : index
      %c0_29 = arith.constant 0 : index
      %77 = vector.load %arg3[%c176, %c0_29] : memref<432x128xf32, #tpu.memory_space<vmem>>, vector<16x1xf32>
      %78 = arith.mulf %64, %76 : vector<16x1xf32>
      %79 = arith.subf %77, %78 : vector<16x1xf32>
      %80 = vector.broadcast %76 : vector<16x1xf32> to vector<16x128xf32>
      %81 = arith.mulf %60, %80 : vector<16x128xf32>
      %82 = vector.broadcast %79 : vector<16x1xf32> to vector<16x128xf32>
      %83 = arith.addf %81, %82 : vector<16x128xf32>
      %c192 = arith.constant 192 : index
      %c0_30 = arith.constant 0 : index
      %84 = vector.load %arg3[%c192, %c0_30] : memref<432x128xf32, #tpu.memory_space<vmem>>, vector<8x16xf32>
      %cst_31 = arith.constant dense<0.000000e+00> : vector<8x128xf32>
      %85 = tpu.matmul %84, %83, %cst_31 {dimension_numbers = #tpu.dot_dimension_numbers<[1], [0], [0], [1], [0, 0, 1, 1], [], []>} : vector<8x16xf32>, vector<16x128xf32>, vector<8x128xf32> -> vector<8x128xf32>
      %c200 = arith.constant 200 : index
      %c0_32 = arith.constant 0 : index
      %86 = vector.load %arg3[%c200, %c0_32] : memref<432x128xf32, #tpu.memory_space<vmem>>, vector<8x1xf32>
      %87 = vector.broadcast %86 : vector<8x1xf32> to vector<8x128xf32>
      %88 = arith.addf %85, %87 : vector<8x128xf32>
      %cst_33 = arith.constant 0.000000e+00 : f32
      %89 = vector.broadcast %cst_33 : f32 to vector<8x128xf32>
      %90 = arith.maximumf %88, %89 : vector<8x128xf32>
      %c208 = arith.constant 208 : index
      %c0_34 = arith.constant 0 : index
      %91 = vector.load %arg3[%c208, %c0_34] : memref<432x128xf32, #tpu.memory_space<vmem>>, vector<16x8xf32>
      %cst_35 = arith.constant dense<0.000000e+00> : vector<16x128xf32>
      %92 = tpu.matmul %91, %90, %cst_35 {dimension_numbers = #tpu.dot_dimension_numbers<[1], [0], [0], [1], [0, 0, 1, 1], [], []>} : vector<16x8xf32>, vector<8x128xf32>, vector<16x128xf32> -> vector<16x128xf32>
      %c224 = arith.constant 224 : index
      %c0_36 = arith.constant 0 : index
      %93 = vector.load %arg3[%c224, %c0_36] : memref<432x128xf32, #tpu.memory_space<vmem>>, vector<16x1xf32>
      %94 = vector.broadcast %93 : vector<16x1xf32> to vector<16x128xf32>
      %95 = arith.addf %92, %94 : vector<16x128xf32>
      %cst_37 = arith.constant 0.000000e+00 : f32
      %96 = vector.broadcast %cst_37 : f32 to vector<16x128xf32>
      %97 = arith.maximumf %95, %96 : vector<16x128xf32>
      %c0_38 = arith.constant 0 : index
      %c0_39 = arith.constant 0 : index
      %98 = vector.load %arg8[%c0_38, %c0_39] : memref<32x1xf32, #tpu.memory_space<vmem>>, vector<32x1xf32>
      %99 = vector.extract_strided_slice %98 {offsets = [0, 0], sizes = [16, 1], strides = [1, 1]} : vector<32x1xf32> to vector<16x1xf32>
      %cst_40 = arith.constant 5.000000e-03 : f32
      %100 = vector.broadcast %cst_40 : f32 to vector<16x1xf32>
      %101 = arith.mulf %99, %100 : vector<16x1xf32>
      %102 = vector.extract_strided_slice %98 {offsets = [16, 0], sizes = [16, 1], strides = [1, 1]} : vector<32x1xf32> to vector<16x1xf32>
      %cst_41 = arith.constant 5.000000e-03 : f32
      %103 = vector.broadcast %cst_41 : f32 to vector<16x1xf32>
      %104 = arith.mulf %102, %103 : vector<16x1xf32>
      %105 = arith.mulf %101, %101 : vector<16x1xf32>
      %106 = arith.subf %104, %105 : vector<16x1xf32>
      %cst_42 = arith.constant 0.000000e+00 : f32
      %107 = vector.broadcast %cst_42 : f32 to vector<16x1xf32>
      %108 = arith.maximumf %106, %107 : vector<16x1xf32>
      %c240 = arith.constant 240 : index
      %c0_43 = arith.constant 0 : index
      %109 = vector.load %arg3[%c240, %c0_43] : memref<432x128xf32, #tpu.memory_space<vmem>>, vector<16x1xf32>
      %cst_44 = arith.constant 9.99999974E-6 : f32
      %110 = vector.broadcast %cst_44 : f32 to vector<16x1xf32>
      %111 = arith.addf %108, %110 : vector<16x1xf32>
      %112 = math.rsqrt %111 : vector<16x1xf32>
      %113 = arith.mulf %109, %112 : vector<16x1xf32>
      %c256 = arith.constant 256 : index
      %c0_45 = arith.constant 0 : index
      %114 = vector.load %arg3[%c256, %c0_45] : memref<432x128xf32, #tpu.memory_space<vmem>>, vector<16x1xf32>
      %115 = arith.mulf %101, %113 : vector<16x1xf32>
      %116 = arith.subf %114, %115 : vector<16x1xf32>
      %117 = vector.broadcast %113 : vector<16x1xf32> to vector<16x128xf32>
      %118 = arith.mulf %97, %117 : vector<16x128xf32>
      %119 = vector.broadcast %116 : vector<16x1xf32> to vector<16x128xf32>
      %120 = arith.addf %118, %119 : vector<16x128xf32>
      %c272 = arith.constant 272 : index
      %c0_46 = arith.constant 0 : index
      %121 = vector.load %arg3[%c272, %c0_46] : memref<432x128xf32, #tpu.memory_space<vmem>>, vector<32x16xf32>
      %cst_47 = arith.constant dense<0.000000e+00> : vector<32x128xf32>
      %122 = tpu.matmul %121, %120, %cst_47 {dimension_numbers = #tpu.dot_dimension_numbers<[1], [0], [0], [1], [0, 0, 1, 1], [], []>} : vector<32x16xf32>, vector<16x128xf32>, vector<32x128xf32> -> vector<32x128xf32>
      %c304 = arith.constant 304 : index
      %c0_48 = arith.constant 0 : index
      %123 = vector.load %arg3[%c304, %c0_48] : memref<432x128xf32, #tpu.memory_space<vmem>>, vector<32x1xf32>
      %124 = vector.broadcast %123 : vector<32x1xf32> to vector<32x128xf32>
      %125 = arith.addf %122, %124 : vector<32x128xf32>
      %cst_49 = arith.constant 0.000000e+00 : f32
      %126 = vector.broadcast %cst_49 : f32 to vector<32x128xf32>
      %127 = arith.maximumf %125, %126 : vector<32x128xf32>
      %128 = arith.mulf %127, %127 : vector<32x128xf32>
      %129 = tpu.concatenate %127, %128 in 0 : vector<32x128xf32>, vector<32x128xf32> -> vector<64x128xf32>
      %130 = vector.broadcast %7 : vector<1x128xf32> to vector<64x128xf32>
      %131 = arith.mulf %129, %130 : vector<64x128xf32>
      %cst_50 = arith.constant dense<0.000000e+00> : vector<64xf32>
      %132 = vector.multi_reduction <add>, %131, %cst_50 [1] : vector<64x128xf32> to vector<64xf32>
      %133 = vector.shape_cast %132 : vector<64xf32> to vector<64x1xf32>
      %c0_i32_51 = arith.constant 0 : i32
      %134 = arith.cmpi eq, %arg1, %c0_i32_51 : i32
      %135 = arith.extui %134 : i1 to i32
      %c0_i32_52 = arith.constant 0 : i32
      %136 = arith.cmpi ne, %135, %c0_i32_52 : i32
      scf.if %136 {
        %cst_57 = arith.constant 0.000000e+00 : f32
        %140 = vector.broadcast %cst_57 : f32 to vector<64x1xf32>
        %c0_58 = arith.constant 0 : index
        %c0_59 = arith.constant 0 : index
        %141 = vector.load %arg9[%c0_58, %c0_59] : memref<64x1xf32, #tpu.memory_space<vmem>>, vector<64x1xf32>
        tpu.vector_store %arg9[%c0_58, %c0_59], %140 {strides = array<i32>} : memref<64x1xf32, #tpu.memory_space<vmem>>, vector<64x1xf32>,
      } else {
      }
      %c0_53 = arith.constant 0 : index
      %c0_54 = arith.constant 0 : index
      %137 = vector.load %arg9[%c0_53, %c0_54] : memref<64x1xf32, #tpu.memory_space<vmem>>, vector<64x1xf32>
      %138 = arith.addf %137, %133 : vector<64x1xf32>
      %c0_55 = arith.constant 0 : index
      %c0_56 = arith.constant 0 : index
      %139 = vector.load %arg9[%c0_55, %c0_56] : memref<64x1xf32, #tpu.memory_space<vmem>>, vector<64x1xf32>
      tpu.vector_store %arg9[%c0_55, %c0_56], %138 {strides = array<i32>} : memref<64x1xf32, #tpu.memory_space<vmem>>, vector<64x1xf32>,
    } else {
    }
    %c4_i32 = arith.constant 4 : i32
    %21 = arith.cmpi eq, %arg0, %c4_i32 : i32
    %22 = arith.extui %21 : i1 to i32
    %c0_i32_5 = arith.constant 0 : i32
    %23 = arith.cmpi ne, %22, %c0_i32_5 : i32
    scf.if %23 {
      %c0_6 = arith.constant 0 : index
      %c0_7 = arith.constant 0 : index
      %24 = vector.load %arg3[%c0_6, %c0_7] : memref<432x128xf32, #tpu.memory_space<vmem>>, vector<32x16xf32>
      %cst = arith.constant dense<0.000000e+00> : vector<32x128xf32>
      %25 = tpu.matmul %24, %8, %cst {dimension_numbers = #tpu.dot_dimension_numbers<[1], [0], [0], [1], [0, 0, 1, 1], [], []>} : vector<32x16xf32>, vector<16x128xf32>, vector<32x128xf32> -> vector<32x128xf32>
      %c32 = arith.constant 32 : index
      %c0_8 = arith.constant 0 : index
      %26 = vector.load %arg3[%c32, %c0_8] : memref<432x128xf32, #tpu.memory_space<vmem>>, vector<32x1xf32>
      %27 = vector.broadcast %26 : vector<32x1xf32> to vector<32x128xf32>
      %28 = arith.addf %25, %27 : vector<32x128xf32>
      %cst_9 = arith.constant 0.000000e+00 : f32
      %29 = vector.broadcast %cst_9 : f32 to vector<32x128xf32>
      %30 = arith.maximumf %28, %29 : vector<32x128xf32>
      %c0_10 = arith.constant 0 : index
      %c0_11 = arith.constant 0 : index
      %31 = vector.load %arg6[%c0_10, %c0_11] : memref<64x1xf32, #tpu.memory_space<vmem>>, vector<64x1xf32>
      %32 = vector.extract_strided_slice %31 {offsets = [0, 0], sizes = [32, 1], strides = [1, 1]} : vector<64x1xf32> to vector<32x1xf32>
      %cst_12 = arith.constant 5.000000e-03 : f32
      %33 = vector.broadcast %cst_12 : f32 to vector<32x1xf32>
      %34 = arith.mulf %32, %33 : vector<32x1xf32>
      %35 = vector.extract_strided_slice %31 {offsets = [32, 0], sizes = [32, 1], strides = [1, 1]} : vector<64x1xf32> to vector<32x1xf32>
      %cst_13 = arith.constant 5.000000e-03 : f32
      %36 = vector.broadcast %cst_13 : f32 to vector<32x1xf32>
      %37 = arith.mulf %35, %36 : vector<32x1xf32>
      %38 = arith.mulf %34, %34 : vector<32x1xf32>
      %39 = arith.subf %37, %38 : vector<32x1xf32>
      %cst_14 = arith.constant 0.000000e+00 : f32
      %40 = vector.broadcast %cst_14 : f32 to vector<32x1xf32>
      %41 = arith.maximumf %39, %40 : vector<32x1xf32>
      %c64 = arith.constant 64 : index
      %c0_15 = arith.constant 0 : index
      %42 = vector.load %arg3[%c64, %c0_15] : memref<432x128xf32, #tpu.memory_space<vmem>>, vector<32x1xf32>
      %cst_16 = arith.constant 9.99999974E-6 : f32
      %43 = vector.broadcast %cst_16 : f32 to vector<32x1xf32>
      %44 = arith.addf %41, %43 : vector<32x1xf32>
      %45 = math.rsqrt %44 : vector<32x1xf32>
      %46 = arith.mulf %42, %45 : vector<32x1xf32>
      %c96 = arith.constant 96 : index
      %c0_17 = arith.constant 0 : index
      %47 = vector.load %arg3[%c96, %c0_17] : memref<432x128xf32, #tpu.memory_space<vmem>>, vector<32x1xf32>
      %48 = arith.mulf %34, %46 : vector<32x1xf32>
      %49 = arith.subf %47, %48 : vector<32x1xf32>
      %50 = vector.broadcast %46 : vector<32x1xf32> to vector<32x128xf32>
      %51 = arith.mulf %30, %50 : vector<32x128xf32>
      %52 = vector.broadcast %49 : vector<32x1xf32> to vector<32x128xf32>
      %53 = arith.addf %51, %52 : vector<32x128xf32>
      %c128 = arith.constant 128 : index
      %c0_18 = arith.constant 0 : index
      %54 = vector.load %arg3[%c128, %c0_18] : memref<432x128xf32, #tpu.memory_space<vmem>>, vector<16x32xf32>
      %cst_19 = arith.constant dense<0.000000e+00> : vector<16x128xf32>
      %55 = tpu.matmul %54, %53, %cst_19 {dimension_numbers = #tpu.dot_dimension_numbers<[1], [0], [0], [1], [0, 0, 1, 1], [], []>} : vector<16x32xf32>, vector<32x128xf32>, vector<16x128xf32> -> vector<16x128xf32>
      %c144 = arith.constant 144 : index
      %c0_20 = arith.constant 0 : index
      %56 = vector.load %arg3[%c144, %c0_20] : memref<432x128xf32, #tpu.memory_space<vmem>>, vector<16x1xf32>
      %57 = vector.broadcast %56 : vector<16x1xf32> to vector<16x128xf32>
      %58 = arith.addf %55, %57 : vector<16x128xf32>
      %cst_21 = arith.constant 0.000000e+00 : f32
      %59 = vector.broadcast %cst_21 : f32 to vector<16x128xf32>
      %60 = arith.maximumf %58, %59 : vector<16x128xf32>
      %c0_22 = arith.constant 0 : index
      %c0_23 = arith.constant 0 : index
      %61 = vector.load %arg7[%c0_22, %c0_23] : memref<32x1xf32, #tpu.memory_space<vmem>>, vector<32x1xf32>
      %62 = vector.extract_strided_slice %61 {offsets = [0, 0], sizes = [16, 1], strides = [1, 1]} : vector<32x1xf32> to vector<16x1xf32>
      %cst_24 = arith.constant 5.000000e-03 : f32
      %63 = vector.broadcast %cst_24 : f32 to vector<16x1xf32>
      %64 = arith.mulf %62, %63 : vector<16x1xf32>
      %65 = vector.extract_strided_slice %61 {offsets = [16, 0], sizes = [16, 1], strides = [1, 1]} : vector<32x1xf32> to vector<16x1xf32>
      %cst_25 = arith.constant 5.000000e-03 : f32
      %66 = vector.broadcast %cst_25 : f32 to vector<16x1xf32>
      %67 = arith.mulf %65, %66 : vector<16x1xf32>
      %68 = arith.mulf %64, %64 : vector<16x1xf32>
      %69 = arith.subf %67, %68 : vector<16x1xf32>
      %cst_26 = arith.constant 0.000000e+00 : f32
      %70 = vector.broadcast %cst_26 : f32 to vector<16x1xf32>
      %71 = arith.maximumf %69, %70 : vector<16x1xf32>
      %c160 = arith.constant 160 : index
      %c0_27 = arith.constant 0 : index
      %72 = vector.load %arg3[%c160, %c0_27] : memref<432x128xf32, #tpu.memory_space<vmem>>, vector<16x1xf32>
      %cst_28 = arith.constant 9.99999974E-6 : f32
      %73 = vector.broadcast %cst_28 : f32 to vector<16x1xf32>
      %74 = arith.addf %71, %73 : vector<16x1xf32>
      %75 = math.rsqrt %74 : vector<16x1xf32>
      %76 = arith.mulf %72, %75 : vector<16x1xf32>
      %c176 = arith.constant 176 : index
      %c0_29 = arith.constant 0 : index
      %77 = vector.load %arg3[%c176, %c0_29] : memref<432x128xf32, #tpu.memory_space<vmem>>, vector<16x1xf32>
      %78 = arith.mulf %64, %76 : vector<16x1xf32>
      %79 = arith.subf %77, %78 : vector<16x1xf32>
      %80 = vector.broadcast %76 : vector<16x1xf32> to vector<16x128xf32>
      %81 = arith.mulf %60, %80 : vector<16x128xf32>
      %82 = vector.broadcast %79 : vector<16x1xf32> to vector<16x128xf32>
      %83 = arith.addf %81, %82 : vector<16x128xf32>
      %c192 = arith.constant 192 : index
      %c0_30 = arith.constant 0 : index
      %84 = vector.load %arg3[%c192, %c0_30] : memref<432x128xf32, #tpu.memory_space<vmem>>, vector<8x16xf32>
      %cst_31 = arith.constant dense<0.000000e+00> : vector<8x128xf32>
      %85 = tpu.matmul %84, %83, %cst_31 {dimension_numbers = #tpu.dot_dimension_numbers<[1], [0], [0], [1], [0, 0, 1, 1], [], []>} : vector<8x16xf32>, vector<16x128xf32>, vector<8x128xf32> -> vector<8x128xf32>
      %c200 = arith.constant 200 : index
      %c0_32 = arith.constant 0 : index
      %86 = vector.load %arg3[%c200, %c0_32] : memref<432x128xf32, #tpu.memory_space<vmem>>, vector<8x1xf32>
      %87 = vector.broadcast %86 : vector<8x1xf32> to vector<8x128xf32>
      %88 = arith.addf %85, %87 : vector<8x128xf32>
      %cst_33 = arith.constant 0.000000e+00 : f32
      %89 = vector.broadcast %cst_33 : f32 to vector<8x128xf32>
      %90 = arith.maximumf %88, %89 : vector<8x128xf32>
      %c208 = arith.constant 208 : index
      %c0_34 = arith.constant 0 : index
      %91 = vector.load %arg3[%c208, %c0_34] : memref<432x128xf32, #tpu.memory_space<vmem>>, vector<16x8xf32>
      %cst_35 = arith.constant dense<0.000000e+00> : vector<16x128xf32>
      %92 = tpu.matmul %91, %90, %cst_35 {dimension_numbers = #tpu.dot_dimension_numbers<[1], [0], [0], [1], [0, 0, 1, 1], [], []>} : vector<16x8xf32>, vector<8x128xf32>, vector<16x128xf32> -> vector<16x128xf32>
      %c224 = arith.constant 224 : index
      %c0_36 = arith.constant 0 : index
      %93 = vector.load %arg3[%c224, %c0_36] : memref<432x128xf32, #tpu.memory_space<vmem>>, vector<16x1xf32>
      %94 = vector.broadcast %93 : vector<16x1xf32> to vector<16x128xf32>
      %95 = arith.addf %92, %94 : vector<16x128xf32>
      %cst_37 = arith.constant 0.000000e+00 : f32
      %96 = vector.broadcast %cst_37 : f32 to vector<16x128xf32>
      %97 = arith.maximumf %95, %96 : vector<16x128xf32>
      %c0_38 = arith.constant 0 : index
      %c0_39 = arith.constant 0 : index
      %98 = vector.load %arg8[%c0_38, %c0_39] : memref<32x1xf32, #tpu.memory_space<vmem>>, vector<32x1xf32>
      %99 = vector.extract_strided_slice %98 {offsets = [0, 0], sizes = [16, 1], strides = [1, 1]} : vector<32x1xf32> to vector<16x1xf32>
      %cst_40 = arith.constant 5.000000e-03 : f32
      %100 = vector.broadcast %cst_40 : f32 to vector<16x1xf32>
      %101 = arith.mulf %99, %100 : vector<16x1xf32>
      %102 = vector.extract_strided_slice %98 {offsets = [16, 0], sizes = [16, 1], strides = [1, 1]} : vector<32x1xf32> to vector<16x1xf32>
      %cst_41 = arith.constant 5.000000e-03 : f32
      %103 = vector.broadcast %cst_41 : f32 to vector<16x1xf32>
      %104 = arith.mulf %102, %103 : vector<16x1xf32>
      %105 = arith.mulf %101, %101 : vector<16x1xf32>
      %106 = arith.subf %104, %105 : vector<16x1xf32>
      %cst_42 = arith.constant 0.000000e+00 : f32
      %107 = vector.broadcast %cst_42 : f32 to vector<16x1xf32>
      %108 = arith.maximumf %106, %107 : vector<16x1xf32>
      %c240 = arith.constant 240 : index
      %c0_43 = arith.constant 0 : index
      %109 = vector.load %arg3[%c240, %c0_43] : memref<432x128xf32, #tpu.memory_space<vmem>>, vector<16x1xf32>
      %cst_44 = arith.constant 9.99999974E-6 : f32
      %110 = vector.broadcast %cst_44 : f32 to vector<16x1xf32>
      %111 = arith.addf %108, %110 : vector<16x1xf32>
      %112 = math.rsqrt %111 : vector<16x1xf32>
      %113 = arith.mulf %109, %112 : vector<16x1xf32>
      %c256 = arith.constant 256 : index
      %c0_45 = arith.constant 0 : index
      %114 = vector.load %arg3[%c256, %c0_45] : memref<432x128xf32, #tpu.memory_space<vmem>>, vector<16x1xf32>
      %115 = arith.mulf %101, %113 : vector<16x1xf32>
      %116 = arith.subf %114, %115 : vector<16x1xf32>
      %117 = vector.broadcast %113 : vector<16x1xf32> to vector<16x128xf32>
      %118 = arith.mulf %97, %117 : vector<16x128xf32>
      %119 = vector.broadcast %116 : vector<16x1xf32> to vector<16x128xf32>
      %120 = arith.addf %118, %119 : vector<16x128xf32>
      %c272 = arith.constant 272 : index
      %c0_46 = arith.constant 0 : index
      %121 = vector.load %arg3[%c272, %c0_46] : memref<432x128xf32, #tpu.memory_space<vmem>>, vector<32x16xf32>
      %cst_47 = arith.constant dense<0.000000e+00> : vector<32x128xf32>
      %122 = tpu.matmul %121, %120, %cst_47 {dimension_numbers = #tpu.dot_dimension_numbers<[1], [0], [0], [1], [0, 0, 1, 1], [], []>} : vector<32x16xf32>, vector<16x128xf32>, vector<32x128xf32> -> vector<32x128xf32>
      %c304 = arith.constant 304 : index
      %c0_48 = arith.constant 0 : index
      %123 = vector.load %arg3[%c304, %c0_48] : memref<432x128xf32, #tpu.memory_space<vmem>>, vector<32x1xf32>
      %124 = vector.broadcast %123 : vector<32x1xf32> to vector<32x128xf32>
      %125 = arith.addf %122, %124 : vector<32x128xf32>
      %cst_49 = arith.constant 0.000000e+00 : f32
      %126 = vector.broadcast %cst_49 : f32 to vector<32x128xf32>
      %127 = arith.maximumf %125, %126 : vector<32x128xf32>
      %c0_50 = arith.constant 0 : index
      %c0_51 = arith.constant 0 : index
      %128 = vector.load %arg9[%c0_50, %c0_51] : memref<64x1xf32, #tpu.memory_space<vmem>>, vector<64x1xf32>
      %129 = vector.extract_strided_slice %128 {offsets = [0, 0], sizes = [32, 1], strides = [1, 1]} : vector<64x1xf32> to vector<32x1xf32>
      %cst_52 = arith.constant 5.000000e-03 : f32
      %130 = vector.broadcast %cst_52 : f32 to vector<32x1xf32>
      %131 = arith.mulf %129, %130 : vector<32x1xf32>
      %132 = vector.extract_strided_slice %128 {offsets = [32, 0], sizes = [32, 1], strides = [1, 1]} : vector<64x1xf32> to vector<32x1xf32>
      %cst_53 = arith.constant 5.000000e-03 : f32
      %133 = vector.broadcast %cst_53 : f32 to vector<32x1xf32>
      %134 = arith.mulf %132, %133 : vector<32x1xf32>
      %135 = arith.mulf %131, %131 : vector<32x1xf32>
      %136 = arith.subf %134, %135 : vector<32x1xf32>
      %cst_54 = arith.constant 0.000000e+00 : f32
      %137 = vector.broadcast %cst_54 : f32 to vector<32x1xf32>
      %138 = arith.maximumf %136, %137 : vector<32x1xf32>
      %c336 = arith.constant 336 : index
      %c0_55 = arith.constant 0 : index
      %139 = vector.load %arg3[%c336, %c0_55] : memref<432x128xf32, #tpu.memory_space<vmem>>, vector<32x1xf32>
      %cst_56 = arith.constant 9.99999974E-6 : f32
      %140 = vector.broadcast %cst_56 : f32 to vector<32x1xf32>
      %141 = arith.addf %138, %140 : vector<32x1xf32>
      %142 = math.rsqrt %141 : vector<32x1xf32>
      %143 = arith.mulf %139, %142 : vector<32x1xf32>
      %c368 = arith.constant 368 : index
      %c0_57 = arith.constant 0 : index
      %144 = vector.load %arg3[%c368, %c0_57] : memref<432x128xf32, #tpu.memory_space<vmem>>, vector<32x1xf32>
      %145 = arith.mulf %131, %143 : vector<32x1xf32>
      %146 = arith.subf %144, %145 : vector<32x1xf32>
      %147 = vector.broadcast %143 : vector<32x1xf32> to vector<32x128xf32>
      %148 = arith.mulf %127, %147 : vector<32x128xf32>
      %149 = vector.broadcast %146 : vector<32x1xf32> to vector<32x128xf32>
      %150 = arith.addf %148, %149 : vector<32x128xf32>
      %c400 = arith.constant 400 : index
      %c0_58 = arith.constant 0 : index
      %151 = vector.load %arg3[%c400, %c0_58] : memref<432x128xf32, #tpu.memory_space<vmem>>, vector<16x32xf32>
      %cst_59 = arith.constant dense<0.000000e+00> : vector<16x128xf32>
      %152 = tpu.matmul %151, %150, %cst_59 {dimension_numbers = #tpu.dot_dimension_numbers<[1], [0], [0], [1], [0, 0, 1, 1], [], []>} : vector<16x32xf32>, vector<32x128xf32>, vector<16x128xf32> -> vector<16x128xf32>
      %c416 = arith.constant 416 : index
      %c0_60 = arith.constant 0 : index
      %153 = vector.load %arg3[%c416, %c0_60] : memref<432x128xf32, #tpu.memory_space<vmem>>, vector<16x1xf32>
      %154 = vector.broadcast %153 : vector<16x1xf32> to vector<16x128xf32>
      %155 = arith.addf %152, %154 : vector<16x128xf32>
      %c0_61 = arith.constant 0 : index
      %c0_62 = arith.constant 0 : index
      %156 = vector.load %arg4[%c0_61, %c0_62] : memref<8x128xf32, #tpu.memory_space<vmem>>, vector<8x128xf32>
      tpu.vector_store %arg4[%c0_61, %c0_62], %90 {strides = array<i32>} : memref<8x128xf32, #tpu.memory_space<vmem>>, vector<8x128xf32>,
      %c0_63 = arith.constant 0 : index
      %c0_64 = arith.constant 0 : index
      %157 = vector.load %arg5[%c0_63, %c0_64] : memref<16x128xf32, #tpu.memory_space<vmem>>, vector<16x128xf32>
      tpu.vector_store %arg5[%c0_63, %c0_64], %155 {strides = array<i32>} : memref<16x128xf32, #tpu.memory_space<vmem>>, vector<16x128xf32>,
    } else {
    }
    return
  }
  func.func @transform_0(%arg0: i32, %arg1: i32) -> (i32, i32) {
    %c0_i32 = arith.constant 0 : i32
    %c0_i32_0 = arith.constant 0 : i32
    return %c0_i32, %arg1 : i32, i32
  }
  func.func @transform_1(%arg0: i32, %arg1: i32) -> (i32, i32) {
    %c0_i32 = arith.constant 0 : i32
    %c0_i32_0 = arith.constant 0 : i32
    %c0_i32_1 = arith.constant 0 : i32
    return %c0_i32, %c0_i32_0 : i32, i32
  }
  func.func @transform_2(%arg0: i32, %arg1: i32) -> (i32, i32) {
    %c4_i32 = arith.constant 4 : i32
    %0 = arith.cmpi eq, %arg0, %c4_i32 : i32
    %c0_i32 = arith.constant 0 : i32
    %1 = arith.select %0, %arg1, %c0_i32 : i32
    %c0_i32_0 = arith.constant 0 : i32
    %c0_i32_1 = arith.constant 0 : i32
    return %c0_i32_0, %1 : i32, i32
  }
  func.func @transform_3(%arg0: i32, %arg1: i32) -> (i32, i32) {
    %c4_i32 = arith.constant 4 : i32
    %0 = arith.cmpi eq, %arg0, %c4_i32 : i32
    %c0_i32 = arith.constant 0 : i32
    %1 = arith.select %0, %arg1, %c0_i32 : i32
    %c0_i32_0 = arith.constant 0 : i32
    %c0_i32_1 = arith.constant 0 : i32
    return %c0_i32_0, %1 : i32, i32
  }
}

</mosaic_0001>

<llo_original>
// kernel: refined_transaction_autoencoder.1
$region0: #{refined_transaction_autoencoder.1}
  #allocation0 [shape = 'u32[]', space=smem, size = 0x4, offset = 0x4, fixed_abs, tag = 'smem constant byte address 0x4 - core index']
  #allocation1 [shape = 'u32[144,128]{1,0:T(1,128)}', space=vmem, size = 0x12000, scoped, tag = 'internal scratch']
  #allocation2 [shape = 'f32[64,1]{1,0:T(8,128)}', space=vmem, size = 0x8000, scoped, tag = 'scratch operand']
  #allocation3 [shape = 'f32[32,1]{1,0:T(8,128)}', space=vmem, size = 0x4000, scoped, tag = 'scratch operand']
  #allocation4 [shape = 'f32[32,1]{1,0:T(8,128)}', space=vmem, size = 0x4000, scoped, tag = 'scratch operand']
  #allocation5 [shape = 'f32[64,1]{1,0:T(8,128)}', space=vmem, size = 0x8000, scoped, tag = 'scratch operand']
  %s0 = inlined_call_operand.vmem [shape: f32[16,256], index: 0, kind: input, shape index: {}]
  %s1 = inlined_call_operand.hbm [shape: f32[432,128], index: 1, kind: input, shape index: {}]
  %s2 = inlined_call_operand.vmem [shape: f32[8,256], index: 2, kind: output, shape index: {0}]
  %s3 = inlined_call_operand.vmem [shape: f32[16,256], index: 3, kind: output, shape index: {1}]
  %4 = xla_tuple %s2, %s3
  %s5 = sld [smem:[#allocation0]]
  $region161: #{refined_transaction_autoencoder.1} parent=0
    _
  %s7 = ssub.s32 1, %s5
  %s8 = scalar_select 0, %s7, %s5
  $region1: #{refined_transaction_autoencoder.1} parent=0
    #allocation6 [shape = 'u8[16384]{0}', space=vmem, size = 0x4000, scoped, tag = 'input window, operand 0']
    #allocation7 [shape = 'u8[221184]{0}', space=vmem, size = 0x36000, scoped, tag = 'input window, operand 1, single buffered']
    #allocation8 [shape = 's32[2]{0}', space=sflag, size = 0x8, scoped, tag = 'scoped memory for refined_transaction_autoencoder.1']
    #allocation9 [shape = 'u8[16384]{0}', space=vmem, size = 0x4000, scoped, tag = 'output window, operand 1']
    %9 = vsyncpa [#allocation8], 0
    loop: start=0, step=1, limit=12
    $region2: #{refined_transaction_autoencoder.1} parent=1 // loop_pre_header
      _
    $region3: #{refined_transaction_autoencoder.1} parent=1 // loop_header
      %s11 = sphi 0, %s15
      %p12 = scmp.ge.s32.totalorder %s11, 12
      %s18 = sphi 0, %s30
      %s19 = sphi 0, %s26
      %s20 = sphi 0, %s18
      %s21 = sphi 0, %s19
      %s22 = sphi 0, %s20
      %s23 = sphi 0, %s21
      %s33 = sphi 0, %s35
      %s36 = sphi 0, %s33
      %s37 = sphi 0, %s36
      %s53 = sphi 0, %s37
      %s57 = sphi 0, %s57
      %s59 = sphi 0, %s57
      %s60 = sphi 0, %s59
      %s74 = sphi 0, %s60
      %s84 = sphi 0, %s86
      %s87 = sphi 0, %s84
      %s88 = sphi 0, %s87
      %s104 = sphi 0, %s88
      %s114 = sphi 0, %s116
      %s117 = sphi 0, %s114
      %s118 = sphi 0, %s117
      %s134 = sphi 0, %s118
    $region4: #{refined_transaction_autoencoder.1} parent=1 // loop_header_branch
      %14 = sbr.rel (%p12) target = $region8
    $region5: #{refined_transaction_autoencoder.1} parent=1 // loop_body
      %s16 = ssub.s32 %s11, 1
      %s17 = ssub.s32 %s11, 2
      %s24 = sadd.s32 1, %s19
      %p25 = scmp.ge.s32.totalorder %s24, 2
      %s26 = scalar_select %p25, 0, %s24
      %s27 = sadd.s32 1, %s18
      %s28 = scalar_select %p25, %s27, %s18
      %p29 = scmp.ge.s32.totalorder %s28, 5
      %s30 = scalar_select %p29, 0, %s28
      %s31 = ssub.s32 %s19, %s26
      %p32 = scmp.eq.s32.totalorder %s31, 0
      %s34 = sadd.s32 %s33, 1
      %s35 = scalar_select %p32, %s33, %s34
      %p38 = pneg %p32
      %p39 = scmp.eq.s32.totalorder %s11, 9
      %p40 = por %p38, %p39
      %p41 = scmp.ne.s32.totalorder %s33, %s36
      %p42 = scmp.eq.s32.totalorder %s11, 0
      %p43 = por %p41, %p42
      %p44 = scmp.ne.s32.totalorder %s33, %s36
      %p45 = scmp.eq.s32.totalorder %s16, 9
      %p46 = por %p44, %p45
      %p47 = scmp.ne.s32.totalorder %s36, %s37
      %p48 = scmp.eq.s32.totalorder %s16, 0
      %p49 = por %p47, %p48
      %p50 = scmp.ne.s32.totalorder %s36, %s37
      %p51 = scmp.eq.s32.totalorder %s17, 9
      %p52 = por %p50, %p51
      %p54 = scmp.ne.s32.totalorder %s37, %s53
      %p55 = scmp.eq.s32.totalorder %s17, 0
      %p56 = por %p54, %p55
      %s58 = sadd.s32 %s57, 1
      %p61 = scmp.eq.s32.totalorder %s11, 9
      %p62 = scmp.ne.s32.totalorder %s57, %s59
      %p63 = scmp.eq.s32.totalorder %s11, 0
      %p64 = por %p62, %p63
      %p65 = scmp.ne.s32.totalorder %s57, %s59
      %p66 = scmp.eq.s32.totalorder %s16, 9
      %p67 = por %p65, %p66
      %p68 = scmp.ne.s32.totalorder %s59, %s60
      %p69 = scmp.eq.s32.totalorder %s16, 0
      %p70 = por %p68, %p69
      %p71 = scmp.ne.s32.totalorder %s59, %s60
      %p72 = scmp.eq.s32.totalorder %s17, 9
      %p73 = por %p71, %p72
      %p75 = scmp.ne.s32.totalorder %s60, %s74
      %p76 = scmp.eq.s32.totalorder %s17, 0
      %p77 = por %p75, %p76
      %p78 = scmp.eq.s32.totalorder %s18, 4
      %s79 = scalar_select %p78, %s19, 0
      %p80 = scmp.eq.s32.totalorder %s30, 4
      %s81 = scalar_select %p80, %s26, 0
      %s82 = ssub.s32 %s79, %s81
      %p83 = scmp.eq.s32.totalorder %s82, 0
      %s85 = sadd.s32 %s84, 1
      %s86 = scalar_select %p83, %s84, %s85
      %p89 = pneg %p83
      %p90 = scmp.eq.s32.totalorder %s11, 9
      %p91 = por %p89, %p90
      %p92 = scmp.ne.s32.totalorder %s84, %s87
      %p93 = scmp.eq.s32.totalorder %s11, 0
      %p94 = por %p92, %p93
      %p95 = scmp.ne.s32.totalorder %s84, %s87
      %p96 = scmp.eq.s32.totalorder %s16, 9
      %p97 = por %p95, %p96
      %p98 = scmp.ne.s32.totalorder %s87, %s88
      %p99 = scmp.eq.s32.totalorder %s16, 0
      %p100 = por %p98, %p99
      %p101 = scmp.ne.s32.totalorder %s87, %s88
      %p102 = scmp.eq.s32.totalorder %s17, 9
      %p103 = por %p101, %p102
      %p105 = scmp.ne.s32.totalorder %s88, %s104
      %p106 = scmp.eq.s32.totalorder %s17, 0
      %p107 = por %p105, %p106
      %p108 = scmp.eq.s32.totalorder %s18, 4
      %s109 = scalar_select %p108, %s19, 0
      %p110 = scmp.eq.s32.totalorder %s30, 4
      %s111 = scalar_select %p110, %s26, 0
      %s112 = ssub.s32 %s109, %s111
      %p113 = scmp.eq.s32.totalorder %s112, 0
      %s115 = sadd.s32 %s114, 1
      %s116 = scalar_select %p113, %s114, %s115
      %p119 = pneg %p113
      %p120 = scmp.eq.s32.totalorder %s11, 9
      %p121 = por %p119, %p120
      %p122 = scmp.ne.s32.totalorder %s114, %s117
      %p123 = scmp.eq.s32.totalorder %s11, 0
      %p124 = por %p122, %p123
      %p125 = scmp.ne.s32.totalorder %s114, %s117
      %p126 = scmp.eq.s32.totalorder %s16, 9
      %p127 = por %p125, %p126
      %p128 = scmp.ne.s32.totalorder %s117, %s118
      %p129 = scmp.eq.s32.totalorder %s16, 0
      %p130 = por %p128, %p129
      %p131 = scmp.ne.s32.totalorder %s117, %s118
      %p132 = scmp.eq.s32.totalorder %s17, 9
      %p133 = por %p131, %p132
      %p135 = scmp.ne.s32.totalorder %s118, %s134
      %p136 = scmp.eq.s32.totalorder %s17, 0
      %p137 = por %p135, %p136
      %p138 = scmp.le.s32.totalorder 1, %s11
      %p139 = scmp.lt.s32.totalorder %s11, 11
      %p140 = pnand %p138, %p139
      %p141 = pneg %p140
      // Predicated region
      $region9: #{refined_transaction_autoencoder.1} parent=5 // pred_check
        _
      $region10: #{refined_transaction_autoencoder.1} parent=5 // pred_check_branch
        %143 = sbr.rel (%p140) target = $region12
      $region11: #{refined_transaction_autoencoder.1} parent=5 // pred_region
        %s144 = ssub.s32 %s11, 1
        // Predicated region
        $region13: #{refined_transaction_autoencoder.1} parent=11 // pred_check
          %p145 = pneg %p70
        $region14: #{refined_transaction_autoencoder.1} parent=11 // pred_check_branch
          %147 = sbr.rel (%p145) target = $region16
        $region15: #{refined_transaction_autoencoder.1} parent=11 // pred_region
          %s149 = ssub.s32 6912, 6912
          %150 = vsyncadd [#allocation8], %s149
          %s151 = sshll.u32 [#allocation7], 4
          %s152 = int_to_ptr.vmem [resolvable:$true] %s151
          %157 = dma.hbm_to_vmem [thread:$0]  %s1, 6912, %s152, [#allocation8], 128, 128, 8
        $region16: #{refined_transaction_autoencoder.1} parent=11 // pred_fallthru
          _
      $region12: #{refined_transaction_autoencoder.1} parent=5 // pred_fallthru
        _
      %p158 = scmp.lt.s32.totalorder %s11, 10
      // Predicated region
      $region17: #{refined_transaction_autoencoder.1} parent=5 // pred_check
        %p159 = pneg %p158
      $region18: #{refined_transaction_autoencoder.1} parent=5 // pred_check_branch
        %161 = sbr.rel (%p159) target = $region20
      $region19: #{refined_transaction_autoencoder.1} parent=5 // pred_region
        // Predicated region
        $region21: #{refined_transaction_autoencoder.1} parent=19 // pred_check
          %p162 = pneg %p43
        $region22: #{refined_transaction_autoencoder.1} parent=19 // pred_check_branch
          %164 = sbr.rel (%p162) target = $region24
        $region23: #{refined_transaction_autoencoder.1} parent=19 // pred_region
          %s165 = sand.u32 %s33, 1
          %s166 = sand.u32 %s33, 1
          %s167 = smul.addr %s166, 16
          %s168 = scalar_lea.vmem [#allocation6], %s167
          %s169 = smul.addr %s19, 8
          %s170 = scalar_lea.vmem %s0, %s169
          // Predicated region
          $region25: #{refined_transaction_autoencoder.1} parent=23 // pred_check
            _
          $region26: #{refined_transaction_autoencoder.1} parent=23 // pred_check_branch
            %172 = sbr.rel (0) target = $region28
          $region27: #{refined_transaction_autoencoder.1} parent=23 // pred_region
            // Predicated region
            $region29: #{refined_transaction_autoencoder.1} parent=27 // pred_check
              _
            $region30: #{refined_transaction_autoencoder.1} parent=27 // pred_check_branch
              %174 = sbr.rel (0) target = $region32
            $region31: #{refined_transaction_autoencoder.1} parent=27 // pred_region
              // Predicated region
              $region44: #{refined_transaction_autoencoder.1} parent=31 // pred_check
                _
              $region45: #{refined_transaction_autoencoder.1} parent=31 // pred_check_branch
                %191 = sbr.rel (0) target = $region47
              $region46: #{refined_transaction_autoencoder.1} parent=31 // pred_region
                loop: start=0, step=1, limit=1
                $region48: #{refined_transaction_autoencoder.1} parent=46 // loop_pre_header
                  _
                $region49: #{refined_transaction_autoencoder.1} parent=46 // loop_header
                  %s193 = sphi 0, %s197
                  %p194 = scmp.ge.s32.totalorder %s193, 1
                  %s198 = sphi %s170, %s170
                  %s199 = sphi %s168, %s168
                $region50: #{refined_transaction_autoencoder.1} parent=46 // loop_header_branch
                  %196 = sbr.rel (%p194) target = $region54
                $region51: #{refined_transaction_autoencoder.1} parent=46 // loop_body
                  %v200 = vld [vmem:[%s198] sm:$0xff]
                  %201 = vst [vmem:[%s199] sm:$0xff] %v200
                  %v202 = vld [vmem:[%s198 + $0x10] sm:$0xff]
                  %203 = vst [vmem:[%s199 + $0x8] sm:$0xff] %v202
                $region52: #{refined_transaction_autoencoder.1} parent=46 // loop_footer
                  %s197 = sadd.s32 1, %s193
                $region53: #{refined_transaction_autoencoder.1} parent=46 // loop_footer_branch
                  %192 = sbr.rel target = $region49
                $region54: #{refined_transaction_autoencoder.1} parent=46 // loop_exit
                  _
              $region47: #{refined_transaction_autoencoder.1} parent=31 // pred_fallthru
                _
              // Predicated region
              $region55: #{refined_transaction_autoencoder.1} parent=31 // pred_check
                _
              $region56: #{refined_transaction_autoencoder.1} parent=31 // pred_check_branch
                %205 = sbr.rel target = $region58
              $region57: #{refined_transaction_autoencoder.1} parent=31 // pred_region
                _
              $region58: #{refined_transaction_autoencoder.1} parent=31 // pred_fallthru
                _
            $region32: #{refined_transaction_autoencoder.1} parent=27 // pred_fallthru
              _
            // Predicated region
            $region33: #{refined_transaction_autoencoder.1} parent=27 // pred_check
              _
            $region34: #{refined_transaction_autoencoder.1} parent=27 // pred_check_branch
              %176 = sbr.rel target = $region36
            $region35: #{refined_transaction_autoencoder.1} parent=27 // pred_region
              loop: start=0, step=1, limit=1
              $region37: #{refined_transaction_autoencoder.1} parent=35 // loop_pre_header
                _
              $region38: #{refined_transaction_autoencoder.1} parent=35 // loop_header
                %s179 = sphi 0, %s183
                %p180 = scmp.ge.s32.totalorder %s179, 1
                %s184 = sphi %s170, %s170
                %s185 = sphi %s168, %s168
              $region39: #{refined_transaction_autoencoder.1} parent=35 // loop_header_branch
                %182 = sbr.rel (%p180) target = $region43
              $region40: #{refined_transaction_autoencoder.1} parent=35 // loop_body
                %v186 = vld [vmem:[%s184] sm:$0xff]
                %187 = vst [vmem:[%s185] sm:$0xff] %v186
                %v188 = vld [vmem:[%s184 + $0x10] sm:$0xff]
                %189 = vst [vmem:[%s185 + $0x8] sm:$0xff] %v188
              $region41: #{refined_transaction_autoencoder.1} parent=35 // loop_footer
                %s183 = sadd.s32 1, %s179
              $region42: #{refined_transaction_autoencoder.1} parent=35 // loop_footer_branch
                %178 = sbr.rel target = $region38
              $region43: #{refined_transaction_autoencoder.1} parent=35 // loop_exit
                _
            $region36: #{refined_transaction_autoencoder.1} parent=27 // pred_fallthru
              _
          $region28: #{refined_transaction_autoencoder.1} parent=23 // pred_fallthru
            _
          %206 = vnop
        $region24: #{refined_transaction_autoencoder.1} parent=19 // pred_fallthru
          _
      $region20: #{refined_transaction_autoencoder.1} parent=5 // pred_fallthru
        _
      %p207 = scmp.le.s32.totalorder 1, %s11
      %p208 = scmp.lt.s32.totalorder %s11, 11
      %p209 = pnand %p207, %p208
      %p210 = pneg %p209
      // Predicated region
      $region59: #{refined_transaction_autoencoder.1} parent=5 // pred_check
        _
      $region60: #{refined_transaction_autoencoder.1} parent=5 // pred_check_branch
        %212 = sbr.rel (%p209) target = $region62
      $region61: #{refined_transaction_autoencoder.1} parent=5 // pred_region
        %s213 = ssub.s32 %s11, 1
        %s214 = sand.u32 %s36, 1
        %s215 = sand.u32 %s36, 1
        %s216 = smul.addr %s215, 16
        %s217 = scalar_lea.vmem [#allocation6], %s216
        // Predicated region
        $region63: #{refined_transaction_autoencoder.1} parent=61 // pred_check
          %p218 = pneg %p49
        $region64: #{refined_transaction_autoencoder.1} parent=61 // pred_check_branch
          %220 = sbr.rel (%p218) target = $region66
        $region65: #{refined_transaction_autoencoder.1} parent=61 // pred_region
          _
        $region66: #{refined_transaction_autoencoder.1} parent=61 // pred_fallthru
          _
        // Predicated region
        $region67: #{refined_transaction_autoencoder.1} parent=61 // pred_check
          %p221 = pneg %p70
        $region68: #{refined_transaction_autoencoder.1} parent=61 // pred_check_branch
          %223 = sbr.rel (%p221) target = $region70
        $region69: #{refined_transaction_autoencoder.1} parent=61 // pred_region
          %224 = dma.done [#allocation8], 6912
        $region70: #{refined_transaction_autoencoder.1} parent=61 // pred_fallthru
          _
        %s225 = sand.u32 %s36, 1
        %s226 = sand.u32 %s36, 1
        %s227 = smul.addr %s226, 16
        %s228 = scalar_lea.vmem [#allocation6], %s227
        %p229 = pneg %p49
        %p230 = pneg %p46
        %p231 = pneg %p70
        %p232 = pneg %p67
        %p233 = pneg %p100
        %p234 = pneg %p97
        %p235 = scmp.eq.s32.totalorder %s20, 4
        %s236 = scalar_select %p235, %s21, 0
        %p237 = scmp.lt.s32.totalorder %s236, 1
        %s238 = scalar_select %p237, %s236, 1
        %s239 = smul.addr %s238, 8
        %s240 = scalar_lea.vmem %s2, %s239
        %p241 = pneg %p130
        %p242 = pneg %p127
        %s243 = sand.u32 %s117, 1
        %s244 = sand.u32 %s117, 1
        %s245 = smul.addr %s244, 16
        %s246 = scalar_lea.vmem [#allocation9], %s245
        %p247 = scmp.eq.s32.totalorder %s20, 4
        %s248 = scalar_select %p247, %s21, 0
        %p249 = scmp.lt.s32.totalorder %s248, 1
        %s250 = scalar_select %p249, %s248, 1
        %s251 = smul.addr %s250, 8
        %s252 = scalar_lea.vmem %s2, %s251
        %p253 = scmp.eq.s32.totalorder %s20, 4
        %s254 = scalar_select %p253, %s21, 0
        %p255 = scmp.eq.s32.totalorder %s20, 4
        %s256 = scalar_select %p255, %s21, 0
        %v257 = vlaneseq
        %v258 = vand.u32 %v257, 127
        %s259 = smul.u32 %s21, 128
        %v260 = vstv %s259
        %v261 = vadd.s32 %v258, %v260
        %vm262 = vcmp.lt.s32.totalorder %v261, 200
        %v263 = vsel %vm262, 1, 0
        %v264 = vcvt.s32.f32 %v263
        %v265 = vld [vmem:[%s217] sm:$0xff]
        %v266 = vld [vmem:[%s217 + $0x8] sm:$0xff]
        %p267 = scmp.eq.s32.totalorder %s20, 0
        // Predicated region
        $region71: #{refined_transaction_autoencoder.1} parent=61 // pred_check
          %p268 = pneg %p267
        $region72: #{refined_transaction_autoencoder.1} parent=61 // pred_check_branch
          %270 = sbr.rel (%p268) target = $region74
        $region73: #{refined_transaction_autoencoder.1} parent=61 // pred_region
          %v271 = vld [vmem:[#allocation7] sm:$0xff]
          %v272 = vld [vmem:[#allocation7 + $0x8] sm:$0xff]
          %v273 = vld [vmem:[#allocation7 + $0x10] sm:$0xff]
          %v274 = vld [vmem:[#allocation7 + $0x18] sm:$0xff]
          %v275 = vld [vmem:[#allocation7 + $0x20] sm:$0xff]
          %v276 = vld [vmem:[#allocation7 + $0x28] sm:$0xff]
          %v277 = vld [vmem:[#allocation7 + $0x30] sm:$0xff]
          %v278 = vld [vmem:[#allocation7 + $0x38] sm:$0xff]
          %280 = vset.pattern.permute.xlu0 0
          %281 = vperm.xlu0 %280, %v275
          %v282 = vpop.permute.xlu0 %281
          %285 = vset.pattern.permute.xlu0 0
          %286 = vperm.xlu0 %285, %v276
          %v287 = vpop.permute.xlu0 %286
          %290 = vset.pattern.permute.xlu0 0
          %291 = vperm.xlu0 %290, %v277
          %v292 = vpop.permute.xlu0 %291
          %295 = vset.pattern.permute.xlu0 0
          %296 = vperm.xlu0 %295, %v278
          %v297 = vpop.permute.xlu0 %296
          %vm299 = vcmask 130048
          %v301 = vsel %vm299, %v271, 0
          %v304 = vsel %vm299, %v272, 0
          %v307 = vsel %vm299, %v273, 0
          %v310 = vsel %vm299, %v274, 0
          %312 = vmatprep.subr.mxu0 0.0
          %313 = vmatpush1.msra.mxu0 %v265
          %314 = vmatprep.subr.mxu0 0.0
          %315 = vmatpush1.msra.mxu0 %v266
          %316 = vmatprep.subr.mxu0 0.0
          %317 = vmatpush1.msra.mxu0 0.0
          %318 = vmatprep.subr.mxu0 0.0
          %319 = vmatpush1.msra.mxu0 0.0
          %320 = vmatprep.subr.mxu0 0.0
          %321 = vmatpush1.msra.mxu0 0.0
          %322 = vmatprep.subr.mxu0 0.0
          %323 = vmatpush1.msra.mxu0 0.0
          %324 = vmatprep.subr.mxu0 0.0
          %325 = vmatpush1.msra.mxu0 0.0
          %326 = vmatprep.subr.mxu0 0.0
          %327 = vmatpush1.msra.mxu0 0.0
          %328 = vmatprep.subr.mxu0 0.0
          %329 = vmatpush1.msra.mxu0 0.0
          %330 = vmatprep.subr.mxu0 0.0
          %331 = vmatpush1.msra.mxu0 0.0
          %332 = vmatprep.subr.mxu0 0.0
          %333 = vmatpush1.msra.mxu0 0.0
          %334 = vmatprep.subr.mxu0 0.0
          %335 = vmatpush1.msra.mxu0 0.0
          %336 = vmatprep.subr.mxu0 0.0
          %337 = vmatpush1.msra.mxu0 0.0
          %338 = vmatprep.subr.mxu0 0.0
          %339 = vmatpush1.msra.mxu0 0.0
          %340 = vmatprep.subr.mxu0 0.0
          %341 = vmatpush1.msra.mxu0 0.0
          %342 = vmatprep.subr.mxu0 0.0
          %343 = vmatpush1.msra.mxu0 0.0
          %344 = vmatprep.subr.mxu0 0.0
          %345 = vmatpush1.msra.mxu0 0.0
          %346 = vmatprep.subr.mxu0 0.0
          %347 = vmatpush1.msra.mxu0 0.0
          %348 = vmatprep.subr.mxu0 0.0
          %349 = vmatpush1.msra.mxu0 0.0
          %350 = vmatprep.subr.mxu0 0.0
          %351 = vmatpush1.msra.mxu0 0.0
          %352 = vmatprep.subr.mxu0 0.0
          %353 = vmatpush1.msra.mxu0 0.0
          %354 = vmatprep.subr.mxu0 0.0
          %355 = vmatpush1.msra.mxu0 0.0
          %356 = vmatprep.subr.mxu0 0.0
          %357 = vmatpush1.msra.mxu0 0.0
          %358 = vmatprep.subr.mxu0 0.0
          %359 = vmatpush1.msra.mxu0 0.0
          %360 = vmatprep.subr.mxu0 0.0
          %361 = vmatpush1.msra.mxu0 0.0
          %362 = vmatprep.subr.mxu0 0.0
          %363 = vmatpush1.msra.mxu0 0.0
          %364 = vmatprep.subr.mxu0 0.0
          %365 = vmatpush1.msra.mxu0 0.0
          %366 = vmatprep.subr.mxu0 0.0
          %367 = vmatpush1.msra.mxu0 0.0
          %368 = vmatprep.subr.mxu0 0.0
          %369 = vmatpush1.msra.mxu0 0.0
          %370 = vmatprep.subr.mxu0 0.0
          %371 = vmatpush1.msra.mxu0 0.0
          %372 = vmatprep.subr.mxu0 0.0
          %373 = vmatpush1.msra.mxu0 0.0
          %374 = vmatprep.subr.mxu0 0.0
          %375 = vmatpush1.msra.mxu0 0.0
          %376 = vmatprep.mubr.f32.mxu0 0.0
          %377 = vmatmul.mubr.f32.gmra.mrb[0].mxu0 %v301
          %v378 = vpop.f32.mrb[0].mxu0
          %v379 = vadd.f32 %v282, %v378
          %v380 = vpop.f32.mrb[0].mxu0
          %381 = vmatprep.mubr.f32.mxu0 0.0
          %382 = vmatmul.mubr.f32.gmra.mrb[0].mxu0 %v304
          %v383 = vpop.f32.mrb[0].mxu0
          %v384 = vadd.f32 %v287, %v383
          %v385 = vpop.f32.mrb[0].mxu0
          %386 = vmatprep.mubr.f32.mxu0 0.0
          %387 = vmatmul.mubr.f32.gmra.mrb[0].mxu0 %v307
          %v388 = vpop.f32.mrb[0].mxu0
          %v389 = vadd.f32 %v292, %v388
          %v390 = vpop.f32.mrb[0].mxu0
          %391 = vmatprep.mubr.f32.mxu0 0.0
          %392 = vmatmul.mubr.f32.gmra.mrb[0].mxu0 %v310
          %v393 = vpop.f32.mrb[0].mxu0
          %v394 = vadd.f32 %v297, %v393
          %v395 = vpop.f32.mrb[0].mxu0
          %396 = vdwg.mxu0
          %v397 = vmax.f32 %v379, 0.0
          %v398 = vmax.f32 %v384, 0.0
          %v399 = vmax.f32 %v389, 0.0
          %v400 = vmax.f32 %v394, 0.0
          %v401 = vmul.f32 %v397, %v397
          %v402 = vmul.f32 %v398, %v398
          %v403 = vmul.f32 %v399, %v399
          %v404 = vmul.f32 %v400, %v400
          %v405 = vmul.f32 %v397, %v264
          %v406 = vmul.f32 %v398, %v264
          %v407 = vmul.f32 %v399, %v264
          %v408 = vmul.f32 %v400, %v264
          %v409 = vmul.f32 %v401, %v264
          %v410 = vmul.f32 %v402, %v264
          %v411 = vmul.f32 %v403, %v264
          %v412 = vmul.f32 %v404, %v264
          %413 = vadd.xlane.f32.xlu0 %v405
          %v414 = vpop.xlane.xlu0 %413
          %415 = vadd.xlane.f32.xlu0 %v406
          %v416 = vpop.xlane.xlu0 %415
          %417 = vadd.xlane.f32.xlu0 %v407
          %v418 = vpop.xlane.xlu0 %417
          %419 = vadd.xlane.f32.xlu0 %v408
          %v420 = vpop.xlane.xlu0 %419
          %421 = vadd.xlane.f32.xlu0 %v409
          %v422 = vpop.xlane.xlu0 %421
          %423 = vadd.xlane.f32.xlu0 %v410
          %v424 = vpop.xlane.xlu0 %423
          %425 = vadd.xlane.f32.xlu0 %v411
          %v426 = vpop.xlane.xlu0 %425
          %427 = vadd.xlane.f32.xlu0 %v412
          %v428 = vpop.xlane.xlu0 %427
          %p429 = scmp.eq.s32.totalorder %s21, 0
          // Predicated region
          $region75: #{refined_transaction_autoencoder.1} parent=73 // pred_check
            %p430 = pneg %p429
          $region76: #{refined_transaction_autoencoder.1} parent=73 // pred_check_branch
            %432 = sbr.rel (%p430) target = $region78
          $region77: #{refined_transaction_autoencoder.1} parent=73 // pred_region
            %vm433 = vcmask 7168
            %434 = vst.msk [vmem:[#allocation2] sm:$0xff] %vm433, 0.0
            %435 = vst.msk [vmem:[#allocation2 + $0x8] sm:$0xff] %vm433, 0.0
            %436 = vst.msk [vmem:[#allocation2 + $0x10] sm:$0xff] %vm433, 0.0
            %437 = vst.msk [vmem:[#allocation2 + $0x18] sm:$0xff] %vm433, 0.0
            %438 = vst.msk [vmem:[#allocation2 + $0x20] sm:$0xff] %vm433, 0.0
            %439 = vst.msk [vmem:[#allocation2 + $0x28] sm:$0xff] %vm433, 0.0
            %440 = vst.msk [vmem:[#allocation2 + $0x30] sm:$0xff] %vm433, 0.0
            %441 = vst.msk [vmem:[#allocation2 + $0x38] sm:$0xff] %vm433, 0.0
          $region78: #{refined_transaction_autoencoder.1} parent=73 // pred_fallthru
            _
          %v442 = vld [vmem:[#allocation2] sm:$0xff]
          %v443 = vld [vmem:[#allocation2 + $0x8] sm:$0xff]
          %v444 = vld [vmem:[#allocation2 + $0x10] sm:$0xff]
          %v445 = vld [vmem:[#allocation2 + $0x18] sm:$0xff]
          %v446 = vld [vmem:[#allocation2 + $0x20] sm:$0xff]
          %v447 = vld [vmem:[#allocation2 + $0x28] sm:$0xff]
          %v448 = vld [vmem:[#allocation2 + $0x30] sm:$0xff]
          %v449 = vld [vmem:[#allocation2 + $0x38] sm:$0xff]
          %v450 = vadd.f32 %v442, %v414
          %v451 = vadd.f32 %v443, %v416
          %v452 = vadd.f32 %v444, %v418
          %v453 = vadd.f32 %v445, %v420
          %v454 = vadd.f32 %v446, %v422
          %v455 = vadd.f32 %v447, %v424
          %v456 = vadd.f32 %v448, %v426
          %v457 = vadd.f32 %v449, %v428
          %vm458 = vcmask 7168
          %459 = vst.msk [vmem:[#allocation2] sm:$0xff] %vm458, %v450
          %460 = vst.msk [vmem:[#allocation2 + $0x8] sm:$0xff] %vm458, %v451
          %461 = vst.msk [vmem:[#allocation2 + $0x10] sm:$0xff] %vm458, %v452
          %462 = vst.msk [vmem:[#allocation2 + $0x18] sm:$0xff] %vm458, %v453
          %463 = vst.msk [vmem:[#allocation2 + $0x20] sm:$0xff] %vm458, %v454
          %464 = vst.msk [vmem:[#allocation2 + $0x28] sm:$0xff] %vm458, %v455
          %465 = vst.msk [vmem:[#allocation2 + $0x30] sm:$0xff] %vm458, %v456
          %466 = vst.msk [vmem:[#allocation2 + $0x38] sm:$0xff] %vm458, %v457
        $region74: #{refined_transaction_autoencoder.1} parent=61 // pred_fallthru
          _
        %p467 = scmp.eq.s32.totalorder %s20, 1
        // Predicated region
        $region79: #{refined_transaction_autoencoder.1} parent=61 // pred_check
          %p468 = pneg %p467
        $region80: #{refined_transaction_autoencoder.1} parent=61 // pred_check_branch
          %470 = sbr.rel (%p468) target = $region82
        $region81: #{refined_transaction_autoencoder.1} parent=61 // pred_region
          %v471 = vld [vmem:[#allocation7] sm:$0xff]
          %v472 = vld [vmem:[#allocation7 + $0x8] sm:$0xff]
          %v473 = vld [vmem:[#allocation7 + $0x10] sm:$0xff]
          %v474 = vld [vmem:[#allocation7 + $0x18] sm:$0xff]
          %v475 = vld [vmem:[#allocation7 + $0x20] sm:$0xff]
          %v476 = vld [vmem:[#allocation7 + $0x28] sm:$0xff]
          %v477 = vld [vmem:[#allocation7 + $0x30] sm:$0xff]
          %v478 = vld [vmem:[#allocation7 + $0x38] sm:$0xff]
          %480 = vset.pattern.permute.xlu0 0
          %481 = vperm.xlu0 %480, %v475
          %v482 = vpop.permute.xlu0 %481
          %485 = vset.pattern.permute.xlu0 0
          %486 = vperm.xlu0 %485, %v476
          %v487 = vpop.permute.xlu0 %486
          %490 = vset.pattern.permute.xlu0 0
          %491 = vperm.xlu0 %490, %v477
          %v492 = vpop.permute.xlu0 %491
          %495 = vset.pattern.permute.xlu0 0
          %496 = vperm.xlu0 %495, %v478
          %v497 = vpop.permute.xlu0 %496
          %vm499 = vcmask 130048
          %v501 = vsel %vm499, %v471, 0
          %v504 = vsel %vm499, %v472, 0
          %v507 = vsel %vm499, %v473, 0
          %v510 = vsel %vm499, %v474, 0
          %512 = vmatprep.subr.mxu0 0.0
          %513 = vmatpush1.msra.mxu0 %v265
          %514 = vmatprep.subr.mxu0 0.0
          %515 = vmatpush1.msra.mxu0 %v266
          %516 = vmatprep.subr.mxu0 0.0
          %517 = vmatpush1.msra.mxu0 0.0
          %518 = vmatprep.subr.mxu0 0.0
          %519 = vmatpush1.msra.mxu0 0.0
          %520 = vmatprep.subr.mxu0 0.0
          %521 = vmatpush1.msra.mxu0 0.0
          %522 = vmatprep.subr.mxu0 0.0
          %523 = vmatpush1.msra.mxu0 0.0
          %524 = vmatprep.subr.mxu0 0.0
          %525 = vmatpush1.msra.mxu0 0.0
          %526 = vmatprep.subr.mxu0 0.0
          %527 = vmatpush1.msra.mxu0 0.0
          %528 = vmatprep.subr.mxu0 0.0
          %529 = vmatpush1.msra.mxu0 0.0
          %530 = vmatprep.subr.mxu0 0.0
          %531 = vmatpush1.msra.mxu0 0.0
          %532 = vmatprep.subr.mxu0 0.0
          %533 = vmatpush1.msra.mxu0 0.0
          %534 = vmatprep.subr.mxu0 0.0
          %535 = vmatpush1.msra.mxu0 0.0
          %536 = vmatprep.subr.mxu0 0.0
          %537 = vmatpush1.msra.mxu0 0.0
          %538 = vmatprep.subr.mxu0 0.0
          %539 = vmatpush1.msra.mxu0 0.0
          %540 = vmatprep.subr.mxu0 0.0
          %541 = vmatpush1.msra.mxu0 0.0
          %542 = vmatprep.subr.mxu0 0.0
          %543 = vmatpush1.msra.mxu0 0.0
          %544 = vmatprep.subr.mxu0 0.0
          %545 = vmatpush1.msra.mxu0 0.0
          %546 = vmatprep.subr.mxu0 0.0
          %547 = vmatpush1.msra.mxu0 0.0
          %548 = vmatprep.subr.mxu0 0.0
          %549 = vmatpush1.msra.mxu0 0.0
          %550 = vmatprep.subr.mxu0 0.0
          %551 = vmatpush1.msra.mxu0 0.0
          %552 = vmatprep.subr.mxu0 0.0
          %553 = vmatpush1.msra.mxu0 0.0
          %554 = vmatprep.subr.mxu0 0.0
          %555 = vmatpush1.msra.mxu0 0.0
          %556 = vmatprep.subr.mxu0 0.0
          %557 = vmatpush1.msra.mxu0 0.0
          %558 = vmatprep.subr.mxu0 0.0
          %559 = vmatpush1.msra.mxu0 0.0
          %560 = vmatprep.subr.mxu0 0.0
          %561 = vmatpush1.msra.mxu0 0.0
          %562 = vmatprep.subr.mxu0 0.0
          %563 = vmatpush1.msra.mxu0 0.0
          %564 = vmatprep.subr.mxu0 0.0
          %565 = vmatpush1.msra.mxu0 0.0
          %566 = vmatprep.subr.mxu0 0.0
          %567 = vmatpush1.msra.mxu0 0.0
          %568 = vmatprep.subr.mxu0 0.0
          %569 = vmatpush1.msra.mxu0 0.0
          %570 = vmatprep.subr.mxu0 0.0
          %571 = vmatpush1.msra.mxu0 0.0
          %572 = vmatprep.subr.mxu0 0.0
          %573 = vmatpush1.msra.mxu0 0.0
          %574 = vmatprep.subr.mxu0 0.0
          %575 = vmatpush1.msra.mxu0 0.0
          %576 = vmatprep.mubr.f32.mxu0 0.0
          %577 = vmatmul.mubr.f32.gmra.mrb[0].mxu0 %v501
          %v578 = vpop.f32.mrb[0].mxu0
          %v579 = vadd.f32 %v482, %v578
          %v580 = vpop.f32.mrb[0].mxu0
          %581 = vmatprep.mubr.f32.mxu0 0.0
          %582 = vmatmul.mubr.f32.gmra.mrb[0].mxu0 %v504
          %v583 = vpop.f32.mrb[0].mxu0
          %v584 = vadd.f32 %v487, %v583
          %v585 = vpop.f32.mrb[0].mxu0
          %586 = vmatprep.mubr.f32.mxu0 0.0
          %587 = vmatmul.mubr.f32.gmra.mrb[0].mxu0 %v507
          %v588 = vpop.f32.mrb[0].mxu0
          %v589 = vadd.f32 %v492, %v588
          %v590 = vpop.f32.mrb[0].mxu0
          %591 = vmatprep.mubr.f32.mxu0 0.0
          %592 = vmatmul.mubr.f32.gmra.mrb[0].mxu0 %v510
          %v593 = vpop.f32.mrb[0].mxu0
          %v594 = vadd.f32 %v497, %v593
          %v595 = vpop.f32.mrb[0].mxu0
          %596 = vdwg.mxu0
          %v597 = vmax.f32 %v579, 0.0
          %v598 = vmax.f32 %v584, 0.0
          %v599 = vmax.f32 %v589, 0.0
          %v600 = vmax.f32 %v594, 0.0
          %v601 = vld [vmem:[#allocation2] sm:$0xff]
          %v602 = vld [vmem:[#allocation2 + $0x8] sm:$0xff]
          %v603 = vld [vmem:[#allocation2 + $0x10] sm:$0xff]
          %v604 = vld [vmem:[#allocation2 + $0x18] sm:$0xff]
          %v605 = vld [vmem:[#allocation2 + $0x20] sm:$0xff]
          %v606 = vld [vmem:[#allocation2 + $0x28] sm:$0xff]
          %v607 = vld [vmem:[#allocation2 + $0x30] sm:$0xff]
          %v608 = vld [vmem:[#allocation2 + $0x38] sm:$0xff]
          %v609 = vmul.f32 %v601, 0.005
          %v610 = vmul.f32 %v602, 0.005
          %v611 = vmul.f32 %v603, 0.005
          %v612 = vmul.f32 %v604, 0.005
          %v613 = vmul.f32 %v605, 0.005
          %v614 = vmul.f32 %v606, 0.005
          %v615 = vmul.f32 %v607, 0.005
          %v616 = vmul.f32 %v608, 0.005
          %v617 = vmul.f32 %v609, %v609
          %v618 = vmul.f32 %v610, %v610
          %v619 = vmul.f32 %v611, %v611
          %v620 = vmul.f32 %v612, %v612
          %v621 = vsub.f32 %v613, %v617
          %v622 = vsub.f32 %v614, %v618
          %v623 = vsub.f32 %v615, %v619
          %v624 = vsub.f32 %v616, %v620
          %v625 = vmax.f32 %v621, 0.0
          %v626 = vmax.f32 %v622, 0.0
          %v627 = vmax.f32 %v623, 0.0
          %v628 = vmax.f32 %v624, 0.0
          %v629 = vld [vmem:[#allocation7 + $0x40] sm:$0xff]
          %v630 = vld [vmem:[#allocation7 + $0x48] sm:$0xff]
          %v631 = vld [vmem:[#allocation7 + $0x50] sm:$0xff]
          %v632 = vld [vmem:[#allocation7 + $0x58] sm:$0xff]
          %v633 = vadd.f32 %v625, 1e-05
          %v634 = vadd.f32 %v626, 1e-05
          %v635 = vadd.f32 %v627, 1e-05
          %v636 = vadd.f32 %v628, 1e-05
          %v637 = vrsqrt.pop %v633
          %v638 = vrsqrt.pop %v634
          %v639 = vrsqrt.pop %v635
          %v640 = vrsqrt.pop %v636
          %v641 = vmul.f32 %v629, %v637
          %v642 = vmul.f32 %v630, %v638
          %v643 = vmul.f32 %v631, %v639
          %v644 = vmul.f32 %v632, %v640
          %v645 = vld [vmem:[#allocation7 + $0x60] sm:$0xff]
          %v646 = vld [vmem:[#allocation7 + $0x68] sm:$0xff]
          %v647 = vld [vmem:[#allocation7 + $0x70] sm:$0xff]
          %v648 = vld [vmem:[#allocation7 + $0x78] sm:$0xff]
          %v649 = vmul.f32 %v609, %v641
          %v650 = vmul.f32 %v610, %v642
          %v651 = vmul.f32 %v611, %v643
          %v652 = vmul.f32 %v612, %v644
          %v653 = vsub.f32 %v645, %v649
          %v654 = vsub.f32 %v646, %v650
          %v655 = vsub.f32 %v647, %v651
          %v656 = vsub.f32 %v648, %v652
          %658 = vset.pattern.permute.xlu0 0
          %659 = vperm.xlu0 %658, %v641
          %v660 = vpop.permute.xlu0 %659
          %663 = vset.pattern.permute.xlu0 0
          %664 = vperm.xlu0 %663, %v642
          %v665 = vpop.permute.xlu0 %664
          %668 = vset.pattern.permute.xlu0 0
          %669 = vperm.xlu0 %668, %v643
          %v670 = vpop.permute.xlu0 %669
          %673 = vset.pattern.permute.xlu0 0
          %674 = vperm.xlu0 %673, %v644
          %v675 = vpop.permute.xlu0 %674
          %v677 = vmul.f32 %v597, %v660
          %v678 = vmul.f32 %v598, %v665
          %v679 = vmul.f32 %v599, %v670
          %v680 = vmul.f32 %v600, %v675
          %682 = vset.pattern.permute.xlu0 0
          %683 = vperm.xlu0 %682, %v653
          %v684 = vpop.permute.xlu0 %683
          %687 = vset.pattern.permute.xlu0 0
          %688 = vperm.xlu0 %687, %v654
          %v689 = vpop.permute.xlu0 %688
          %692 = vset.pattern.permute.xlu0 0
          %693 = vperm.xlu0 %692, %v655
          %v694 = vpop.permute.xlu0 %693
          %697 = vset.pattern.permute.xlu0 0
          %698 = vperm.xlu0 %697, %v656
          %v699 = vpop.permute.xlu0 %698
          %v701 = vadd.f32 %v677, %v684
          %v702 = vadd.f32 %v678, %v689
          %v703 = vadd.f32 %v679, %v694
          %v704 = vadd.f32 %v680, %v699
          %v705 = vld [vmem:[#allocation7 + $0x80] sm:$0xff]
          %v706 = vld [vmem:[#allocation7 + $0x88] sm:$0xff]
          %v707 = vld [vmem:[#allocation7 + $0x90] sm:$0xff]
          %v708 = vld [vmem:[#allocation7 + $0x98] sm:$0xff]
          %710 = vset.pattern.permute.xlu0 0
          %711 = vperm.xlu0 %710, %v707
          %v712 = vpop.permute.xlu0 %711
          %715 = vset.pattern.permute.xlu0 0
          %716 = vperm.xlu0 %715, %v708
          %v717 = vpop.permute.xlu0 %716
          %vm719 = vcmask 261120
          %v721 = vsel %vm719, %v705, 0
          %v724 = vsel %vm719, %v706, 0
          %726 = vmatprep.subr.mxu0 0.0
          %727 = vmatpush1.msra.mxu0 %v701
          %728 = vmatprep.subr.mxu0 0.0
          %729 = vmatpush1.msra.mxu0 %v702
          %730 = vmatprep.subr.mxu0 0.0
          %731 = vmatpush1.msra.mxu0 %v703
          %732 = vmatprep.subr.mxu0 0.0
          %733 = vmatpush1.msra.mxu0 %v704
          %734 = vmatprep.subr.mxu0 0.0
          %735 = vmatpush1.msra.mxu0 0.0
          %736 = vmatprep.subr.mxu0 0.0
          %737 = vmatpush1.msra.mxu0 0.0
          %738 = vmatprep.subr.mxu0 0.0
          %739 = vmatpush1.msra.mxu0 0.0
          %740 = vmatprep.subr.mxu0 0.0
          %741 = vmatpush1.msra.mxu0 0.0
          %742 = vmatprep.subr.mxu0 0.0
          %743 = vmatpush1.msra.mxu0 0.0
          %744 = vmatprep.subr.mxu0 0.0
          %745 = vmatpush1.msra.mxu0 0.0
          %746 = vmatprep.subr.mxu0 0.0
          %747 = vmatpush1.msra.mxu0 0.0
          %748 = vmatprep.subr.mxu0 0.0
          %749 = vmatpush1.msra.mxu0 0.0
          %750 = vmatprep.subr.mxu0 0.0
          %751 = vmatpush1.msra.mxu0 0.0
          %752 = vmatprep.subr.mxu0 0.0
          %753 = vmatpush1.msra.mxu0 0.0
          %754 = vmatprep.subr.mxu0 0.0
          %755 = vmatpush1.msra.mxu0 0.0
          %756 = vmatprep.subr.mxu0 0.0
          %757 = vmatpush1.msra.mxu0 0.0
          %758 = vmatprep.subr.mxu0 0.0
          %759 = vmatpush1.msra.mxu0 0.0
          %760 = vmatprep.subr.mxu0 0.0
          %761 = vmatpush1.msra.mxu0 0.0
          %762 = vmatprep.subr.mxu0 0.0
          %763 = vmatpush1.msra.mxu0 0.0
          %764 = vmatprep.subr.mxu0 0.0
          %765 = vmatpush1.msra.mxu0 0.0
          %766 = vmatprep.subr.mxu0 0.0
          %767 = vmatpush1.msra.mxu0 0.0
          %768 = vmatprep.subr.mxu0 0.0
          %769 = vmatpush1.msra.mxu0 0.0
          %770 = vmatprep.subr.mxu0 0.0
          %771 = vmatpush1.msra.mxu0 0.0
          %772 = vmatprep.subr.mxu0 0.0
          %773 = vmatpush1.msra.mxu0 0.0
          %774 = vmatprep.subr.mxu0 0.0
          %775 = vmatpush1.msra.mxu0 0.0
          %776 = vmatprep.subr.mxu0 0.0
          %777 = vmatpush1.msra.mxu0 0.0
          %778 = vmatprep.subr.mxu0 0.0
          %779 = vmatpush1.msra.mxu0 0.0
          %780 = vmatprep.subr.mxu0 0.0
          %781 = vmatpush1.msra.mxu0 0.0
          %782 = vmatprep.subr.mxu0 0.0
          %783 = vmatpush1.msra.mxu0 0.0
          %784 = vmatprep.subr.mxu0 0.0
          %785 = vmatpush1.msra.mxu0 0.0
          %786 = vmatprep.subr.mxu0 0.0
          %787 = vmatpush1.msra.mxu0 0.0
          %788 = vmatprep.subr.mxu0 0.0
          %789 = vmatpush1.msra.mxu0 0.0
          %790 = vmatprep.mubr.f32.mxu0 0.0
          %791 = vmatmul.mubr.f32.gmra.mrb[0].mxu0 %v721
          %v792 = vpop.f32.mrb[0].mxu0
          %v793 = vadd.f32 %v712, %v792
          %v794 = vpop.f32.mrb[0].mxu0
          %795 = vmatprep.mubr.f32.mxu0 0.0
          %796 = vmatmul.mubr.f32.gmra.mrb[0].mxu0 %v724
          %v797 = vpop.f32.mrb[0].mxu0
          %v798 = vadd.f32 %v717, %v797
          %v799 = vpop.f32.mrb[0].mxu0
          %800 = vdwg.mxu0
          %v801 = vmax.f32 %v793, 0.0
          %v802 = vmax.f32 %v798, 0.0
          %v803 = vmul.f32 %v801, %v801
          %v804 = vmul.f32 %v802, %v802
          %v805 = vmul.f32 %v801, %v264
          %v806 = vmul.f32 %v802, %v264
          %v807 = vmul.f32 %v803, %v264
          %v808 = vmul.f32 %v804, %v264
          %809 = vadd.xlane.f32.xlu0 %v805
          %v810 = vpop.xlane.xlu0 %809
          %811 = vadd.xlane.f32.xlu0 %v806
          %v812 = vpop.xlane.xlu0 %811
          %813 = vadd.xlane.f32.xlu0 %v807
          %v814 = vpop.xlane.xlu0 %813
          %815 = vadd.xlane.f32.xlu0 %v808
          %v816 = vpop.xlane.xlu0 %815
          %p817 = scmp.eq.s32.totalorder %s21, 0
          // Predicated region
          $region83: #{refined_transaction_autoencoder.1} parent=81 // pred_check
            %p818 = pneg %p817
          $region84: #{refined_transaction_autoencoder.1} parent=81 // pred_check_branch
            %820 = sbr.rel (%p818) target = $region86
          $region85: #{refined_transaction_autoencoder.1} parent=81 // pred_region
            %vm821 = vcmask 7168
            %822 = vst.msk [vmem:[#allocation3] sm:$0xff] %vm821, 0.0
            %823 = vst.msk [vmem:[#allocation3 + $0x8] sm:$0xff] %vm821, 0.0
            %824 = vst.msk [vmem:[#allocation3 + $0x10] sm:$0xff] %vm821, 0.0
            %825 = vst.msk [vmem:[#allocation3 + $0x18] sm:$0xff] %vm821, 0.0
          $region86: #{refined_transaction_autoencoder.1} parent=81 // pred_fallthru
            _
          %v826 = vld [vmem:[#allocation3] sm:$0xff]
          %v827 = vld [vmem:[#allocation3 + $0x8] sm:$0xff]
          %v828 = vld [vmem:[#allocation3 + $0x10] sm:$0xff]
          %v829 = vld [vmem:[#allocation3 + $0x18] sm:$0xff]
          %v830 = vadd.f32 %v826, %v810
          %v831 = vadd.f32 %v827, %v812
          %v832 = vadd.f32 %v828, %v814
          %v833 = vadd.f32 %v829, %v816
          %vm834 = vcmask 7168
          %835 = vst.msk [vmem:[#allocation3] sm:$0xff] %vm834, %v830
          %836 = vst.msk [vmem:[#allocation3 + $0x8] sm:$0xff] %vm834, %v831
          %837 = vst.msk [vmem:[#allocation3 + $0x10] sm:$0xff] %vm834, %v832
          %838 = vst.msk [vmem:[#allocation3 + $0x18] sm:$0xff] %vm834, %v833
        $region82: #{refined_transaction_autoencoder.1} parent=61 // pred_fallthru
          _
        %p839 = scmp.eq.s32.totalorder %s20, 2
        // Predicated region
        $region87: #{refined_transaction_autoencoder.1} parent=61 // pred_check
          %p840 = pneg %p839
        $region88: #{refined_transaction_autoencoder.1} parent=61 // pred_check_branch
          %842 = sbr.rel (%p840) target = $region90
        $region89: #{refined_transaction_autoencoder.1} parent=61 // pred_region
          %v843 = vld [vmem:[#allocation7] sm:$0xff]
          %v844 = vld [vmem:[#allocation7 + $0x8] sm:$0xff]
          %v845 = vld [vmem:[#allocation7 + $0x10] sm:$0xff]
          %v846 = vld [vmem:[#allocation7 + $0x18] sm:$0xff]
          %v847 = vld [vmem:[#allocation7 + $0x20] sm:$0xff]
          %v848 = vld [vmem:[#allocation7 + $0x28] sm:$0xff]
          %v849 = vld [vmem:[#allocation7 + $0x30] sm:$0xff]
          %v850 = vld [vmem:[#allocation7 + $0x38] sm:$0xff]
          %852 = vset.pattern.permute.xlu0 0
          %853 = vperm.xlu0 %852, %v847
          %v854 = vpop.permute.xlu0 %853
          %857 = vset.pattern.permute.xlu0 0
          %858 = vperm.xlu0 %857, %v848
          %v859 = vpop.permute.xlu0 %858
          %862 = vset.pattern.permute.xlu0 0
          %863 = vperm.xlu0 %862, %v849
          %v864 = vpop.permute.xlu0 %863
          %867 = vset.pattern.permute.xlu0 0
          %868 = vperm.xlu0 %867, %v850
          %v869 = vpop.permute.xlu0 %868
          %vm871 = vcmask 130048
          %v873 = vsel %vm871, %v843, 0
          %v876 = vsel %vm871, %v844, 0
          %v879 = vsel %vm871, %v845, 0
          %v882 = vsel %vm871, %v846, 0
          %884 = vmatprep.subr.mxu0 0.0
          %885 = vmatpush1.msra.mxu0 %v265
          %886 = vmatprep.subr.mxu0 0.0
          %887 = vmatpush1.msra.mxu0 %v266
          %888 = vmatprep.subr.mxu0 0.0
          %889 = vmatpush1.msra.mxu0 0.0
          %890 = vmatprep.subr.mxu0 0.0
          %891 = vmatpush1.msra.mxu0 0.0
          %892 = vmatprep.subr.mxu0 0.0
          %893 = vmatpush1.msra.mxu0 0.0
          %894 = vmatprep.subr.mxu0 0.0
          %895 = vmatpush1.msra.mxu0 0.0
          %896 = vmatprep.subr.mxu0 0.0
          %897 = vmatpush1.msra.mxu0 0.0
          %898 = vmatprep.subr.mxu0 0.0
          %899 = vmatpush1.msra.mxu0 0.0
          %900 = vmatprep.subr.mxu0 0.0
          %901 = vmatpush1.msra.mxu0 0.0
          %902 = vmatprep.subr.mxu0 0.0
          %903 = vmatpush1.msra.mxu0 0.0
          %904 = vmatprep.subr.mxu0 0.0
          %905 = vmatpush1.msra.mxu0 0.0
          %906 = vmatprep.subr.mxu0 0.0
          %907 = vmatpush1.msra.mxu0 0.0
          %908 = vmatprep.subr.mxu0 0.0
          %909 = vmatpush1.msra.mxu0 0.0
          %910 = vmatprep.subr.mxu0 0.0
          %911 = vmatpush1.msra.mxu0 0.0
          %912 = vmatprep.subr.mxu0 0.0
          %913 = vmatpush1.msra.mxu0 0.0
          %914 = vmatprep.subr.mxu0 0.0
          %915 = vmatpush1.msra.mxu0 0.0
          %916 = vmatprep.subr.mxu0 0.0
          %917 = vmatpush1.msra.mxu0 0.0
          %918 = vmatprep.subr.mxu0 0.0
          %919 = vmatpush1.msra.mxu0 0.0
          %920 = vmatprep.subr.mxu0 0.0
          %921 = vmatpush1.msra.mxu0 0.0
          %922 = vmatprep.subr.mxu0 0.0
          %923 = vmatpush1.msra.mxu0 0.0
          %924 = vmatprep.subr.mxu0 0.0
          %925 = vmatpush1.msra.mxu0 0.0
          %926 = vmatprep.subr.mxu0 0.0
          %927 = vmatpush1.msra.mxu0 0.0
          %928 = vmatprep.subr.mxu0 0.0
          %929 = vmatpush1.msra.mxu0 0.0
          %930 = vmatprep.subr.mxu0 0.0
          %931 = vmatpush1.msra.mxu0 0.0
          %932 = vmatprep.subr.mxu0 0.0
          %933 = vmatpush1.msra.mxu0 0.0
          %934 = vmatprep.subr.mxu0 0.0
          %935 = vmatpush1.msra.mxu0 0.0
          %936 = vmatprep.subr.mxu0 0.0
          %937 = vmatpush1.msra.mxu0 0.0
          %938 = vmatprep.subr.mxu0 0.0
          %939 = vmatpush1.msra.mxu0 0.0
          %940 = vmatprep.subr.mxu0 0.0
          %941 = vmatpush1.msra.mxu0 0.0
          %942 = vmatprep.subr.mxu0 0.0
          %943 = vmatpush1.msra.mxu0 0.0
          %944 = vmatprep.subr.mxu0 0.0
          %945 = vmatpush1.msra.mxu0 0.0
          %946 = vmatprep.subr.mxu0 0.0
          %947 = vmatpush1.msra.mxu0 0.0
          %948 = vmatprep.mubr.f32.mxu0 0.0
          %949 = vmatmul.mubr.f32.gmra.mrb[0].mxu0 %v873
          %v950 = vpop.f32.mrb[0].mxu0
          %v951 = vadd.f32 %v854, %v950
          %v952 = vpop.f32.mrb[0].mxu0
          %953 = vmatprep.mubr.f32.mxu0 0.0
          %954 = vmatmul.mubr.f32.gmra.mrb[0].mxu0 %v876
          %v955 = vpop.f32.mrb[0].mxu0
          %v956 = vadd.f32 %v859, %v955
          %v957 = vpop.f32.mrb[0].mxu0
          %958 = vmatprep.mubr.f32.mxu0 0.0
          %959 = vmatmul.mubr.f32.gmra.mrb[0].mxu0 %v879
          %v960 = vpop.f32.mrb[0].mxu0
          %v961 = vadd.f32 %v864, %v960
          %v962 = vpop.f32.mrb[0].mxu0
          %963 = vmatprep.mubr.f32.mxu0 0.0
          %964 = vmatmul.mubr.f32.gmra.mrb[0].mxu0 %v882
          %v965 = vpop.f32.mrb[0].mxu0
          %v966 = vadd.f32 %v869, %v965
          %v967 = vpop.f32.mrb[0].mxu0
          %968 = vdwg.mxu0
          %v969 = vmax.f32 %v951, 0.0
          %v970 = vmax.f32 %v956, 0.0
          %v971 = vmax.f32 %v961, 0.0
          %v972 = vmax.f32 %v966, 0.0
          %v973 = vld [vmem:[#allocation2] sm:$0xff]
          %v974 = vld [vmem:[#allocation2 + $0x8] sm:$0xff]
          %v975 = vld [vmem:[#allocation2 + $0x10] sm:$0xff]
          %v976 = vld [vmem:[#allocation2 + $0x18] sm:$0xff]
          %v977 = vld [vmem:[#allocation2 + $0x20] sm:$0xff]
          %v978 = vld [vmem:[#allocation2 + $0x28] sm:$0xff]
          %v979 = vld [vmem:[#allocation2 + $0x30] sm:$0xff]
          %v980 = vld [vmem:[#allocation2 + $0x38] sm:$0xff]
          %v981 = vmul.f32 %v973, 0.005
          %v982 = vmul.f32 %v974, 0.005
          %v983 = vmul.f32 %v975, 0.005
          %v984 = vmul.f32 %v976, 0.005
          %v985 = vmul.f32 %v977, 0.005
          %v986 = vmul.f32 %v978, 0.005
          %v987 = vmul.f32 %v979, 0.005
          %v988 = vmul.f32 %v980, 0.005
          %v989 = vmul.f32 %v981, %v981
          %v990 = vmul.f32 %v982, %v982
          %v991 = vmul.f32 %v983, %v983
          %v992 = vmul.f32 %v984, %v984
          %v993 = vsub.f32 %v985, %v989
          %v994 = vsub.f32 %v986, %v990
          %v995 = vsub.f32 %v987, %v991
          %v996 = vsub.f32 %v988, %v992
          %v997 = vmax.f32 %v993, 0.0
          %v998 = vmax.f32 %v994, 0.0
          %v999 = vmax.f32 %v995, 0.0
          %v1000 = vmax.f32 %v996, 0.0
          %v1001 = vld [vmem:[#allocation7 + $0x40] sm:$0xff]
          %v1002 = vld [vmem:[#allocation7 + $0x48] sm:$0xff]
          %v1003 = vld [vmem:[#allocation7 + $0x50] sm:$0xff]
          %v1004 = vld [vmem:[#allocation7 + $0x58] sm:$0xff]
          %v1005 = vadd.f32 %v997, 1e-05
          %v1006 = vadd.f32 %v998, 1e-05
          %v1007 = vadd.f32 %v999, 1e-05
          %v1008 = vadd.f32 %v1000, 1e-05
          %v1009 = vrsqrt.pop %v1005
          %v1010 = vrsqrt.pop %v1006
          %v1011 = vrsqrt.pop %v1007
          %v1012 = vrsqrt.pop %v1008
          %v1013 = vmul.f32 %v1001, %v1009
          %v1014 = vmul.f32 %v1002, %v1010
          %v1015 = vmul.f32 %v1003, %v1011
          %v1016 = vmul.f32 %v1004, %v1012
          %v1017 = vld [vmem:[#allocation7 + $0x60] sm:$0xff]
          %v1018 = vld [vmem:[#allocation7 + $0x68] sm:$0xff]
          %v1019 = vld [vmem:[#allocation7 + $0x70] sm:$0xff]
          %v1020 = vld [vmem:[#allocation7 + $0x78] sm:$0xff]
          %v1021 = vmul.f32 %v981, %v1013
          %v1022 = vmul.f32 %v982, %v1014
          %v1023 = vmul.f32 %v983, %v1015
          %v1024 = vmul.f32 %v984, %v1016
          %v1025 = vsub.f32 %v1017, %v1021
          %v1026 = vsub.f32 %v1018, %v1022
          %v1027 = vsub.f32 %v1019, %v1023
          %v1028 = vsub.f32 %v1020, %v1024
          %1030 = vset.pattern.permute.xlu0 0
          %1031 = vperm.xlu0 %1030, %v1013
          %v1032 = vpop.permute.xlu0 %1031
          %1035 = vset.pattern.permute.xlu0 0
          %1036 = vperm.xlu0 %1035, %v1014
          %v1037 = vpop.permute.xlu0 %1036
          %1040 = vset.pattern.permute.xlu0 0
          %1041 = vperm.xlu0 %1040, %v1015
          %v1042 = vpop.permute.xlu0 %1041
          %1045 = vset.pattern.permute.xlu0 0
          %1046 = vperm.xlu0 %1045, %v1016
          %v1047 = vpop.permute.xlu0 %1046
          %v1049 = vmul.f32 %v969, %v1032
          %v1050 = vmul.f32 %v970, %v1037
          %v1051 = vmul.f32 %v971, %v1042
          %v1052 = vmul.f32 %v972, %v1047
          %1054 = vset.pattern.permute.xlu0 0
          %1055 = vperm.xlu0 %1054, %v1025
          %v1056 = vpop.permute.xlu0 %1055
          %1059 = vset.pattern.permute.xlu0 0
          %1060 = vperm.xlu0 %1059, %v1026
          %v1061 = vpop.permute.xlu0 %1060
          %1064 = vset.pattern.permute.xlu0 0
          %1065 = vperm.xlu0 %1064, %v1027
          %v1066 = vpop.permute.xlu0 %1065
          %1069 = vset.pattern.permute.xlu0 0
          %1070 = vperm.xlu0 %1069, %v1028
          %v1071 = vpop.permute.xlu0 %1070
          %v1073 = vadd.f32 %v1049, %v1056
          %v1074 = vadd.f32 %v1050, %v1061
          %v1075 = vadd.f32 %v1051, %v1066
          %v1076 = vadd.f32 %v1052, %v1071
          %v1077 = vld [vmem:[#allocation7 + $0x80] sm:$0xff]
          %v1078 = vld [vmem:[#allocation7 + $0x88] sm:$0xff]
          %v1079 = vld [vmem:[#allocation7 + $0x90] sm:$0xff]
          %v1080 = vld [vmem:[#allocation7 + $0x98] sm:$0xff]
          %1082 = vset.pattern.permute.xlu0 0
          %1083 = vperm.xlu0 %1082, %v1079
          %v1084 = vpop.permute.xlu0 %1083
          %1087 = vset.pattern.permute.xlu0 0
          %1088 = vperm.xlu0 %1087, %v1080
          %v1089 = vpop.permute.xlu0 %1088
          %vm1091 = vcmask 261120
          %v1093 = vsel %vm1091, %v1077, 0
          %v1096 = vsel %vm1091, %v1078, 0
          %1098 = vmatprep.subr.mxu0 0.0
          %1099 = vmatpush1.msra.mxu0 %v1073
          %1100 = vmatprep.subr.mxu0 0.0
          %1101 = vmatpush1.msra.mxu0 %v1074
          %1102 = vmatprep.subr.mxu0 0.0
          %1103 = vmatpush1.msra.mxu0 %v1075
          %1104 = vmatprep.subr.mxu0 0.0
          %1105 = vmatpush1.msra.mxu0 %v1076
          %1106 = vmatprep.subr.mxu0 0.0
          %1107 = vmatpush1.msra.mxu0 0.0
          %1108 = vmatprep.subr.mxu0 0.0
          %1109 = vmatpush1.msra.mxu0 0.0
          %1110 = vmatprep.subr.mxu0 0.0
          %1111 = vmatpush1.msra.mxu0 0.0
          %1112 = vmatprep.subr.mxu0 0.0
          %1113 = vmatpush1.msra.mxu0 0.0
          %1114 = vmatprep.subr.mxu0 0.0
          %1115 = vmatpush1.msra.mxu0 0.0
          %1116 = vmatprep.subr.mxu0 0.0
          %1117 = vmatpush1.msra.mxu0 0.0
          %1118 = vmatprep.subr.mxu0 0.0
          %1119 = vmatpush1.msra.mxu0 0.0
          %1120 = vmatprep.subr.mxu0 0.0
          %1121 = vmatpush1.msra.mxu0 0.0
          %1122 = vmatprep.subr.mxu0 0.0
          %1123 = vmatpush1.msra.mxu0 0.0
          %1124 = vmatprep.subr.mxu0 0.0
          %1125 = vmatpush1.msra.mxu0 0.0
          %1126 = vmatprep.subr.mxu0 0.0
          %1127 = vmatpush1.msra.mxu0 0.0
          %1128 = vmatprep.subr.mxu0 0.0
          %1129 = vmatpush1.msra.mxu0 0.0
          %1130 = vmatprep.subr.mxu0 0.0
          %1131 = vmatpush1.msra.mxu0 0.0
          %1132 = vmatprep.subr.mxu0 0.0
          %1133 = vmatpush1.msra.mxu0 0.0
          %1134 = vmatprep.subr.mxu0 0.0
          %1135 = vmatpush1.msra.mxu0 0.0
          %1136 = vmatprep.subr.mxu0 0.0
          %1137 = vmatpush1.msra.mxu0 0.0
          %1138 = vmatprep.subr.mxu0 0.0
          %1139 = vmatpush1.msra.mxu0 0.0
          %1140 = vmatprep.subr.mxu0 0.0
          %1141 = vmatpush1.msra.mxu0 0.0
          %1142 = vmatprep.subr.mxu0 0.0
          %1143 = vmatpush1.msra.mxu0 0.0
          %1144 = vmatprep.subr.mxu0 0.0
          %1145 = vmatpush1.msra.mxu0 0.0
          %1146 = vmatprep.subr.mxu0 0.0
          %1147 = vmatpush1.msra.mxu0 0.0
          %1148 = vmatprep.subr.mxu0 0.0
          %1149 = vmatpush1.msra.mxu0 0.0
          %1150 = vmatprep.subr.mxu0 0.0
          %1151 = vmatpush1.msra.mxu0 0.0
          %1152 = vmatprep.subr.mxu0 0.0
          %1153 = vmatpush1.msra.mxu0 0.0
          %1154 = vmatprep.subr.mxu0 0.0
          %1155 = vmatpush1.msra.mxu0 0.0
          %1156 = vmatprep.subr.mxu0 0.0
          %1157 = vmatpush1.msra.mxu0 0.0
          %1158 = vmatprep.subr.mxu0 0.0
          %1159 = vmatpush1.msra.mxu0 0.0
          %1160 = vmatprep.subr.mxu0 0.0
          %1161 = vmatpush1.msra.mxu0 0.0
          %1162 = vmatprep.mubr.f32.mxu0 0.0
          %1163 = vmatmul.mubr.f32.gmra.mrb[0].mxu0 %v1093
          %v1164 = vpop.f32.mrb[0].mxu0
          %v1165 = vadd.f32 %v1084, %v1164
          %v1166 = vpop.f32.mrb[0].mxu0
          %1167 = vmatprep.mubr.f32.mxu0 0.0
          %1168 = vmatmul.mubr.f32.gmra.mrb[0].mxu0 %v1096
          %v1169 = vpop.f32.mrb[0].mxu0
          %v1170 = vadd.f32 %v1089, %v1169
          %v1171 = vpop.f32.mrb[0].mxu0
          %1172 = vdwg.mxu0
          %v1173 = vmax.f32 %v1165, 0.0
          %v1174 = vmax.f32 %v1170, 0.0
          %v1175 = vld [vmem:[#allocation3] sm:$0xff]
          %v1176 = vld [vmem:[#allocation3 + $0x8] sm:$0xff]
          %v1177 = vld [vmem:[#allocation3 + $0x10] sm:$0xff]
          %v1178 = vld [vmem:[#allocation3 + $0x18] sm:$0xff]
          %v1179 = vmul.f32 %v1175, 0.005
          %v1180 = vmul.f32 %v1176, 0.005
          %v1181 = vmul.f32 %v1177, 0.005
          %v1182 = vmul.f32 %v1178, 0.005
          %v1183 = vmul.f32 %v1179, %v1179
          %v1184 = vmul.f32 %v1180, %v1180
          %v1185 = vsub.f32 %v1181, %v1183
          %v1186 = vsub.f32 %v1182, %v1184
          %v1187 = vmax.f32 %v1185, 0.0
          %v1188 = vmax.f32 %v1186, 0.0
          %v1189 = vld [vmem:[#allocation7 + $0xa0] sm:$0xff]
          %v1190 = vld [vmem:[#allocation7 + $0xa8] sm:$0xff]
          %v1191 = vadd.f32 %v1187, 1e-05
          %v1192 = vadd.f32 %v1188, 1e-05
          %v1193 = vrsqrt.pop %v1191
          %v1194 = vrsqrt.pop %v1192
          %v1195 = vmul.f32 %v1189, %v1193
          %v1196 = vmul.f32 %v1190, %v1194
          %v1197 = vld [vmem:[#allocation7 + $0xb0] sm:$0xff]
          %v1198 = vld [vmem:[#allocation7 + $0xb8] sm:$0xff]
          %v1199 = vmul.f32 %v1179, %v1195
          %v1200 = vmul.f32 %v1180, %v1196
          %v1201 = vsub.f32 %v1197, %v1199
          %v1202 = vsub.f32 %v1198, %v1200
          %1204 = vset.pattern.permute.xlu0 0
          %1205 = vperm.xlu0 %1204, %v1195
          %v1206 = vpop.permute.xlu0 %1205
          %1209 = vset.pattern.permute.xlu0 0
          %1210 = vperm.xlu0 %1209, %v1196
          %v1211 = vpop.permute.xlu0 %1210
          %v1213 = vmul.f32 %v1173, %v1206
          %v1214 = vmul.f32 %v1174, %v1211
          %1216 = vset.pattern.permute.xlu0 0
          %1217 = vperm.xlu0 %1216, %v1201
          %v1218 = vpop.permute.xlu0 %1217
          %1221 = vset.pattern.permute.xlu0 0
          %1222 = vperm.xlu0 %1221, %v1202
          %v1223 = vpop.permute.xlu0 %1222
          %v1225 = vadd.f32 %v1213, %v1218
          %v1226 = vadd.f32 %v1214, %v1223
          %v1227 = vld [vmem:[#allocation7 + $0xc0] sm:$0xff]
          %v1228 = vld [vmem:[#allocation7 + $0xc8] sm:$0xff]
          %1230 = vset.pattern.permute.xlu0 0
          %1231 = vperm.xlu0 %1230, %v1228
          %v1232 = vpop.permute.xlu0 %1231
          %v1235 = vsel %vm871, %v1227, 0
          %1237 = vmatprep.subr.mxu0 0.0
          %1238 = vmatpush1.msra.mxu0 %v1225
          %1239 = vmatprep.subr.mxu0 0.0
          %1240 = vmatpush1.msra.mxu0 %v1226
          %1241 = vmatprep.subr.mxu0 0.0
          %1242 = vmatpush1.msra.mxu0 0.0
          %1243 = vmatprep.subr.mxu0 0.0
          %1244 = vmatpush1.msra.mxu0 0.0
          %1245 = vmatprep.subr.mxu0 0.0
          %1246 = vmatpush1.msra.mxu0 0.0
          %1247 = vmatprep.subr.mxu0 0.0
          %1248 = vmatpush1.msra.mxu0 0.0
          %1249 = vmatprep.subr.mxu0 0.0
          %1250 = vmatpush1.msra.mxu0 0.0
          %1251 = vmatprep.subr.mxu0 0.0
          %1252 = vmatpush1.msra.mxu0 0.0
          %1253 = vmatprep.subr.mxu0 0.0
          %1254 = vmatpush1.msra.mxu0 0.0
          %1255 = vmatprep.subr.mxu0 0.0
          %1256 = vmatpush1.msra.mxu0 0.0
          %1257 = vmatprep.subr.mxu0 0.0
          %1258 = vmatpush1.msra.mxu0 0.0
          %1259 = vmatprep.subr.mxu0 0.0
          %1260 = vmatpush1.msra.mxu0 0.0
          %1261 = vmatprep.subr.mxu0 0.0
          %1262 = vmatpush1.msra.mxu0 0.0
          %1263 = vmatprep.subr.mxu0 0.0
          %1264 = vmatpush1.msra.mxu0 0.0
          %1265 = vmatprep.subr.mxu0 0.0
          %1266 = vmatpush1.msra.mxu0 0.0
          %1267 = vmatprep.subr.mxu0 0.0
          %1268 = vmatpush1.msra.mxu0 0.0
          %1269 = vmatprep.subr.mxu0 0.0
          %1270 = vmatpush1.msra.mxu0 0.0
          %1271 = vmatprep.subr.mxu0 0.0
          %1272 = vmatpush1.msra.mxu0 0.0
          %1273 = vmatprep.subr.mxu0 0.0
          %1274 = vmatpush1.msra.mxu0 0.0
          %1275 = vmatprep.subr.mxu0 0.0
          %1276 = vmatpush1.msra.mxu0 0.0
          %1277 = vmatprep.subr.mxu0 0.0
          %1278 = vmatpush1.msra.mxu0 0.0
          %1279 = vmatprep.subr.mxu0 0.0
          %1280 = vmatpush1.msra.mxu0 0.0
          %1281 = vmatprep.subr.mxu0 0.0
          %1282 = vmatpush1.msra.mxu0 0.0
          %1283 = vmatprep.subr.mxu0 0.0
          %1284 = vmatpush1.msra.mxu0 0.0
          %1285 = vmatprep.subr.mxu0 0.0
          %1286 = vmatpush1.msra.mxu0 0.0
          %1287 = vmatprep.subr.mxu0 0.0
          %1288 = vmatpush1.msra.mxu0 0.0
          %1289 = vmatprep.subr.mxu0 0.0
          %1290 = vmatpush1.msra.mxu0 0.0
          %1291 = vmatprep.subr.mxu0 0.0
          %1292 = vmatpush1.msra.mxu0 0.0
          %1293 = vmatprep.subr.mxu0 0.0
          %1294 = vmatpush1.msra.mxu0 0.0
          %1295 = vmatprep.subr.mxu0 0.0
          %1296 = vmatpush1.msra.mxu0 0.0
          %1297 = vmatprep.subr.mxu0 0.0
          %1298 = vmatpush1.msra.mxu0 0.0
          %1299 = vmatprep.subr.mxu0 0.0
          %1300 = vmatpush1.msra.mxu0 0.0
          %1301 = vmatprep.mubr.f32.mxu0 0.0
          %1302 = vmatmul.mubr.f32.gmra.mrb[0].mxu0 %v1235
          %v1303 = vpop.f32.mrb[0].mxu0
          %v1304 = vadd.f32 %v1232, %v1303
          %v1305 = vpop.f32.mrb[0].mxu0
          %1306 = vdwg.mxu0
          %v1307 = vmax.f32 %v1304, 0.0
          %v1308 = vld [vmem:[#allocation7 + $0xd0] sm:$0xff]
          %v1309 = vld [vmem:[#allocation7 + $0xd8] sm:$0xff]
          %v1310 = vld [vmem:[#allocation7 + $0xe0] sm:$0xff]
          %v1311 = vld [vmem:[#allocation7 + $0xe8] sm:$0xff]
          %1313 = vset.pattern.permute.xlu0 0
          %1314 = vperm.xlu0 %1313, %v1310
          %v1315 = vpop.permute.xlu0 %1314
          %1318 = vset.pattern.permute.xlu0 0
          %1319 = vperm.xlu0 %1318, %v1311
          %v1320 = vpop.permute.xlu0 %1319
          %vm1322 = vcmask 64512
          %v1324 = vsel %vm1322, %v1308, 0
          %v1327 = vsel %vm1322, %v1309, 0
          %1329 = vmatprep.subr.mxu0 0.0
          %1330 = vmatpush1.msra.mxu0 %v1307
          %1331 = vmatprep.subr.mxu0 0.0
          %1332 = vmatpush1.msra.mxu0 0.0
          %1333 = vmatprep.subr.mxu0 0.0
          %1334 = vmatpush1.msra.mxu0 0.0
          %1335 = vmatprep.subr.mxu0 0.0
          %1336 = vmatpush1.msra.mxu0 0.0
          %1337 = vmatprep.subr.mxu0 0.0
          %1338 = vmatpush1.msra.mxu0 0.0
          %1339 = vmatprep.subr.mxu0 0.0
          %1340 = vmatpush1.msra.mxu0 0.0
          %1341 = vmatprep.subr.mxu0 0.0
          %1342 = vmatpush1.msra.mxu0 0.0
          %1343 = vmatprep.subr.mxu0 0.0
          %1344 = vmatpush1.msra.mxu0 0.0
          %1345 = vmatprep.subr.mxu0 0.0
          %1346 = vmatpush1.msra.mxu0 0.0
          %1347 = vmatprep.subr.mxu0 0.0
          %1348 = vmatpush1.msra.mxu0 0.0
          %1349 = vmatprep.subr.mxu0 0.0
          %1350 = vmatpush1.msra.mxu0 0.0
          %1351 = vmatprep.subr.mxu0 0.0
          %1352 = vmatpush1.msra.mxu0 0.0
          %1353 = vmatprep.subr.mxu0 0.0
          %1354 = vmatpush1.msra.mxu0 0.0
          %1355 = vmatprep.subr.mxu0 0.0
          %1356 = vmatpush1.msra.mxu0 0.0
          %1357 = vmatprep.subr.mxu0 0.0
          %1358 = vmatpush1.msra.mxu0 0.0
          %1359 = vmatprep.subr.mxu0 0.0
          %1360 = vmatpush1.msra.mxu0 0.0
          %1361 = vmatprep.subr.mxu0 0.0
          %1362 = vmatpush1.msra.mxu0 0.0
          %1363 = vmatprep.subr.mxu0 0.0
          %1364 = vmatpush1.msra.mxu0 0.0
          %1365 = vmatprep.subr.mxu0 0.0
          %1366 = vmatpush1.msra.mxu0 0.0
          %1367 = vmatprep.subr.mxu0 0.0
          %1368 = vmatpush1.msra.mxu0 0.0
          %1369 = vmatprep.subr.mxu0 0.0
          %1370 = vmatpush1.msra.mxu0 0.0
          %1371 = vmatprep.subr.mxu0 0.0
          %1372 = vmatpush1.msra.mxu0 0.0
          %1373 = vmatprep.subr.mxu0 0.0
          %1374 = vmatpush1.msra.mxu0 0.0
          %1375 = vmatprep.subr.mxu0 0.0
          %1376 = vmatpush1.msra.mxu0 0.0
          %1377 = vmatprep.subr.mxu0 0.0
          %1378 = vmatpush1.msra.mxu0 0.0
          %1379 = vmatprep.subr.mxu0 0.0
          %1380 = vmatpush1.msra.mxu0 0.0
          %1381 = vmatprep.subr.mxu0 0.0
          %1382 = vmatpush1.msra.mxu0 0.0
          %1383 = vmatprep.subr.mxu0 0.0
          %1384 = vmatpush1.msra.mxu0 0.0
          %1385 = vmatprep.subr.mxu0 0.0
          %1386 = vmatpush1.msra.mxu0 0.0
          %1387 = vmatprep.subr.mxu0 0.0
          %1388 = vmatpush1.msra.mxu0 0.0
          %1389 = vmatprep.subr.mxu0 0.0
          %1390 = vmatpush1.msra.mxu0 0.0
          %1391 = vmatprep.subr.mxu0 0.0
          %1392 = vmatpush1.msra.mxu0 0.0
          %1393 = vmatprep.mubr.f32.mxu0 0.0
          %1394 = vmatmul.mubr.f32.gmra.mrb[0].mxu0 %v1324
          %v1395 = vpop.f32.mrb[0].mxu0
          %v1396 = vadd.f32 %v1315, %v1395
          %v1397 = vpop.f32.mrb[0].mxu0
          %1398 = vmatprep.mubr.f32.mxu0 0.0
          %1399 = vmatmul.mubr.f32.gmra.mrb[0].mxu0 %v1327
          %v1400 = vpop.f32.mrb[0].mxu0
          %v1401 = vadd.f32 %v1320, %v1400
          %v1402 = vpop.f32.mrb[0].mxu0
          %1403 = vdwg.mxu0
          %v1404 = vmax.f32 %v1396, 0.0
          %v1405 = vmax.f32 %v1401, 0.0
          %v1406 = vmul.f32 %v1404, %v1404
          %v1407 = vmul.f32 %v1405, %v1405
          %v1408 = vmul.f32 %v1404, %v264
          %v1409 = vmul.f32 %v1405, %v264
          %v1410 = vmul.f32 %v1406, %v264
          %v1411 = vmul.f32 %v1407, %v264
          %1412 = vadd.xlane.f32.xlu0 %v1408
          %v1413 = vpop.xlane.xlu0 %1412
          %1414 = vadd.xlane.f32.xlu0 %v1409
          %v1415 = vpop.xlane.xlu0 %1414
          %1416 = vadd.xlane.f32.xlu0 %v1410
          %v1417 = vpop.xlane.xlu0 %1416
          %1418 = vadd.xlane.f32.xlu0 %v1411
          %v1419 = vpop.xlane.xlu0 %1418
          %p1420 = scmp.eq.s32.totalorder %s21, 0
          // Predicated region
          $region91: #{refined_transaction_autoencoder.1} parent=89 // pred_check
            %p1421 = pneg %p1420
          $region92: #{refined_transaction_autoencoder.1} parent=89 // pred_check_branch
            %1423 = sbr.rel (%p1421) target = $region94
          $region93: #{refined_transaction_autoencoder.1} parent=89 // pred_region
            %vm1424 = vcmask 7168
            %1425 = vst.msk [vmem:[#allocation4] sm:$0xff] %vm1424, 0.0
            %1426 = vst.msk [vmem:[#allocation4 + $0x8] sm:$0xff] %vm1424, 0.0
            %1427 = vst.msk [vmem:[#allocation4 + $0x10] sm:$0xff] %vm1424, 0.0
            %1428 = vst.msk [vmem:[#allocation4 + $0x18] sm:$0xff] %vm1424, 0.0
          $region94: #{refined_transaction_autoencoder.1} parent=89 // pred_fallthru
            _
          %v1429 = vld [vmem:[#allocation4] sm:$0xff]
          %v1430 = vld [vmem:[#allocation4 + $0x8] sm:$0xff]
          %v1431 = vld [vmem:[#allocation4 + $0x10] sm:$0xff]
          %v1432 = vld [vmem:[#allocation4 + $0x18] sm:$0xff]
          %v1433 = vadd.f32 %v1429, %v1413
          %v1434 = vadd.f32 %v1430, %v1415
          %v1435 = vadd.f32 %v1431, %v1417
          %v1436 = vadd.f32 %v1432, %v1419
          %vm1437 = vcmask 7168
          %1438 = vst.msk [vmem:[#allocation4] sm:$0xff] %vm1437, %v1433
          %1439 = vst.msk [vmem:[#allocation4 + $0x8] sm:$0xff] %vm1437, %v1434
          %1440 = vst.msk [vmem:[#allocation4 + $0x10] sm:$0xff] %vm1437, %v1435
          %1441 = vst.msk [vmem:[#allocation4 + $0x18] sm:$0xff] %vm1437, %v1436
        $region90: #{refined_transaction_autoencoder.1} parent=61 // pred_fallthru
          _
        %p1442 = scmp.eq.s32.totalorder %s20, 3
        // Predicated region
        $region95: #{refined_transaction_autoencoder.1} parent=61 // pred_check
          %p1443 = pneg %p1442
        $region96: #{refined_transaction_autoencoder.1} parent=61 // pred_check_branch
          %1445 = sbr.rel (%p1443) target = $region98
        $region97: #{refined_transaction_autoencoder.1} parent=61 // pred_region
          %v1446 = vld [vmem:[#allocation7] sm:$0xff]
          %v1447 = vld [vmem:[#allocation7 + $0x8] sm:$0xff]
          %v1448 = vld [vmem:[#allocation7 + $0x10] sm:$0xff]
          %v1449 = vld [vmem:[#allocation7 + $0x18] sm:$0xff]
          %v1450 = vld [vmem:[#allocation7 + $0x20] sm:$0xff]
          %v1451 = vld [vmem:[#allocation7 + $0x28] sm:$0xff]
          %v1452 = vld [vmem:[#allocation7 + $0x30] sm:$0xff]
          %v1453 = vld [vmem:[#allocation7 + $0x38] sm:$0xff]
          %1455 = vset.pattern.permute.xlu0 0
          %1456 = vperm.xlu0 %1455, %v1450
          %v1457 = vpop.permute.xlu0 %1456
          %1460 = vset.pattern.permute.xlu0 0
          %1461 = vperm.xlu0 %1460, %v1451
          %v1462 = vpop.permute.xlu0 %1461
          %1465 = vset.pattern.permute.xlu0 0
          %1466 = vperm.xlu0 %1465, %v1452
          %v1467 = vpop.permute.xlu0 %1466
          %1470 = vset.pattern.permute.xlu0 0
          %1471 = vperm.xlu0 %1470, %v1453
          %v1472 = vpop.permute.xlu0 %1471
          %vm1474 = vcmask 130048
          %v1476 = vsel %vm1474, %v1446, 0
          %v1479 = vsel %vm1474, %v1447, 0
          %v1482 = vsel %vm1474, %v1448, 0
          %v1485 = vsel %vm1474, %v1449, 0
          %1487 = vmatprep.subr.mxu0 0.0
          %1488 = vmatpush1.msra.mxu0 %v265
          %1489 = vmatprep.subr.mxu0 0.0
          %1490 = vmatpush1.msra.mxu0 %v266
          %1491 = vmatprep.subr.mxu0 0.0
          %1492 = vmatpush1.msra.mxu0 0.0
          %1493 = vmatprep.subr.mxu0 0.0
          %1494 = vmatpush1.msra.mxu0 0.0
          %1495 = vmatprep.subr.mxu0 0.0
          %1496 = vmatpush1.msra.mxu0 0.0
          %1497 = vmatprep.subr.mxu0 0.0
          %1498 = vmatpush1.msra.mxu0 0.0
          %1499 = vmatprep.subr.mxu0 0.0
          %1500 = vmatpush1.msra.mxu0 0.0
          %1501 = vmatprep.subr.mxu0 0.0
          %1502 = vmatpush1.msra.mxu0 0.0
          %1503 = vmatprep.subr.mxu0 0.0
          %1504 = vmatpush1.msra.mxu0 0.0
          %1505 = vmatprep.subr.mxu0 0.0
          %1506 = vmatpush1.msra.mxu0 0.0
          %1507 = vmatprep.subr.mxu0 0.0
          %1508 = vmatpush1.msra.mxu0 0.0
          %1509 = vmatprep.subr.mxu0 0.0
          %1510 = vmatpush1.msra.mxu0 0.0
          %1511 = vmatprep.subr.mxu0 0.0
          %1512 = vmatpush1.msra.mxu0 0.0
          %1513 = vmatprep.subr.mxu0 0.0
          %1514 = vmatpush1.msra.mxu0 0.0
          %1515 = vmatprep.subr.mxu0 0.0
          %1516 = vmatpush1.msra.mxu0 0.0
          %1517 = vmatprep.subr.mxu0 0.0
          %1518 = vmatpush1.msra.mxu0 0.0
          %1519 = vmatprep.subr.mxu0 0.0
          %1520 = vmatpush1.msra.mxu0 0.0
          %1521 = vmatprep.subr.mxu0 0.0
          %1522 = vmatpush1.msra.mxu0 0.0
          %1523 = vmatprep.subr.mxu0 0.0
          %1524 = vmatpush1.msra.mxu0 0.0
          %1525 = vmatprep.subr.mxu0 0.0
          %1526 = vmatpush1.msra.mxu0 0.0
          %1527 = vmatprep.subr.mxu0 0.0
          %1528 = vmatpush1.msra.mxu0 0.0
          %1529 = vmatprep.subr.mxu0 0.0
          %1530 = vmatpush1.msra.mxu0 0.0
          %1531 = vmatprep.subr.mxu0 0.0
          %1532 = vmatpush1.msra.mxu0 0.0
          %1533 = vmatprep.subr.mxu0 0.0
          %1534 = vmatpush1.msra.mxu0 0.0
          %1535 = vmatprep.subr.mxu0 0.0
          %1536 = vmatpush1.msra.mxu0 0.0
          %1537 = vmatprep.subr.mxu0 0.0
          %1538 = vmatpush1.msra.mxu0 0.0
          %1539 = vmatprep.subr.mxu0 0.0
          %1540 = vmatpush1.msra.mxu0 0.0
          %1541 = vmatprep.subr.mxu0 0.0
          %1542 = vmatpush1.msra.mxu0 0.0
          %1543 = vmatprep.subr.mxu0 0.0
          %1544 = vmatpush1.msra.mxu0 0.0
          %1545 = vmatprep.subr.mxu0 0.0
          %1546 = vmatpush1.msra.mxu0 0.0
          %1547 = vmatprep.subr.mxu0 0.0
          %1548 = vmatpush1.msra.mxu0 0.0
          %1549 = vmatprep.subr.mxu0 0.0
          %1550 = vmatpush1.msra.mxu0 0.0
          %1551 = vmatprep.mubr.f32.mxu0 0.0
          %1552 = vmatmul.mubr.f32.gmra.mrb[0].mxu0 %v1476
          %v1553 = vpop.f32.mrb[0].mxu0
          %v1554 = vadd.f32 %v1457, %v1553
          %v1555 = vpop.f32.mrb[0].mxu0
          %1556 = vmatprep.mubr.f32.mxu0 0.0
          %1557 = vmatmul.mubr.f32.gmra.mrb[0].mxu0 %v1479
          %v1558 = vpop.f32.mrb[0].mxu0
          %v1559 = vadd.f32 %v1462, %v1558
          %v1560 = vpop.f32.mrb[0].mxu0
          %1561 = vmatprep.mubr.f32.mxu0 0.0
          %1562 = vmatmul.mubr.f32.gmra.mrb[0].mxu0 %v1482
          %v1563 = vpop.f32.mrb[0].mxu0
          %v1564 = vadd.f32 %v1467, %v1563
          %v1565 = vpop.f32.mrb[0].mxu0
          %1566 = vmatprep.mubr.f32.mxu0 0.0
          %1567 = vmatmul.mubr.f32.gmra.mrb[0].mxu0 %v1485
          %v1568 = vpop.f32.mrb[0].mxu0
          %v1569 = vadd.f32 %v1472, %v1568
          %v1570 = vpop.f32.mrb[0].mxu0
          %1571 = vdwg.mxu0
          %v1572 = vmax.f32 %v1554, 0.0
          %v1573 = vmax.f32 %v1559, 0.0
          %v1574 = vmax.f32 %v1564, 0.0
          %v1575 = vmax.f32 %v1569, 0.0
          %v1576 = vld [vmem:[#allocation2] sm:$0xff]
          %v1577 = vld [vmem:[#allocation2 + $0x8] sm:$0xff]
          %v1578 = vld [vmem:[#allocation2 + $0x10] sm:$0xff]
          %v1579 = vld [vmem:[#allocation2 + $0x18] sm:$0xff]
          %v1580 = vld [vmem:[#allocation2 + $0x20] sm:$0xff]
          %v1581 = vld [vmem:[#allocation2 + $0x28] sm:$0xff]
          %v1582 = vld [vmem:[#allocation2 + $0x30] sm:$0xff]
          %v1583 = vld [vmem:[#allocation2 + $0x38] sm:$0xff]
          %v1584 = vmul.f32 %v1576, 0.005
          %v1585 = vmul.f32 %v1577, 0.005
          %v1586 = vmul.f32 %v1578, 0.005
          %v1587 = vmul.f32 %v1579, 0.005
          %v1588 = vmul.f32 %v1580, 0.005
          %v1589 = vmul.f32 %v1581, 0.005
          %v1590 = vmul.f32 %v1582, 0.005
          %v1591 = vmul.f32 %v1583, 0.005
          %v1592 = vmul.f32 %v1584, %v1584
          %v1593 = vmul.f32 %v1585, %v1585
          %v1594 = vmul.f32 %v1586, %v1586
          %v1595 = vmul.f32 %v1587, %v1587
          %v1596 = vsub.f32 %v1588, %v1592
          %v1597 = vsub.f32 %v1589, %v1593
          %v1598 = vsub.f32 %v1590, %v1594
          %v1599 = vsub.f32 %v1591, %v1595
          %v1600 = vmax.f32 %v1596, 0.0
          %v1601 = vmax.f32 %v1597, 0.0
          %v1602 = vmax.f32 %v1598, 0.0
          %v1603 = vmax.f32 %v1599, 0.0
          %v1604 = vld [vmem:[#allocation7 + $0x40] sm:$0xff]
          %v1605 = vld [vmem:[#allocation7 + $0x48] sm:$0xff]
          %v1606 = vld [vmem:[#allocation7 + $0x50] sm:$0xff]
          %v1607 = vld [vmem:[#allocation7 + $0x58] sm:$0xff]
          %v1608 = vadd.f32 %v1600, 1e-05
          %v1609 = vadd.f32 %v1601, 1e-05
          %v1610 = vadd.f32 %v1602, 1e-05
          %v1611 = vadd.f32 %v1603, 1e-05
          %v1612 = vrsqrt.pop %v1608
          %v1613 = vrsqrt.pop %v1609
          %v1614 = vrsqrt.pop %v1610
          %v1615 = vrsqrt.pop %v1611
          %v1616 = vmul.f32 %v1604, %v1612
          %v1617 = vmul.f32 %v1605, %v1613
          %v1618 = vmul.f32 %v1606, %v1614
          %v1619 = vmul.f32 %v1607, %v1615
          %v1620 = vld [vmem:[#allocation7 + $0x60] sm:$0xff]
          %v1621 = vld [vmem:[#allocation7 + $0x68] sm:$0xff]
          %v1622 = vld [vmem:[#allocation7 + $0x70] sm:$0xff]
          %v1623 = vld [vmem:[#allocation7 + $0x78] sm:$0xff]
          %v1624 = vmul.f32 %v1584, %v1616
          %v1625 = vmul.f32 %v1585, %v1617
          %v1626 = vmul.f32 %v1586, %v1618
          %v1627 = vmul.f32 %v1587, %v1619
          %v1628 = vsub.f32 %v1620, %v1624
          %v1629 = vsub.f32 %v1621, %v1625
          %v1630 = vsub.f32 %v1622, %v1626
          %v1631 = vsub.f32 %v1623, %v1627
          %1633 = vset.pattern.permute.xlu0 0
          %1634 = vperm.xlu0 %1633, %v1616
          %v1635 = vpop.permute.xlu0 %1634
          %1638 = vset.pattern.permute.xlu0 0
          %1639 = vperm.xlu0 %1638, %v1617
          %v1640 = vpop.permute.xlu0 %1639
          %1643 = vset.pattern.permute.xlu0 0
          %1644 = vperm.xlu0 %1643, %v1618
          %v1645 = vpop.permute.xlu0 %1644
          %1648 = vset.pattern.permute.xlu0 0
          %1649 = vperm.xlu0 %1648, %v1619
          %v1650 = vpop.permute.xlu0 %1649
          %v1652 = vmul.f32 %v1572, %v1635
          %v1653 = vmul.f32 %v1573, %v1640
          %v1654 = vmul.f32 %v1574, %v1645
          %v1655 = vmul.f32 %v1575, %v1650
          %1657 = vset.pattern.permute.xlu0 0
          %1658 = vperm.xlu0 %1657, %v1628
          %v1659 = vpop.permute.xlu0 %1658
          %1662 = vset.pattern.permute.xlu0 0
          %1663 = vperm.xlu0 %1662, %v1629
          %v1664 = vpop.permute.xlu0 %1663
          %1667 = vset.pattern.permute.xlu0 0
          %1668 = vperm.xlu0 %1667, %v1630
          %v1669 = vpop.permute.xlu0 %1668
          %1672 = vset.pattern.permute.xlu0 0
          %1673 = vperm.xlu0 %1672, %v1631
          %v1674 = vpop.permute.xlu0 %1673
          %v1676 = vadd.f32 %v1652, %v1659
          %v1677 = vadd.f32 %v1653, %v1664
          %v1678 = vadd.f32 %v1654, %v1669
          %v1679 = vadd.f32 %v1655, %v1674
          %v1680 = vld [vmem:[#allocation7 + $0x80] sm:$0xff]
          %v1681 = vld [vmem:[#allocation7 + $0x88] sm:$0xff]
          %v1682 = vld [vmem:[#allocation7 + $0x90] sm:$0xff]
          %v1683 = vld [vmem:[#allocation7 + $0x98] sm:$0xff]
          %1685 = vset.pattern.permute.xlu0 0
          %1686 = vperm.xlu0 %1685, %v1682
          %v1687 = vpop.permute.xlu0 %1686
          %1690 = vset.pattern.permute.xlu0 0
          %1691 = vperm.xlu0 %1690, %v1683
          %v1692 = vpop.permute.xlu0 %1691
          %vm1694 = vcmask 261120
          %v1696 = vsel %vm1694, %v1680, 0
          %v1699 = vsel %vm1694, %v1681, 0
          %1701 = vmatprep.subr.mxu0 0.0
          %1702 = vmatpush1.msra.mxu0 %v1676
          %1703 = vmatprep.subr.mxu0 0.0
          %1704 = vmatpush1.msra.mxu0 %v1677
          %1705 = vmatprep.subr.mxu0 0.0
          %1706 = vmatpush1.msra.mxu0 %v1678
          %1707 = vmatprep.subr.mxu0 0.0
          %1708 = vmatpush1.msra.mxu0 %v1679
          %1709 = vmatprep.subr.mxu0 0.0
          %1710 = vmatpush1.msra.mxu0 0.0
          %1711 = vmatprep.subr.mxu0 0.0
          %1712 = vmatpush1.msra.mxu0 0.0
          %1713 = vmatprep.subr.mxu0 0.0
          %1714 = vmatpush1.msra.mxu0 0.0
          %1715 = vmatprep.subr.mxu0 0.0
          %1716 = vmatpush1.msra.mxu0 0.0
          %1717 = vmatprep.subr.mxu0 0.0
          %1718 = vmatpush1.msra.mxu0 0.0
          %1719 = vmatprep.subr.mxu0 0.0
          %1720 = vmatpush1.msra.mxu0 0.0
          %1721 = vmatprep.subr.mxu0 0.0
          %1722 = vmatpush1.msra.mxu0 0.0
          %1723 = vmatprep.subr.mxu0 0.0
          %1724 = vmatpush1.msra.mxu0 0.0
          %1725 = vmatprep.subr.mxu0 0.0
          %1726 = vmatpush1.msra.mxu0 0.0
          %1727 = vmatprep.subr.mxu0 0.0
          %1728 = vmatpush1.msra.mxu0 0.0
          %1729 = vmatprep.subr.mxu0 0.0
          %1730 = vmatpush1.msra.mxu0 0.0
          %1731 = vmatprep.subr.mxu0 0.0
          %1732 = vmatpush1.msra.mxu0 0.0
          %1733 = vmatprep.subr.mxu0 0.0
          %1734 = vmatpush1.msra.mxu0 0.0
          %1735 = vmatprep.subr.mxu0 0.0
          %1736 = vmatpush1.msra.mxu0 0.0
          %1737 = vmatprep.subr.mxu0 0.0
          %1738 = vmatpush1.msra.mxu0 0.0
          %1739 = vmatprep.subr.mxu0 0.0
          %1740 = vmatpush1.msra.mxu0 0.0
          %1741 = vmatprep.subr.mxu0 0.0
          %1742 = vmatpush1.msra.mxu0 0.0
          %1743 = vmatprep.subr.mxu0 0.0
          %1744 = vmatpush1.msra.mxu0 0.0
          %1745 = vmatprep.subr.mxu0 0.0
          %1746 = vmatpush1.msra.mxu0 0.0
          %1747 = vmatprep.subr.mxu0 0.0
          %1748 = vmatpush1.msra.mxu0 0.0
          %1749 = vmatprep.subr.mxu0 0.0
          %1750 = vmatpush1.msra.mxu0 0.0
          %1751 = vmatprep.subr.mxu0 0.0
          %1752 = vmatpush1.msra.mxu0 0.0
          %1753 = vmatprep.subr.mxu0 0.0
          %1754 = vmatpush1.msra.mxu0 0.0
          %1755 = vmatprep.subr.mxu0 0.0
          %1756 = vmatpush1.msra.mxu0 0.0
          %1757 = vmatprep.subr.mxu0 0.0
          %1758 = vmatpush1.msra.mxu0 0.0
          %1759 = vmatprep.subr.mxu0 0.0
          %1760 = vmatpush1.msra.mxu0 0.0
          %1761 = vmatprep.subr.mxu0 0.0
          %1762 = vmatpush1.msra.mxu0 0.0
          %1763 = vmatprep.subr.mxu0 0.0
          %1764 = vmatpush1.msra.mxu0 0.0
          %1765 = vmatprep.mubr.f32.mxu0 0.0
          %1766 = vmatmul.mubr.f32.gmra.mrb[0].mxu0 %v1696
          %v1767 = vpop.f32.mrb[0].mxu0
          %v1768 = vadd.f32 %v1687, %v1767
          %v1769 = vpop.f32.mrb[0].mxu0
          %1770 = vmatprep.mubr.f32.mxu0 0.0
          %1771 = vmatmul.mubr.f32.gmra.mrb[0].mxu0 %v1699
          %v1772 = vpop.f32.mrb[0].mxu0
          %v1773 = vadd.f32 %v1692, %v1772
          %v1774 = vpop.f32.mrb[0].mxu0
          %1775 = vdwg.mxu0
          %v1776 = vmax.f32 %v1768, 0.0
          %v1777 = vmax.f32 %v1773, 0.0
          %v1778 = vld [vmem:[#allocation3] sm:$0xff]
          %v1779 = vld [vmem:[#allocation3 + $0x8] sm:$0xff]
          %v1780 = vld [vmem:[#allocation3 + $0x10] sm:$0xff]
          %v1781 = vld [vmem:[#allocation3 + $0x18] sm:$0xff]
          %v1782 = vmul.f32 %v1778, 0.005
          %v1783 = vmul.f32 %v1779, 0.005
          %v1784 = vmul.f32 %v1780, 0.005
          %v1785 = vmul.f32 %v1781, 0.005
          %v1786 = vmul.f32 %v1782, %v1782
          %v1787 = vmul.f32 %v1783, %v1783
          %v1788 = vsub.f32 %v1784, %v1786
          %v1789 = vsub.f32 %v1785, %v1787
          %v1790 = vmax.f32 %v1788, 0.0
          %v1791 = vmax.f32 %v1789, 0.0
          %v1792 = vld [vmem:[#allocation7 + $0xa0] sm:$0xff]
          %v1793 = vld [vmem:[#allocation7 + $0xa8] sm:$0xff]
          %v1794 = vadd.f32 %v1790, 1e-05
          %v1795 = vadd.f32 %v1791, 1e-05
          %v1796 = vrsqrt.pop %v1794
          %v1797 = vrsqrt.pop %v1795
          %v1798 = vmul.f32 %v1792, %v1796
          %v1799 = vmul.f32 %v1793, %v1797
          %v1800 = vld [vmem:[#allocation7 + $0xb0] sm:$0xff]
          %v1801 = vld [vmem:[#allocation7 + $0xb8] sm:$0xff]
          %v1802 = vmul.f32 %v1782, %v1798
          %v1803 = vmul.f32 %v1783, %v1799
          %v1804 = vsub.f32 %v1800, %v1802
          %v1805 = vsub.f32 %v1801, %v1803
          %1807 = vset.pattern.permute.xlu0 0
          %1808 = vperm.xlu0 %1807, %v1798
          %v1809 = vpop.permute.xlu0 %1808
          %1812 = vset.pattern.permute.xlu0 0
          %1813 = vperm.xlu0 %1812, %v1799
          %v1814 = vpop.permute.xlu0 %1813
          %v1816 = vmul.f32 %v1776, %v1809
          %v1817 = vmul.f32 %v1777, %v1814
          %1819 = vset.pattern.permute.xlu0 0
          %1820 = vperm.xlu0 %1819, %v1804
          %v1821 = vpop.permute.xlu0 %1820
          %1824 = vset.pattern.permute.xlu0 0
          %1825 = vperm.xlu0 %1824, %v1805
          %v1826 = vpop.permute.xlu0 %1825
          %v1828 = vadd.f32 %v1816, %v1821
          %v1829 = vadd.f32 %v1817, %v1826
          %v1830 = vld [vmem:[#allocation7 + $0xc0] sm:$0xff]
          %v1831 = vld [vmem:[#allocation7 + $0xc8] sm:$0xff]
          %1833 = vset.pattern.permute.xlu0 0
          %1834 = vperm.xlu0 %1833, %v1831
          %v1835 = vpop.permute.xlu0 %1834
          %v1838 = vsel %vm1474, %v1830, 0
          %1840 = vmatprep.subr.mxu0 0.0
          %1841 = vmatpush1.msra.mxu0 %v1828
          %1842 = vmatprep.subr.mxu0 0.0
          %1843 = vmatpush1.msra.mxu0 %v1829
          %1844 = vmatprep.subr.mxu0 0.0
          %1845 = vmatpush1.msra.mxu0 0.0
          %1846 = vmatprep.subr.mxu0 0.0
          %1847 = vmatpush1.msra.mxu0 0.0
          %1848 = vmatprep.subr.mxu0 0.0
          %1849 = vmatpush1.msra.mxu0 0.0
          %1850 = vmatprep.subr.mxu0 0.0
          %1851 = vmatpush1.msra.mxu0 0.0
          %1852 = vmatprep.subr.mxu0 0.0
          %1853 = vmatpush1.msra.mxu0 0.0
          %1854 = vmatprep.subr.mxu0 0.0
          %1855 = vmatpush1.msra.mxu0 0.0
          %1856 = vmatprep.subr.mxu0 0.0
          %1857 = vmatpush1.msra.mxu0 0.0
          %1858 = vmatprep.subr.mxu0 0.0
          %1859 = vmatpush1.msra.mxu0 0.0
          %1860 = vmatprep.subr.mxu0 0.0
          %1861 = vmatpush1.msra.mxu0 0.0
          %1862 = vmatprep.subr.mxu0 0.0
          %1863 = vmatpush1.msra.mxu0 0.0
          %1864 = vmatprep.subr.mxu0 0.0
          %1865 = vmatpush1.msra.mxu0 0.0
          %1866 = vmatprep.subr.mxu0 0.0
          %1867 = vmatpush1.msra.mxu0 0.0
          %1868 = vmatprep.subr.mxu0 0.0
          %1869 = vmatpush1.msra.mxu0 0.0
          %1870 = vmatprep.subr.mxu0 0.0
          %1871 = vmatpush1.msra.mxu0 0.0
          %1872 = vmatprep.subr.mxu0 0.0
          %1873 = vmatpush1.msra.mxu0 0.0
          %1874 = vmatprep.subr.mxu0 0.0
          %1875 = vmatpush1.msra.mxu0 0.0
          %1876 = vmatprep.subr.mxu0 0.0
          %1877 = vmatpush1.msra.mxu0 0.0
          %1878 = vmatprep.subr.mxu0 0.0
          %1879 = vmatpush1.msra.mxu0 0.0
          %1880 = vmatprep.subr.mxu0 0.0
          %1881 = vmatpush1.msra.mxu0 0.0
          %1882 = vmatprep.subr.mxu0 0.0
          %1883 = vmatpush1.msra.mxu0 0.0
          %1884 = vmatprep.subr.mxu0 0.0
          %1885 = vmatpush1.msra.mxu0 0.0
          %1886 = vmatprep.subr.mxu0 0.0
          %1887 = vmatpush1.msra.mxu0 0.0
          %1888 = vmatprep.subr.mxu0 0.0
          %1889 = vmatpush1.msra.mxu0 0.0
          %1890 = vmatprep.subr.mxu0 0.0
          %1891 = vmatpush1.msra.mxu0 0.0
          %1892 = vmatprep.subr.mxu0 0.0
          %1893 = vmatpush1.msra.mxu0 0.0
          %1894 = vmatprep.subr.mxu0 0.0
          %1895 = vmatpush1.msra.mxu0 0.0
          %1896 = vmatprep.subr.mxu0 0.0
          %1897 = vmatpush1.msra.mxu0 0.0
          %1898 = vmatprep.subr.mxu0 0.0
          %1899 = vmatpush1.msra.mxu0 0.0
          %1900 = vmatprep.subr.mxu0 0.0
          %1901 = vmatpush1.msra.mxu0 0.0
          %1902 = vmatprep.subr.mxu0 0.0
          %1903 = vmatpush1.msra.mxu0 0.0
          %1904 = vmatprep.mubr.f32.mxu0 0.0
          %1905 = vmatmul.mubr.f32.gmra.mrb[0].mxu0 %v1838
          %v1906 = vpop.f32.mrb[0].mxu0
          %v1907 = vadd.f32 %v1835, %v1906
          %v1908 = vpop.f32.mrb[0].mxu0
          %1909 = vdwg.mxu0
          %v1910 = vmax.f32 %v1907, 0.0
          %v1911 = vld [vmem:[#allocation7 + $0xd0] sm:$0xff]
          %v1912 = vld [vmem:[#allocation7 + $0xd8] sm:$0xff]
          %v1913 = vld [vmem:[#allocation7 + $0xe0] sm:$0xff]
          %v1914 = vld [vmem:[#allocation7 + $0xe8] sm:$0xff]
          %1916 = vset.pattern.permute.xlu0 0
          %1917 = vperm.xlu0 %1916, %v1913
          %v1918 = vpop.permute.xlu0 %1917
          %1921 = vset.pattern.permute.xlu0 0
          %1922 = vperm.xlu0 %1921, %v1914
          %v1923 = vpop.permute.xlu0 %1922
          %vm1925 = vcmask 64512
          %v1927 = vsel %vm1925, %v1911, 0
          %v1930 = vsel %vm1925, %v1912, 0
          %1932 = vmatprep.subr.mxu0 0.0
          %1933 = vmatpush1.msra.mxu0 %v1910
          %1934 = vmatprep.subr.mxu0 0.0
          %1935 = vmatpush1.msra.mxu0 0.0
          %1936 = vmatprep.subr.mxu0 0.0
          %1937 = vmatpush1.msra.mxu0 0.0
          %1938 = vmatprep.subr.mxu0 0.0
          %1939 = vmatpush1.msra.mxu0 0.0
          %1940 = vmatprep.subr.mxu0 0.0
          %1941 = vmatpush1.msra.mxu0 0.0
          %1942 = vmatprep.subr.mxu0 0.0
          %1943 = vmatpush1.msra.mxu0 0.0
          %1944 = vmatprep.subr.mxu0 0.0
          %1945 = vmatpush1.msra.mxu0 0.0
          %1946 = vmatprep.subr.mxu0 0.0
          %1947 = vmatpush1.msra.mxu0 0.0
          %1948 = vmatprep.subr.mxu0 0.0
          %1949 = vmatpush1.msra.mxu0 0.0
          %1950 = vmatprep.subr.mxu0 0.0
          %1951 = vmatpush1.msra.mxu0 0.0
          %1952 = vmatprep.subr.mxu0 0.0
          %1953 = vmatpush1.msra.mxu0 0.0
          %1954 = vmatprep.subr.mxu0 0.0
          %1955 = vmatpush1.msra.mxu0 0.0
          %1956 = vmatprep.subr.mxu0 0.0
          %1957 = vmatpush1.msra.mxu0 0.0
          %1958 = vmatprep.subr.mxu0 0.0
          %1959 = vmatpush1.msra.mxu0 0.0
          %1960 = vmatprep.subr.mxu0 0.0
          %1961 = vmatpush1.msra.mxu0 0.0
          %1962 = vmatprep.subr.mxu0 0.0
          %1963 = vmatpush1.msra.mxu0 0.0
          %1964 = vmatprep.subr.mxu0 0.0
          %1965 = vmatpush1.msra.mxu0 0.0
          %1966 = vmatprep.subr.mxu0 0.0
          %1967 = vmatpush1.msra.mxu0 0.0
          %1968 = vmatprep.subr.mxu0 0.0
          %1969 = vmatpush1.msra.mxu0 0.0
          %1970 = vmatprep.subr.mxu0 0.0
          %1971 = vmatpush1.msra.mxu0 0.0
          %1972 = vmatprep.subr.mxu0 0.0
          %1973 = vmatpush1.msra.mxu0 0.0
          %1974 = vmatprep.subr.mxu0 0.0
          %1975 = vmatpush1.msra.mxu0 0.0
          %1976 = vmatprep.subr.mxu0 0.0
          %1977 = vmatpush1.msra.mxu0 0.0
          %1978 = vmatprep.subr.mxu0 0.0
          %1979 = vmatpush1.msra.mxu0 0.0
          %1980 = vmatprep.subr.mxu0 0.0
          %1981 = vmatpush1.msra.mxu0 0.0
          %1982 = vmatprep.subr.mxu0 0.0
          %1983 = vmatpush1.msra.mxu0 0.0
          %1984 = vmatprep.subr.mxu0 0.0
          %1985 = vmatpush1.msra.mxu0 0.0
          %1986 = vmatprep.subr.mxu0 0.0
          %1987 = vmatpush1.msra.mxu0 0.0
          %1988 = vmatprep.subr.mxu0 0.0
          %1989 = vmatpush1.msra.mxu0 0.0
          %1990 = vmatprep.subr.mxu0 0.0
          %1991 = vmatpush1.msra.mxu0 0.0
          %1992 = vmatprep.subr.mxu0 0.0
          %1993 = vmatpush1.msra.mxu0 0.0
          %1994 = vmatprep.subr.mxu0 0.0
          %1995 = vmatpush1.msra.mxu0 0.0
          %1996 = vmatprep.mubr.f32.mxu0 0.0
          %1997 = vmatmul.mubr.f32.gmra.mrb[0].mxu0 %v1927
          %v1998 = vpop.f32.mrb[0].mxu0
          %v1999 = vadd.f32 %v1918, %v1998
          %v2000 = vpop.f32.mrb[0].mxu0
          %2001 = vmatprep.mubr.f32.mxu0 0.0
          %2002 = vmatmul.mubr.f32.gmra.mrb[0].mxu0 %v1930
          %v2003 = vpop.f32.mrb[0].mxu0
          %v2004 = vadd.f32 %v1923, %v2003
          %v2005 = vpop.f32.mrb[0].mxu0
          %2006 = vdwg.mxu0
          %v2007 = vmax.f32 %v1999, 0.0
          %v2008 = vmax.f32 %v2004, 0.0
          %v2009 = vld [vmem:[#allocation4] sm:$0xff]
          %v2010 = vld [vmem:[#allocation4 + $0x8] sm:$0xff]
          %v2011 = vld [vmem:[#allocation4 + $0x10] sm:$0xff]
          %v2012 = vld [vmem:[#allocation4 + $0x18] sm:$0xff]
          %v2013 = vmul.f32 %v2009, 0.005
          %v2014 = vmul.f32 %v2010, 0.005
          %v2015 = vmul.f32 %v2011, 0.005
          %v2016 = vmul.f32 %v2012, 0.005
          %v2017 = vmul.f32 %v2013, %v2013
          %v2018 = vmul.f32 %v2014, %v2014
          %v2019 = vsub.f32 %v2015, %v2017
          %v2020 = vsub.f32 %v2016, %v2018
          %v2021 = vmax.f32 %v2019, 0.0
          %v2022 = vmax.f32 %v2020, 0.0
          %v2023 = vld [vmem:[#allocation7 + $0xf0] sm:$0xff]
          %v2024 = vld [vmem:[#allocation7 + $0xf8] sm:$0xff]
          %v2025 = vadd.f32 %v2021, 1e-05
          %v2026 = vadd.f32 %v2022, 1e-05
          %v2027 = vrsqrt.pop %v2025
          %v2028 = vrsqrt.pop %v2026
          %v2029 = vmul.f32 %v2023, %v2027
          %v2030 = vmul.f32 %v2024, %v2028
          %v2031 = vld [vmem:[#allocation7 + $0x100] sm:$0xff]
          %v2032 = vld [vmem:[#allocation7 + $0x108] sm:$0xff]
          %v2033 = vmul.f32 %v2013, %v2029
          %v2034 = vmul.f32 %v2014, %v2030
          %v2035 = vsub.f32 %v2031, %v2033
          %v2036 = vsub.f32 %v2032, %v2034
          %2038 = vset.pattern.permute.xlu0 0
          %2039 = vperm.xlu0 %2038, %v2029
          %v2040 = vpop.permute.xlu0 %2039
          %2043 = vset.pattern.permute.xlu0 0
          %2044 = vperm.xlu0 %2043, %v2030
          %v2045 = vpop.permute.xlu0 %2044
          %v2047 = vmul.f32 %v2007, %v2040
          %v2048 = vmul.f32 %v2008, %v2045
          %2050 = vset.pattern.permute.xlu0 0
          %2051 = vperm.xlu0 %2050, %v2035
          %v2052 = vpop.permute.xlu0 %2051
          %2055 = vset.pattern.permute.xlu0 0
          %2056 = vperm.xlu0 %2055, %v2036
          %v2057 = vpop.permute.xlu0 %2056
          %v2059 = vadd.f32 %v2047, %v2052
          %v2060 = vadd.f32 %v2048, %v2057
          %v2061 = vld [vmem:[#allocation7 + $0x110] sm:$0xff]
          %v2062 = vld [vmem:[#allocation7 + $0x118] sm:$0xff]
          %v2063 = vld [vmem:[#allocation7 + $0x120] sm:$0xff]
          %v2064 = vld [vmem:[#allocation7 + $0x128] sm:$0xff]
          %v2065 = vld [vmem:[#allocation7 + $0x130] sm:$0xff]
          %v2066 = vld [vmem:[#allocation7 + $0x138] sm:$0xff]
          %v2067 = vld [vmem:[#allocation7 + $0x140] sm:$0xff]
          %v2068 = vld [vmem:[#allocation7 + $0x148] sm:$0xff]
          %2070 = vset.pattern.permute.xlu0 0
          %2071 = vperm.xlu0 %2070, %v2065
          %v2072 = vpop.permute.xlu0 %2071
          %2075 = vset.pattern.permute.xlu0 0
          %2076 = vperm.xlu0 %2075, %v2066
          %v2077 = vpop.permute.xlu0 %2076
          %2080 = vset.pattern.permute.xlu0 0
          %2081 = vperm.xlu0 %2080, %v2067
          %v2082 = vpop.permute.xlu0 %2081
          %2085 = vset.pattern.permute.xlu0 0
          %2086 = vperm.xlu0 %2085, %v2068
          %v2087 = vpop.permute.xlu0 %2086
          %v2090 = vsel %vm1474, %v2061, 0
          %v2093 = vsel %vm1474, %v2062, 0
          %v2096 = vsel %vm1474, %v2063, 0
          %v2099 = vsel %vm1474, %v2064, 0
          %2101 = vmatprep.subr.mxu0 0.0
          %2102 = vmatpush1.msra.mxu0 %v2059
          %2103 = vmatprep.subr.mxu0 0.0
          %2104 = vmatpush1.msra.mxu0 %v2060
          %2105 = vmatprep.subr.mxu0 0.0
          %2106 = vmatpush1.msra.mxu0 0.0
          %2107 = vmatprep.subr.mxu0 0.0
          %2108 = vmatpush1.msra.mxu0 0.0
          %2109 = vmatprep.subr.mxu0 0.0
          %2110 = vmatpush1.msra.mxu0 0.0
          %2111 = vmatprep.subr.mxu0 0.0
          %2112 = vmatpush1.msra.mxu0 0.0
          %2113 = vmatprep.subr.mxu0 0.0
          %2114 = vmatpush1.msra.mxu0 0.0
          %2115 = vmatprep.subr.mxu0 0.0
          %2116 = vmatpush1.msra.mxu0 0.0
          %2117 = vmatprep.subr.mxu0 0.0
          %2118 = vmatpush1.msra.mxu0 0.0
          %2119 = vmatprep.subr.mxu0 0.0
          %2120 = vmatpush1.msra.mxu0 0.0
          %2121 = vmatprep.subr.mxu0 0.0
          %2122 = vmatpush1.msra.mxu0 0.0
          %2123 = vmatprep.subr.mxu0 0.0
          %2124 = vmatpush1.msra.mxu0 0.0
          %2125 = vmatprep.subr.mxu0 0.0
          %2126 = vmatpush1.msra.mxu0 0.0
          %2127 = vmatprep.subr.mxu0 0.0
          %2128 = vmatpush1.msra.mxu0 0.0
          %2129 = vmatprep.subr.mxu0 0.0
          %2130 = vmatpush1.msra.mxu0 0.0
          %2131 = vmatprep.subr.mxu0 0.0
          %2132 = vmatpush1.msra.mxu0 0.0
          %2133 = vmatprep.subr.mxu0 0.0
          %2134 = vmatpush1.msra.mxu0 0.0
          %2135 = vmatprep.subr.mxu0 0.0
          %2136 = vmatpush1.msra.mxu0 0.0
          %2137 = vmatprep.subr.mxu0 0.0
          %2138 = vmatpush1.msra.mxu0 0.0
          %2139 = vmatprep.subr.mxu0 0.0
          %2140 = vmatpush1.msra.mxu0 0.0
          %2141 = vmatprep.subr.mxu0 0.0
          %2142 = vmatpush1.msra.mxu0 0.0
          %2143 = vmatprep.subr.mxu0 0.0
          %2144 = vmatpush1.msra.mxu0 0.0
          %2145 = vmatprep.subr.mxu0 0.0
          %2146 = vmatpush1.msra.mxu0 0.0
          %2147 = vmatprep.subr.mxu0 0.0
          %2148 = vmatpush1.msra.mxu0 0.0
          %2149 = vmatprep.subr.mxu0 0.0
          %2150 = vmatpush1.msra.mxu0 0.0
          %2151 = vmatprep.subr.mxu0 0.0
          %2152 = vmatpush1.msra.mxu0 0.0
          %2153 = vmatprep.subr.mxu0 0.0
          %2154 = vmatpush1.msra.mxu0 0.0
          %2155 = vmatprep.subr.mxu0 0.0
          %2156 = vmatpush1.msra.mxu0 0.0
          %2157 = vmatprep.subr.mxu0 0.0
          %2158 = vmatpush1.msra.mxu0 0.0
          %2159 = vmatprep.subr.mxu0 0.0
          %2160 = vmatpush1.msra.mxu0 0.0
          %2161 = vmatprep.subr.mxu0 0.0
          %2162 = vmatpush1.msra.mxu0 0.0
          %2163 = vmatprep.subr.mxu0 0.0
          %2164 = vmatpush1.msra.mxu0 0.0
          %2165 = vmatprep.mubr.f32.mxu0 0.0
          %2166 = vmatmul.mubr.f32.gmra.mrb[0].mxu0 %v2090
          %v2167 = vpop.f32.mrb[0].mxu0
          %v2168 = vadd.f32 %v2072, %v2167
          %v2169 = vpop.f32.mrb[0].mxu0
          %2170 = vmatprep.mubr.f32.mxu0 0.0
          %2171 = vmatmul.mubr.f32.gmra.mrb[0].mxu0 %v2093
          %v2172 = vpop.f32.mrb[0].mxu0
          %v2173 = vadd.f32 %v2077, %v2172
          %v2174 = vpop.f32.mrb[0].mxu0
          %2175 = vmatprep.mubr.f32.mxu0 0.0
          %2176 = vmatmul.mubr.f32.gmra.mrb[0].mxu0 %v2096
          %v2177 = vpop.f32.mrb[0].mxu0
          %v2178 = vadd.f32 %v2082, %v2177
          %v2179 = vpop.f32.mrb[0].mxu0
          %2180 = vmatprep.mubr.f32.mxu0 0.0
          %2181 = vmatmul.mubr.f32.gmra.mrb[0].mxu0 %v2099
          %v2182 = vpop.f32.mrb[0].mxu0
          %v2183 = vadd.f32 %v2087, %v2182
          %v2184 = vpop.f32.mrb[0].mxu0
          %2185 = vdwg.mxu0
          %v2186 = vmax.f32 %v2168, 0.0
          %v2187 = vmax.f32 %v2173, 0.0
          %v2188 = vmax.f32 %v2178, 0.0
          %v2189 = vmax.f32 %v2183, 0.0
          %v2190 = vmul.f32 %v2186, %v2186
          %v2191 = vmul.f32 %v2187, %v2187
          %v2192 = vmul.f32 %v2188, %v2188
          %v2193 = vmul.f32 %v2189, %v2189
          %v2194 = vmul.f32 %v2186, %v264
          %v2195 = vmul.f32 %v2187, %v264
          %v2196 = vmul.f32 %v2188, %v264
          %v2197 = vmul.f32 %v2189, %v264
          %v2198 = vmul.f32 %v2190, %v264
          %v2199 = vmul.f32 %v2191, %v264
          %v2200 = vmul.f32 %v2192, %v264
          %v2201 = vmul.f32 %v2193, %v264
          %2202 = vadd.xlane.f32.xlu0 %v2194
          %v2203 = vpop.xlane.xlu0 %2202
          %2204 = vadd.xlane.f32.xlu0 %v2195
          %v2205 = vpop.xlane.xlu0 %2204
          %2206 = vadd.xlane.f32.xlu0 %v2196
          %v2207 = vpop.xlane.xlu0 %2206
          %2208 = vadd.xlane.f32.xlu0 %v2197
          %v2209 = vpop.xlane.xlu0 %2208
          %2210 = vadd.xlane.f32.xlu0 %v2198
          %v2211 = vpop.xlane.xlu0 %2210
          %2212 = vadd.xlane.f32.xlu0 %v2199
          %v2213 = vpop.xlane.xlu0 %2212
          %2214 = vadd.xlane.f32.xlu0 %v2200
          %v2215 = vpop.xlane.xlu0 %2214
          %2216 = vadd.xlane.f32.xlu0 %v2201
          %v2217 = vpop.xlane.xlu0 %2216
          %p2218 = scmp.eq.s32.totalorder %s21, 0
          // Predicated region
          $region99: #{refined_transaction_autoencoder.1} parent=97 // pred_check
            %p2219 = pneg %p2218
          $region100: #{refined_transaction_autoencoder.1} parent=97 // pred_check_branch
            %2221 = sbr.rel (%p2219) target = $region102
          $region101: #{refined_transaction_autoencoder.1} parent=97 // pred_region
            %vm2222 = vcmask 7168
            %2223 = vst.msk [vmem:[#allocation5] sm:$0xff] %vm2222, 0.0
            %2224 = vst.msk [vmem:[#allocation5 + $0x8] sm:$0xff] %vm2222, 0.0
            %2225 = vst.msk [vmem:[#allocation5 + $0x10] sm:$0xff] %vm2222, 0.0
            %2226 = vst.msk [vmem:[#allocation5 + $0x18] sm:$0xff] %vm2222, 0.0
            %2227 = vst.msk [vmem:[#allocation5 + $0x20] sm:$0xff] %vm2222, 0.0
            %2228 = vst.msk [vmem:[#allocation5 + $0x28] sm:$0xff] %vm2222, 0.0
            %2229 = vst.msk [vmem:[#allocation5 + $0x30] sm:$0xff] %vm2222, 0.0
            %2230 = vst.msk [vmem:[#allocation5 + $0x38] sm:$0xff] %vm2222, 0.0
          $region102: #{refined_transaction_autoencoder.1} parent=97 // pred_fallthru
            _
          %v2231 = vld [vmem:[#allocation5] sm:$0xff]
          %v2232 = vld [vmem:[#allocation5 + $0x8] sm:$0xff]
          %v2233 = vld [vmem:[#allocation5 + $0x10] sm:$0xff]
          %v2234 = vld [vmem:[#allocation5 + $0x18] sm:$0xff]
          %v2235 = vld [vmem:[#allocation5 + $0x20] sm:$0xff]
          %v2236 = vld [vmem:[#allocation5 + $0x28] sm:$0xff]
          %v2237 = vld [vmem:[#allocation5 + $0x30] sm:$0xff]
          %v2238 = vld [vmem:[#allocation5 + $0x38] sm:$0xff]
          %v2239 = vadd.f32 %v2231, %v2203
          %v2240 = vadd.f32 %v2232, %v2205
          %v2241 = vadd.f32 %v2233, %v2207
          %v2242 = vadd.f32 %v2234, %v2209
          %v2243 = vadd.f32 %v2235, %v2211
          %v2244 = vadd.f32 %v2236, %v2213
          %v2245 = vadd.f32 %v2237, %v2215
          %v2246 = vadd.f32 %v2238, %v2217
          %vm2247 = vcmask 7168
          %2248 = vst.msk [vmem:[#allocation5] sm:$0xff] %vm2247, %v2239
          %2249 = vst.msk [vmem:[#allocation5 + $0x8] sm:$0xff] %vm2247, %v2240
          %2250 = vst.msk [vmem:[#allocation5 + $0x10] sm:$0xff] %vm2247, %v2241
          %2251 = vst.msk [vmem:[#allocation5 + $0x18] sm:$0xff] %vm2247, %v2242
          %2252 = vst.msk [vmem:[#allocation5 + $0x20] sm:$0xff] %vm2247, %v2243
          %2253 = vst.msk [vmem:[#allocation5 + $0x28] sm:$0xff] %vm2247, %v2244
          %2254 = vst.msk [vmem:[#allocation5 + $0x30] sm:$0xff] %vm2247, %v2245
          %2255 = vst.msk [vmem:[#allocation5 + $0x38] sm:$0xff] %vm2247, %v2246
        $region98: #{refined_transaction_autoencoder.1} parent=61 // pred_fallthru
          _
        %p2256 = scmp.eq.s32.totalorder %s20, 4
        // Predicated region
        $region103: #{refined_transaction_autoencoder.1} parent=61 // pred_check
          %p2257 = pneg %p2256
        $region104: #{refined_transaction_autoencoder.1} parent=61 // pred_check_branch
          %2259 = sbr.rel (%p2257) target = $region106
        $region105: #{refined_transaction_autoencoder.1} parent=61 // pred_region
          %v2260 = vld [vmem:[#allocation7] sm:$0xff]
          %v2261 = vld [vmem:[#allocation7 + $0x8] sm:$0xff]
          %v2262 = vld [vmem:[#allocation7 + $0x10] sm:$0xff]
          %v2263 = vld [vmem:[#allocation7 + $0x18] sm:$0xff]
          %v2264 = vld [vmem:[#allocation7 + $0x20] sm:$0xff]
          %v2265 = vld [vmem:[#allocation7 + $0x28] sm:$0xff]
          %v2266 = vld [vmem:[#allocation7 + $0x30] sm:$0xff]
          %v2267 = vld [vmem:[#allocation7 + $0x38] sm:$0xff]
          %2269 = vset.pattern.permute.xlu0 0
          %2270 = vperm.xlu0 %2269, %v2264
          %v2271 = vpop.permute.xlu0 %2270
          %2274 = vset.pattern.permute.xlu0 0
          %2275 = vperm.xlu0 %2274, %v2265
          %v2276 = vpop.permute.xlu0 %2275
          %2279 = vset.pattern.permute.xlu0 0
          %2280 = vperm.xlu0 %2279, %v2266
          %v2281 = vpop.permute.xlu0 %2280
          %2284 = vset.pattern.permute.xlu0 0
          %2285 = vperm.xlu0 %2284, %v2267
          %v2286 = vpop.permute.xlu0 %2285
          %vm2288 = vcmask 130048
          %v2290 = vsel %vm2288, %v2260, 0
          %v2293 = vsel %vm2288, %v2261, 0
          %v2296 = vsel %vm2288, %v2262, 0
          %v2299 = vsel %vm2288, %v2263, 0
          %2301 = vmatprep.subr.mxu0 0.0
          %2302 = vmatpush1.msra.mxu0 %v265
          %2303 = vmatprep.subr.mxu0 0.0
          %2304 = vmatpush1.msra.mxu0 %v266
          %2305 = vmatprep.subr.mxu0 0.0
          %2306 = vmatpush1.msra.mxu0 0.0
          %2307 = vmatprep.subr.mxu0 0.0
          %2308 = vmatpush1.msra.mxu0 0.0
          %2309 = vmatprep.subr.mxu0 0.0
          %2310 = vmatpush1.msra.mxu0 0.0
          %2311 = vmatprep.subr.mxu0 0.0
          %2312 = vmatpush1.msra.mxu0 0.0
          %2313 = vmatprep.subr.mxu0 0.0
          %2314 = vmatpush1.msra.mxu0 0.0
          %2315 = vmatprep.subr.mxu0 0.0
          %2316 = vmatpush1.msra.mxu0 0.0
          %2317 = vmatprep.subr.mxu0 0.0
          %2318 = vmatpush1.msra.mxu0 0.0
          %2319 = vmatprep.subr.mxu0 0.0
          %2320 = vmatpush1.msra.mxu0 0.0
          %2321 = vmatprep.subr.mxu0 0.0
          %2322 = vmatpush1.msra.mxu0 0.0
          %2323 = vmatprep.subr.mxu0 0.0
          %2324 = vmatpush1.msra.mxu0 0.0
          %2325 = vmatprep.subr.mxu0 0.0
          %2326 = vmatpush1.msra.mxu0 0.0
          %2327 = vmatprep.subr.mxu0 0.0
          %2328 = vmatpush1.msra.mxu0 0.0
          %2329 = vmatprep.subr.mxu0 0.0
          %2330 = vmatpush1.msra.mxu0 0.0
          %2331 = vmatprep.subr.mxu0 0.0
          %2332 = vmatpush1.msra.mxu0 0.0
          %2333 = vmatprep.subr.mxu0 0.0
          %2334 = vmatpush1.msra.mxu0 0.0
          %2335 = vmatprep.subr.mxu0 0.0
          %2336 = vmatpush1.msra.mxu0 0.0
          %2337 = vmatprep.subr.mxu0 0.0
          %2338 = vmatpush1.msra.mxu0 0.0
          %2339 = vmatprep.subr.mxu0 0.0
          %2340 = vmatpush1.msra.mxu0 0.0
          %2341 = vmatprep.subr.mxu0 0.0
          %2342 = vmatpush1.msra.mxu0 0.0
          %2343 = vmatprep.subr.mxu0 0.0
          %2344 = vmatpush1.msra.mxu0 0.0
          %2345 = vmatprep.subr.mxu0 0.0
          %2346 = vmatpush1.msra.mxu0 0.0
          %2347 = vmatprep.subr.mxu0 0.0
          %2348 = vmatpush1.msra.mxu0 0.0
          %2349 = vmatprep.subr.mxu0 0.0
          %2350 = vmatpush1.msra.mxu0 0.0
          %2351 = vmatprep.subr.mxu0 0.0
          %2352 = vmatpush1.msra.mxu0 0.0
          %2353 = vmatprep.subr.mxu0 0.0
          %2354 = vmatpush1.msra.mxu0 0.0
          %2355 = vmatprep.subr.mxu0 0.0
          %2356 = vmatpush1.msra.mxu0 0.0
          %2357 = vmatprep.subr.mxu0 0.0
          %2358 = vmatpush1.msra.mxu0 0.0
          %2359 = vmatprep.subr.mxu0 0.0
          %2360 = vmatpush1.msra.mxu0 0.0
          %2361 = vmatprep.subr.mxu0 0.0
          %2362 = vmatpush1.msra.mxu0 0.0
          %2363 = vmatprep.subr.mxu0 0.0
          %2364 = vmatpush1.msra.mxu0 0.0
          %2365 = vmatprep.mubr.f32.mxu0 0.0
          %2366 = vmatmul.mubr.f32.gmra.mrb[0].mxu0 %v2290
          %v2367 = vpop.f32.mrb[0].mxu0
          %v2368 = vadd.f32 %v2271, %v2367
          %v2369 = vpop.f32.mrb[0].mxu0
          %2370 = vmatprep.mubr.f32.mxu0 0.0
          %2371 = vmatmul.mubr.f32.gmra.mrb[0].mxu0 %v2293
          %v2372 = vpop.f32.mrb[0].mxu0
          %v2373 = vadd.f32 %v2276, %v2372
          %v2374 = vpop.f32.mrb[0].mxu0
          %2375 = vmatprep.mubr.f32.mxu0 0.0
          %2376 = vmatmul.mubr.f32.gmra.mrb[0].mxu0 %v2296
          %v2377 = vpop.f32.mrb[0].mxu0
          %v2378 = vadd.f32 %v2281, %v2377
          %v2379 = vpop.f32.mrb[0].mxu0
          %2380 = vmatprep.mubr.f32.mxu0 0.0
          %2381 = vmatmul.mubr.f32.gmra.mrb[0].mxu0 %v2299
          %v2382 = vpop.f32.mrb[0].mxu0
          %v2383 = vadd.f32 %v2286, %v2382
          %v2384 = vpop.f32.mrb[0].mxu0
          %2385 = vdwg.mxu0
          %v2386 = vmax.f32 %v2368, 0.0
          %v2387 = vmax.f32 %v2373, 0.0
          %v2388 = vmax.f32 %v2378, 0.0
          %v2389 = vmax.f32 %v2383, 0.0
          %v2390 = vld [vmem:[#allocation2] sm:$0xff]
          %v2391 = vld [vmem:[#allocation2 + $0x8] sm:$0xff]
          %v2392 = vld [vmem:[#allocation2 + $0x10] sm:$0xff]
          %v2393 = vld [vmem:[#allocation2 + $0x18] sm:$0xff]
          %v2394 = vld [vmem:[#allocation2 + $0x20] sm:$0xff]
          %v2395 = vld [vmem:[#allocation2 + $0x28] sm:$0xff]
          %v2396 = vld [vmem:[#allocation2 + $0x30] sm:$0xff]
          %v2397 = vld [vmem:[#allocation2 + $0x38] sm:$0xff]
          %v2398 = vmul.f32 %v2390, 0.005
          %v2399 = vmul.f32 %v2391, 0.005
          %v2400 = vmul.f32 %v2392, 0.005
          %v2401 = vmul.f32 %v2393, 0.005
          %v2402 = vmul.f32 %v2394, 0.005
          %v2403 = vmul.f32 %v2395, 0.005
          %v2404 = vmul.f32 %v2396, 0.005
          %v2405 = vmul.f32 %v2397, 0.005
          %v2406 = vmul.f32 %v2398, %v2398
          %v2407 = vmul.f32 %v2399, %v2399
          %v2408 = vmul.f32 %v2400, %v2400
          %v2409 = vmul.f32 %v2401, %v2401
          %v2410 = vsub.f32 %v2402, %v2406
          %v2411 = vsub.f32 %v2403, %v2407
          %v2412 = vsub.f32 %v2404, %v2408
          %v2413 = vsub.f32 %v2405, %v2409
          %v2414 = vmax.f32 %v2410, 0.0
          %v2415 = vmax.f32 %v2411, 0.0
          %v2416 = vmax.f32 %v2412, 0.0
          %v2417 = vmax.f32 %v2413, 0.0
          %v2418 = vld [vmem:[#allocation7 + $0x40] sm:$0xff]
          %v2419 = vld [vmem:[#allocation7 + $0x48] sm:$0xff]
          %v2420 = vld [vmem:[#allocation7 + $0x50] sm:$0xff]
          %v2421 = vld [vmem:[#allocation7 + $0x58] sm:$0xff]
          %v2422 = vadd.f32 %v2414, 1e-05
          %v2423 = vadd.f32 %v2415, 1e-05
          %v2424 = vadd.f32 %v2416, 1e-05
          %v2425 = vadd.f32 %v2417, 1e-05
          %v2426 = vrsqrt.pop %v2422
          %v2427 = vrsqrt.pop %v2423
          %v2428 = vrsqrt.pop %v2424
          %v2429 = vrsqrt.pop %v2425
          %v2430 = vmul.f32 %v2418, %v2426
          %v2431 = vmul.f32 %v2419, %v2427
          %v2432 = vmul.f32 %v2420, %v2428
          %v2433 = vmul.f32 %v2421, %v2429
          %v2434 = vld [vmem:[#allocation7 + $0x60] sm:$0xff]
          %v2435 = vld [vmem:[#allocation7 + $0x68] sm:$0xff]
          %v2436 = vld [vmem:[#allocation7 + $0x70] sm:$0xff]
          %v2437 = vld [vmem:[#allocation7 + $0x78] sm:$0xff]
          %v2438 = vmul.f32 %v2398, %v2430
          %v2439 = vmul.f32 %v2399, %v2431
          %v2440 = vmul.f32 %v2400, %v2432
          %v2441 = vmul.f32 %v2401, %v2433
          %v2442 = vsub.f32 %v2434, %v2438
          %v2443 = vsub.f32 %v2435, %v2439
          %v2444 = vsub.f32 %v2436, %v2440
          %v2445 = vsub.f32 %v2437, %v2441
          %2447 = vset.pattern.permute.xlu0 0
          %2448 = vperm.xlu0 %2447, %v2430
          %v2449 = vpop.permute.xlu0 %2448
          %2452 = vset.pattern.permute.xlu0 0
          %2453 = vperm.xlu0 %2452, %v2431
          %v2454 = vpop.permute.xlu0 %2453
          %2457 = vset.pattern.permute.xlu0 0
          %2458 = vperm.xlu0 %2457, %v2432
          %v2459 = vpop.permute.xlu0 %2458
          %2462 = vset.pattern.permute.xlu0 0
          %2463 = vperm.xlu0 %2462, %v2433
          %v2464 = vpop.permute.xlu0 %2463
          %v2466 = vmul.f32 %v2386, %v2449
          %v2467 = vmul.f32 %v2387, %v2454
          %v2468 = vmul.f32 %v2388, %v2459
          %v2469 = vmul.f32 %v2389, %v2464
          %2471 = vset.pattern.permute.xlu0 0
          %2472 = vperm.xlu0 %2471, %v2442
          %v2473 = vpop.permute.xlu0 %2472
          %2476 = vset.pattern.permute.xlu0 0
          %2477 = vperm.xlu0 %2476, %v2443
          %v2478 = vpop.permute.xlu0 %2477
          %2481 = vset.pattern.permute.xlu0 0
          %2482 = vperm.xlu0 %2481, %v2444
          %v2483 = vpop.permute.xlu0 %2482
          %2486 = vset.pattern.permute.xlu0 0
          %2487 = vperm.xlu0 %2486, %v2445
          %v2488 = vpop.permute.xlu0 %2487
          %v2490 = vadd.f32 %v2466, %v2473
          %v2491 = vadd.f32 %v2467, %v2478
          %v2492 = vadd.f32 %v2468, %v2483
          %v2493 = vadd.f32 %v2469, %v2488
          %v2494 = vld [vmem:[#allocation7 + $0x80] sm:$0xff]
          %v2495 = vld [vmem:[#allocation7 + $0x88] sm:$0xff]
          %v2496 = vld [vmem:[#allocation7 + $0x90] sm:$0xff]
          %v2497 = vld [vmem:[#allocation7 + $0x98] sm:$0xff]
          %2499 = vset.pattern.permute.xlu0 0
          %2500 = vperm.xlu0 %2499, %v2496
          %v2501 = vpop.permute.xlu0 %2500
          %2504 = vset.pattern.permute.xlu0 0
          %2505 = vperm.xlu0 %2504, %v2497
          %v2506 = vpop.permute.xlu0 %2505
          %vm2508 = vcmask 261120
          %v2510 = vsel %vm2508, %v2494, 0
          %v2513 = vsel %vm2508, %v2495, 0
          %2515 = vmatprep.subr.mxu0 0.0
          %2516 = vmatpush1.msra.mxu0 %v2490
          %2517 = vmatprep.subr.mxu0 0.0
          %2518 = vmatpush1.msra.mxu0 %v2491
          %2519 = vmatprep.subr.mxu0 0.0
          %2520 = vmatpush1.msra.mxu0 %v2492
          %2521 = vmatprep.subr.mxu0 0.0
          %2522 = vmatpush1.msra.mxu0 %v2493
          %2523 = vmatprep.subr.mxu0 0.0
          %2524 = vmatpush1.msra.mxu0 0.0
          %2525 = vmatprep.subr.mxu0 0.0
          %2526 = vmatpush1.msra.mxu0 0.0
          %2527 = vmatprep.subr.mxu0 0.0
          %2528 = vmatpush1.msra.mxu0 0.0
          %2529 = vmatprep.subr.mxu0 0.0
          %2530 = vmatpush1.msra.mxu0 0.0
          %2531 = vmatprep.subr.mxu0 0.0
          %2532 = vmatpush1.msra.mxu0 0.0
          %2533 = vmatprep.subr.mxu0 0.0
          %2534 = vmatpush1.msra.mxu0 0.0
          %2535 = vmatprep.subr.mxu0 0.0
          %2536 = vmatpush1.msra.mxu0 0.0
          %2537 = vmatprep.subr.mxu0 0.0
          %2538 = vmatpush1.msra.mxu0 0.0
          %2539 = vmatprep.subr.mxu0 0.0
          %2540 = vmatpush1.msra.mxu0 0.0
          %2541 = vmatprep.subr.mxu0 0.0
          %2542 = vmatpush1.msra.mxu0 0.0
          %2543 = vmatprep.subr.mxu0 0.0
          %2544 = vmatpush1.msra.mxu0 0.0
          %2545 = vmatprep.subr.mxu0 0.0
          %2546 = vmatpush1.msra.mxu0 0.0
          %2547 = vmatprep.subr.mxu0 0.0
          %2548 = vmatpush1.msra.mxu0 0.0
          %2549 = vmatprep.subr.mxu0 0.0
          %2550 = vmatpush1.msra.mxu0 0.0
          %2551 = vmatprep.subr.mxu0 0.0
          %2552 = vmatpush1.msra.mxu0 0.0
          %2553 = vmatprep.subr.mxu0 0.0
          %2554 = vmatpush1.msra.mxu0 0.0
          %2555 = vmatprep.subr.mxu0 0.0
          %2556 = vmatpush1.msra.mxu0 0.0
          %2557 = vmatprep.subr.mxu0 0.0
          %2558 = vmatpush1.msra.mxu0 0.0
          %2559 = vmatprep.subr.mxu0 0.0
          %2560 = vmatpush1.msra.mxu0 0.0
          %2561 = vmatprep.subr.mxu0 0.0
          %2562 = vmatpush1.msra.mxu0 0.0
          %2563 = vmatprep.subr.mxu0 0.0
          %2564 = vmatpush1.msra.mxu0 0.0
          %2565 = vmatprep.subr.mxu0 0.0
          %2566 = vmatpush1.msra.mxu0 0.0
          %2567 = vmatprep.subr.mxu0 0.0
          %2568 = vmatpush1.msra.mxu0 0.0
          %2569 = vmatprep.subr.mxu0 0.0
          %2570 = vmatpush1.msra.mxu0 0.0
          %2571 = vmatprep.subr.mxu0 0.0
          %2572 = vmatpush1.msra.mxu0 0.0
          %2573 = vmatprep.subr.mxu0 0.0
          %2574 = vmatpush1.msra.mxu0 0.0
          %2575 = vmatprep.subr.mxu0 0.0
          %2576 = vmatpush1.msra.mxu0 0.0
          %2577 = vmatprep.subr.mxu0 0.0
          %2578 = vmatpush1.msra.mxu0 0.0
          %2579 = vmatprep.mubr.f32.mxu0 0.0
          %2580 = vmatmul.mubr.f32.gmra.mrb[0].mxu0 %v2510
          %v2581 = vpop.f32.mrb[0].mxu0
          %v2582 = vadd.f32 %v2501, %v2581
          %v2583 = vpop.f32.mrb[0].mxu0
          %2584 = vmatprep.mubr.f32.mxu0 0.0
          %2585 = vmatmul.mubr.f32.gmra.mrb[0].mxu0 %v2513
          %v2586 = vpop.f32.mrb[0].mxu0
          %v2587 = vadd.f32 %v2506, %v2586
          %v2588 = vpop.f32.mrb[0].mxu0
          %2589 = vdwg.mxu0
          %v2590 = vmax.f32 %v2582, 0.0
          %v2591 = vmax.f32 %v2587, 0.0
          %v2592 = vld [vmem:[#allocation3] sm:$0xff]
          %v2593 = vld [vmem:[#allocation3 + $0x8] sm:$0xff]
          %v2594 = vld [vmem:[#allocation3 + $0x10] sm:$0xff]
          %v2595 = vld [vmem:[#allocation3 + $0x18] sm:$0xff]
          %v2596 = vmul.f32 %v2592, 0.005
          %v2597 = vmul.f32 %v2593, 0.005
          %v2598 = vmul.f32 %v2594, 0.005
          %v2599 = vmul.f32 %v2595, 0.005
          %v2600 = vmul.f32 %v2596, %v2596
          %v2601 = vmul.f32 %v2597, %v2597
          %v2602 = vsub.f32 %v2598, %v2600
          %v2603 = vsub.f32 %v2599, %v2601
          %v2604 = vmax.f32 %v2602, 0.0
          %v2605 = vmax.f32 %v2603, 0.0
          %v2606 = vld [vmem:[#allocation7 + $0xa0] sm:$0xff]
          %v2607 = vld [vmem:[#allocation7 + $0xa8] sm:$0xff]
          %v2608 = vadd.f32 %v2604, 1e-05
          %v2609 = vadd.f32 %v2605, 1e-05
          %v2610 = vrsqrt.pop %v2608
          %v2611 = vrsqrt.pop %v2609
          %v2612 = vmul.f32 %v2606, %v2610
          %v2613 = vmul.f32 %v2607, %v2611
          %v2614 = vld [vmem:[#allocation7 + $0xb0] sm:$0xff]
          %v2615 = vld [vmem:[#allocation7 + $0xb8] sm:$0xff]
          %v2616 = vmul.f32 %v2596, %v2612
          %v2617 = vmul.f32 %v2597, %v2613
          %v2618 = vsub.f32 %v2614, %v2616
          %v2619 = vsub.f32 %v2615, %v2617
          %2621 = vset.pattern.permute.xlu0 0
          %2622 = vperm.xlu0 %2621, %v2612
          %v2623 = vpop.permute.xlu0 %2622
          %2626 = vset.pattern.permute.xlu0 0
          %2627 = vperm.xlu0 %2626, %v2613
          %v2628 = vpop.permute.xlu0 %2627
          %v2630 = vmul.f32 %v2590, %v2623
          %v2631 = vmul.f32 %v2591, %v2628
          %2633 = vset.pattern.permute.xlu0 0
          %2634 = vperm.xlu0 %2633, %v2618
          %v2635 = vpop.permute.xlu0 %2634
          %2638 = vset.pattern.permute.xlu0 0
          %2639 = vperm.xlu0 %2638, %v2619
          %v2640 = vpop.permute.xlu0 %2639
          %v2642 = vadd.f32 %v2630, %v2635
          %v2643 = vadd.f32 %v2631, %v2640
          %v2644 = vld [vmem:[#allocation7 + $0xc0] sm:$0xff]
          %v2645 = vld [vmem:[#allocation7 + $0xc8] sm:$0xff]
          %2647 = vset.pattern.permute.xlu0 0
          %2648 = vperm.xlu0 %2647, %v2645
          %v2649 = vpop.permute.xlu0 %2648
          %v2652 = vsel %vm2288, %v2644, 0
          %2654 = vmatprep.subr.mxu0 0.0
          %2655 = vmatpush1.msra.mxu0 %v2642
          %2656 = vmatprep.subr.mxu0 0.0
          %2657 = vmatpush1.msra.mxu0 %v2643
          %2658 = vmatprep.subr.mxu0 0.0
          %2659 = vmatpush1.msra.mxu0 0.0
          %2660 = vmatprep.subr.mxu0 0.0
          %2661 = vmatpush1.msra.mxu0 0.0
          %2662 = vmatprep.subr.mxu0 0.0
          %2663 = vmatpush1.msra.mxu0 0.0
          %2664 = vmatprep.subr.mxu0 0.0
          %2665 = vmatpush1.msra.mxu0 0.0
          %2666 = vmatprep.subr.mxu0 0.0
          %2667 = vmatpush1.msra.mxu0 0.0
          %2668 = vmatprep.subr.mxu0 0.0
          %2669 = vmatpush1.msra.mxu0 0.0
          %2670 = vmatprep.subr.mxu0 0.0
          %2671 = vmatpush1.msra.mxu0 0.0
          %2672 = vmatprep.subr.mxu0 0.0
          %2673 = vmatpush1.msra.mxu0 0.0
          %2674 = vmatprep.subr.mxu0 0.0
          %2675 = vmatpush1.msra.mxu0 0.0
          %2676 = vmatprep.subr.mxu0 0.0
          %2677 = vmatpush1.msra.mxu0 0.0
          %2678 = vmatprep.subr.mxu0 0.0
          %2679 = vmatpush1.msra.mxu0 0.0
          %2680 = vmatprep.subr.mxu0 0.0
          %2681 = vmatpush1.msra.mxu0 0.0
          %2682 = vmatprep.subr.mxu0 0.0
          %2683 = vmatpush1.msra.mxu0 0.0
          %2684 = vmatprep.subr.mxu0 0.0
          %2685 = vmatpush1.msra.mxu0 0.0
          %2686 = vmatprep.subr.mxu0 0.0
          %2687 = vmatpush1.msra.mxu0 0.0
          %2688 = vmatprep.subr.mxu0 0.0
          %2689 = vmatpush1.msra.mxu0 0.0
          %2690 = vmatprep.subr.mxu0 0.0
          %2691 = vmatpush1.msra.mxu0 0.0
          %2692 = vmatprep.subr.mxu0 0.0
          %2693 = vmatpush1.msra.mxu0 0.0
          %2694 = vmatprep.subr.mxu0 0.0
          %2695 = vmatpush1.msra.mxu0 0.0
          %2696 = vmatprep.subr.mxu0 0.0
          %2697 = vmatpush1.msra.mxu0 0.0
          %2698 = vmatprep.subr.mxu0 0.0
          %2699 = vmatpush1.msra.mxu0 0.0
          %2700 = vmatprep.subr.mxu0 0.0
          %2701 = vmatpush1.msra.mxu0 0.0
          %2702 = vmatprep.subr.mxu0 0.0
          %2703 = vmatpush1.msra.mxu0 0.0
          %2704 = vmatprep.subr.mxu0 0.0
          %2705 = vmatpush1.msra.mxu0 0.0
          %2706 = vmatprep.subr.mxu0 0.0
          %2707 = vmatpush1.msra.mxu0 0.0
          %2708 = vmatprep.subr.mxu0 0.0
          %2709 = vmatpush1.msra.mxu0 0.0
          %2710 = vmatprep.subr.mxu0 0.0
          %2711 = vmatpush1.msra.mxu0 0.0
          %2712 = vmatprep.subr.mxu0 0.0
          %2713 = vmatpush1.msra.mxu0 0.0
          %2714 = vmatprep.subr.mxu0 0.0
          %2715 = vmatpush1.msra.mxu0 0.0
          %2716 = vmatprep.subr.mxu0 0.0
          %2717 = vmatpush1.msra.mxu0 0.0
          %2718 = vmatprep.mubr.f32.mxu0 0.0
          %2719 = vmatmul.mubr.f32.gmra.mrb[0].mxu0 %v2652
          %v2720 = vpop.f32.mrb[0].mxu0
          %v2721 = vadd.f32 %v2649, %v2720
          %v2722 = vpop.f32.mrb[0].mxu0
          %2723 = vdwg.mxu0
          %v2724 = vmax.f32 %v2721, 0.0
          %v2725 = vld [vmem:[#allocation7 + $0xd0] sm:$0xff]
          %v2726 = vld [vmem:[#allocation7 + $0xd8] sm:$0xff]
          %v2727 = vld [vmem:[#allocation7 + $0xe0] sm:$0xff]
          %v2728 = vld [vmem:[#allocation7 + $0xe8] sm:$0xff]
          %2730 = vset.pattern.permute.xlu0 0
          %2731 = vperm.xlu0 %2730, %v2727
          %v2732 = vpop.permute.xlu0 %2731
          %2735 = vset.pattern.permute.xlu0 0
          %2736 = vperm.xlu0 %2735, %v2728
          %v2737 = vpop.permute.xlu0 %2736
          %vm2739 = vcmask 64512
          %v2741 = vsel %vm2739, %v2725, 0
          %v2744 = vsel %vm2739, %v2726, 0
          %2746 = vmatprep.subr.mxu0 0.0
          %2747 = vmatpush1.msra.mxu0 %v2724
          %2748 = vmatprep.subr.mxu0 0.0
          %2749 = vmatpush1.msra.mxu0 0.0
          %2750 = vmatprep.subr.mxu0 0.0
          %2751 = vmatpush1.msra.mxu0 0.0
          %2752 = vmatprep.subr.mxu0 0.0
          %2753 = vmatpush1.msra.mxu0 0.0
          %2754 = vmatprep.subr.mxu0 0.0
          %2755 = vmatpush1.msra.mxu0 0.0
          %2756 = vmatprep.subr.mxu0 0.0
          %2757 = vmatpush1.msra.mxu0 0.0
          %2758 = vmatprep.subr.mxu0 0.0
          %2759 = vmatpush1.msra.mxu0 0.0
          %2760 = vmatprep.subr.mxu0 0.0
          %2761 = vmatpush1.msra.mxu0 0.0
          %2762 = vmatprep.subr.mxu0 0.0
          %2763 = vmatpush1.msra.mxu0 0.0
          %2764 = vmatprep.subr.mxu0 0.0
          %2765 = vmatpush1.msra.mxu0 0.0
          %2766 = vmatprep.subr.mxu0 0.0
          %2767 = vmatpush1.msra.mxu0 0.0
          %2768 = vmatprep.subr.mxu0 0.0
          %2769 = vmatpush1.msra.mxu0 0.0
          %2770 = vmatprep.subr.mxu0 0.0
          %2771 = vmatpush1.msra.mxu0 0.0
          %2772 = vmatprep.subr.mxu0 0.0
          %2773 = vmatpush1.msra.mxu0 0.0
          %2774 = vmatprep.subr.mxu0 0.0
          %2775 = vmatpush1.msra.mxu0 0.0
          %2776 = vmatprep.subr.mxu0 0.0
          %2777 = vmatpush1.msra.mxu0 0.0
          %2778 = vmatprep.subr.mxu0 0.0
          %2779 = vmatpush1.msra.mxu0 0.0
          %2780 = vmatprep.subr.mxu0 0.0
          %2781 = vmatpush1.msra.mxu0 0.0
          %2782 = vmatprep.subr.mxu0 0.0
          %2783 = vmatpush1.msra.mxu0 0.0
          %2784 = vmatprep.subr.mxu0 0.0
          %2785 = vmatpush1.msra.mxu0 0.0
          %2786 = vmatprep.subr.mxu0 0.0
          %2787 = vmatpush1.msra.mxu0 0.0
          %2788 = vmatprep.subr.mxu0 0.0
          %2789 = vmatpush1.msra.mxu0 0.0
          %2790 = vmatprep.subr.mxu0 0.0
          %2791 = vmatpush1.msra.mxu0 0.0
          %2792 = vmatprep.subr.mxu0 0.0
          %2793 = vmatpush1.msra.mxu0 0.0
          %2794 = vmatprep.subr.mxu0 0.0
          %2795 = vmatpush1.msra.mxu0 0.0
          %2796 = vmatprep.subr.mxu0 0.0
          %2797 = vmatpush1.msra.mxu0 0.0
          %2798 = vmatprep.subr.mxu0 0.0
          %2799 = vmatpush1.msra.mxu0 0.0
          %2800 = vmatprep.subr.mxu0 0.0
          %2801 = vmatpush1.msra.mxu0 0.0
          %2802 = vmatprep.subr.mxu0 0.0
          %2803 = vmatpush1.msra.mxu0 0.0
          %2804 = vmatprep.subr.mxu0 0.0
          %2805 = vmatpush1.msra.mxu0 0.0
          %2806 = vmatprep.subr.mxu0 0.0
          %2807 = vmatpush1.msra.mxu0 0.0
          %2808 = vmatprep.subr.mxu0 0.0
          %2809 = vmatpush1.msra.mxu0 0.0
          %2810 = vmatprep.mubr.f32.mxu0 0.0
          %2811 = vmatmul.mubr.f32.gmra.mrb[0].mxu0 %v2741
          %v2812 = vpop.f32.mrb[0].mxu0
          %v2813 = vadd.f32 %v2732, %v2812
          %v2814 = vpop.f32.mrb[0].mxu0
          %2815 = vmatprep.mubr.f32.mxu0 0.0
          %2816 = vmatmul.mubr.f32.gmra.mrb[0].mxu0 %v2744
          %v2817 = vpop.f32.mrb[0].mxu0
          %v2818 = vadd.f32 %v2737, %v2817
          %v2819 = vpop.f32.mrb[0].mxu0
          %2820 = vdwg.mxu0
          %v2821 = vmax.f32 %v2813, 0.0
          %v2822 = vmax.f32 %v2818, 0.0
          %v2823 = vld [vmem:[#allocation4] sm:$0xff]
          %v2824 = vld [vmem:[#allocation4 + $0x8] sm:$0xff]
          %v2825 = vld [vmem:[#allocation4 + $0x10] sm:$0xff]
          %v2826 = vld [vmem:[#allocation4 + $0x18] sm:$0xff]
          %v2827 = vmul.f32 %v2823, 0.005
          %v2828 = vmul.f32 %v2824, 0.005
          %v2829 = vmul.f32 %v2825, 0.005
          %v2830 = vmul.f32 %v2826, 0.005
          %v2831 = vmul.f32 %v2827, %v2827
          %v2832 = vmul.f32 %v2828, %v2828
          %v2833 = vsub.f32 %v2829, %v2831
          %v2834 = vsub.f32 %v2830, %v2832
          %v2835 = vmax.f32 %v2833, 0.0
          %v2836 = vmax.f32 %v2834, 0.0
          %v2837 = vld [vmem:[#allocation7 + $0xf0] sm:$0xff]
          %v2838 = vld [vmem:[#allocation7 + $0xf8] sm:$0xff]
          %v2839 = vadd.f32 %v2835, 1e-05
          %v2840 = vadd.f32 %v2836, 1e-05
          %v2841 = vrsqrt.pop %v2839
          %v2842 = vrsqrt.pop %v2840
          %v2843 = vmul.f32 %v2837, %v2841
          %v2844 = vmul.f32 %v2838, %v2842
          %v2845 = vld [vmem:[#allocation7 + $0x100] sm:$0xff]
          %v2846 = vld [vmem:[#allocation7 + $0x108] sm:$0xff]
          %v2847 = vmul.f32 %v2827, %v2843
          %v2848 = vmul.f32 %v2828, %v2844
          %v2849 = vsub.f32 %v2845, %v2847
          %v2850 = vsub.f32 %v2846, %v2848
          %2852 = vset.pattern.permute.xlu0 0
          %2853 = vperm.xlu0 %2852, %v2843
          %v2854 = vpop.permute.xlu0 %2853
          %2857 = vset.pattern.permute.xlu0 0
          %2858 = vperm.xlu0 %2857, %v2844
          %v2859 = vpop.permute.xlu0 %2858
          %v2861 = vmul.f32 %v2821, %v2854
          %v2862 = vmul.f32 %v2822, %v2859
          %2864 = vset.pattern.permute.xlu0 0
          %2865 = vperm.xlu0 %2864, %v2849
          %v2866 = vpop.permute.xlu0 %2865
          %2869 = vset.pattern.permute.xlu0 0
          %2870 = vperm.xlu0 %2869, %v2850
          %v2871 = vpop.permute.xlu0 %2870
          %v2873 = vadd.f32 %v2861, %v2866
          %v2874 = vadd.f32 %v2862, %v2871
          %v2875 = vld [vmem:[#allocation7 + $0x110] sm:$0xff]
          %v2876 = vld [vmem:[#allocation7 + $0x118] sm:$0xff]
          %v2877 = vld [vmem:[#allocation7 + $0x120] sm:$0xff]
          %v2878 = vld [vmem:[#allocation7 + $0x128] sm:$0xff]
          %v2879 = vld [vmem:[#allocation7 + $0x130] sm:$0xff]
          %v2880 = vld [vmem:[#allocation7 + $0x138] sm:$0xff]
          %v2881 = vld [vmem:[#allocation7 + $0x140] sm:$0xff]
          %v2882 = vld [vmem:[#allocation7 + $0x148] sm:$0xff]
          %2884 = vset.pattern.permute.xlu0 0
          %2885 = vperm.xlu0 %2884, %v2879
          %v2886 = vpop.permute.xlu0 %2885
          %2889 = vset.pattern.permute.xlu0 0
          %2890 = vperm.xlu0 %2889, %v2880
          %v2891 = vpop.permute.xlu0 %2890
          %2894 = vset.pattern.permute.xlu0 0
          %2895 = vperm.xlu0 %2894, %v2881
          %v2896 = vpop.permute.xlu0 %2895
          %2899 = vset.pattern.permute.xlu0 0
          %2900 = vperm.xlu0 %2899, %v2882
          %v2901 = vpop.permute.xlu0 %2900
          %v2904 = vsel %vm2288, %v2875, 0
          %v2907 = vsel %vm2288, %v2876, 0
          %v2910 = vsel %vm2288, %v2877, 0
          %v2913 = vsel %vm2288, %v2878, 0
          %2915 = vmatprep.subr.mxu0 0.0
          %2916 = vmatpush1.msra.mxu0 %v2873
          %2917 = vmatprep.subr.mxu0 0.0
          %2918 = vmatpush1.msra.mxu0 %v2874
          %2919 = vmatprep.subr.mxu0 0.0
          %2920 = vmatpush1.msra.mxu0 0.0
          %2921 = vmatprep.subr.mxu0 0.0
          %2922 = vmatpush1.msra.mxu0 0.0
          %2923 = vmatprep.subr.mxu0 0.0
          %2924 = vmatpush1.msra.mxu0 0.0
          %2925 = vmatprep.subr.mxu0 0.0
          %2926 = vmatpush1.msra.mxu0 0.0
          %2927 = vmatprep.subr.mxu0 0.0
          %2928 = vmatpush1.msra.mxu0 0.0
          %2929 = vmatprep.subr.mxu0 0.0
          %2930 = vmatpush1.msra.mxu0 0.0
          %2931 = vmatprep.subr.mxu0 0.0
          %2932 = vmatpush1.msra.mxu0 0.0
          %2933 = vmatprep.subr.mxu0 0.0
          %2934 = vmatpush1.msra.mxu0 0.0
          %2935 = vmatprep.subr.mxu0 0.0
          %2936 = vmatpush1.msra.mxu0 0.0
          %2937 = vmatprep.subr.mxu0 0.0
          %2938 = vmatpush1.msra.mxu0 0.0
          %2939 = vmatprep.subr.mxu0 0.0
          %2940 = vmatpush1.msra.mxu0 0.0
          %2941 = vmatprep.subr.mxu0 0.0
          %2942 = vmatpush1.msra.mxu0 0.0
          %2943 = vmatprep.subr.mxu0 0.0
          %2944 = vmatpush1.msra.mxu0 0.0
          %2945 = vmatprep.subr.mxu0 0.0
          %2946 = vmatpush1.msra.mxu0 0.0
          %2947 = vmatprep.subr.mxu0 0.0
          %2948 = vmatpush1.msra.mxu0 0.0
          %2949 = vmatprep.subr.mxu0 0.0
          %2950 = vmatpush1.msra.mxu0 0.0
          %2951 = vmatprep.subr.mxu0 0.0
          %2952 = vmatpush1.msra.mxu0 0.0
          %2953 = vmatprep.subr.mxu0 0.0
          %2954 = vmatpush1.msra.mxu0 0.0
          %2955 = vmatprep.subr.mxu0 0.0
          %2956 = vmatpush1.msra.mxu0 0.0
          %2957 = vmatprep.subr.mxu0 0.0
          %2958 = vmatpush1.msra.mxu0 0.0
          %2959 = vmatprep.subr.mxu0 0.0
          %2960 = vmatpush1.msra.mxu0 0.0
          %2961 = vmatprep.subr.mxu0 0.0
          %2962 = vmatpush1.msra.mxu0 0.0
          %2963 = vmatprep.subr.mxu0 0.0
          %2964 = vmatpush1.msra.mxu0 0.0
          %2965 = vmatprep.subr.mxu0 0.0
          %2966 = vmatpush1.msra.mxu0 0.0
          %2967 = vmatprep.subr.mxu0 0.0
          %2968 = vmatpush1.msra.mxu0 0.0
          %2969 = vmatprep.subr.mxu0 0.0
          %2970 = vmatpush1.msra.mxu0 0.0
          %2971 = vmatprep.subr.mxu0 0.0
          %2972 = vmatpush1.msra.mxu0 0.0
          %2973 = vmatprep.subr.mxu0 0.0
          %2974 = vmatpush1.msra.mxu0 0.0
          %2975 = vmatprep.subr.mxu0 0.0
          %2976 = vmatpush1.msra.mxu0 0.0
          %2977 = vmatprep.subr.mxu0 0.0
          %2978 = vmatpush1.msra.mxu0 0.0
          %2979 = vmatprep.mubr.f32.mxu0 0.0
          %2980 = vmatmul.mubr.f32.gmra.mrb[0].mxu0 %v2904
          %v2981 = vpop.f32.mrb[0].mxu0
          %v2982 = vadd.f32 %v2886, %v2981
          %v2983 = vpop.f32.mrb[0].mxu0
          %2984 = vmatprep.mubr.f32.mxu0 0.0
          %2985 = vmatmul.mubr.f32.gmra.mrb[0].mxu0 %v2907
          %v2986 = vpop.f32.mrb[0].mxu0
          %v2987 = vadd.f32 %v2891, %v2986
          %v2988 = vpop.f32.mrb[0].mxu0
          %2989 = vmatprep.mubr.f32.mxu0 0.0
          %2990 = vmatmul.mubr.f32.gmra.mrb[0].mxu0 %v2910
          %v2991 = vpop.f32.mrb[0].mxu0
          %v2992 = vadd.f32 %v2896, %v2991
          %v2993 = vpop.f32.mrb[0].mxu0
          %2994 = vmatprep.mubr.f32.mxu0 0.0
          %2995 = vmatmul.mubr.f32.gmra.mrb[0].mxu0 %v2913
          %v2996 = vpop.f32.mrb[0].mxu0
          %v2997 = vadd.f32 %v2901, %v2996
          %v2998 = vpop.f32.mrb[0].mxu0
          %2999 = vdwg.mxu0
          %v3000 = vmax.f32 %v2982, 0.0
          %v3001 = vmax.f32 %v2987, 0.0
          %v3002 = vmax.f32 %v2992, 0.0
          %v3003 = vmax.f32 %v2997, 0.0
          %v3004 = vld [vmem:[#allocation5] sm:$0xff]
          %v3005 = vld [vmem:[#allocation5 + $0x8] sm:$0xff]
          %v3006 = vld [vmem:[#allocation5 + $0x10] sm:$0xff]
          %v3007 = vld [vmem:[#allocation5 + $0x18] sm:$0xff]
          %v3008 = vld [vmem:[#allocation5 + $0x20] sm:$0xff]
          %v3009 = vld [vmem:[#allocation5 + $0x28] sm:$0xff]
          %v3010 = vld [vmem:[#allocation5 + $0x30] sm:$0xff]
          %v3011 = vld [vmem:[#allocation5 + $0x38] sm:$0xff]
          %v3012 = vmul.f32 %v3004, 0.005
          %v3013 = vmul.f32 %v3005, 0.005
          %v3014 = vmul.f32 %v3006, 0.005
          %v3015 = vmul.f32 %v3007, 0.005
          %v3016 = vmul.f32 %v3008, 0.005
          %v3017 = vmul.f32 %v3009, 0.005
          %v3018 = vmul.f32 %v3010, 0.005
          %v3019 = vmul.f32 %v3011, 0.005
          %v3020 = vmul.f32 %v3012, %v3012
          %v3021 = vmul.f32 %v3013, %v3013
          %v3022 = vmul.f32 %v3014, %v3014
          %v3023 = vmul.f32 %v3015, %v3015
          %v3024 = vsub.f32 %v3016, %v3020
          %v3025 = vsub.f32 %v3017, %v3021
          %v3026 = vsub.f32 %v3018, %v3022
          %v3027 = vsub.f32 %v3019, %v3023
          %v3028 = vmax.f32 %v3024, 0.0
          %v3029 = vmax.f32 %v3025, 0.0
          %v3030 = vmax.f32 %v3026, 0.0
          %v3031 = vmax.f32 %v3027, 0.0
          %v3032 = vld [vmem:[#allocation7 + $0x150] sm:$0xff]
          %v3033 = vld [vmem:[#allocation7 + $0x158] sm:$0xff]
          %v3034 = vld [vmem:[#allocation7 + $0x160] sm:$0xff]
          %v3035 = vld [vmem:[#allocation7 + $0x168] sm:$0xff]
          %v3036 = vadd.f32 %v3028, 1e-05
          %v3037 = vadd.f32 %v3029, 1e-05
          %v3038 = vadd.f32 %v3030, 1e-05
          %v3039 = vadd.f32 %v3031, 1e-05
          %v3040 = vrsqrt.pop %v3036
          %v3041 = vrsqrt.pop %v3037
          %v3042 = vrsqrt.pop %v3038
          %v3043 = vrsqrt.pop %v3039
          %v3044 = vmul.f32 %v3032, %v3040
          %v3045 = vmul.f32 %v3033, %v3041
          %v3046 = vmul.f32 %v3034, %v3042
          %v3047 = vmul.f32 %v3035, %v3043
          %v3048 = vld [vmem:[#allocation7 + $0x170] sm:$0xff]
          %v3049 = vld [vmem:[#allocation7 + $0x178] sm:$0xff]
          %v3050 = vld [vmem:[#allocation7 + $0x180] sm:$0xff]
          %v3051 = vld [vmem:[#allocation7 + $0x188] sm:$0xff]
          %v3052 = vmul.f32 %v3012, %v3044
          %v3053 = vmul.f32 %v3013, %v3045
          %v3054 = vmul.f32 %v3014, %v3046
          %v3055 = vmul.f32 %v3015, %v3047
          %v3056 = vsub.f32 %v3048, %v3052
          %v3057 = vsub.f32 %v3049, %v3053
          %v3058 = vsub.f32 %v3050, %v3054
          %v3059 = vsub.f32 %v3051, %v3055
          %3061 = vset.pattern.permute.xlu0 0
          %3062 = vperm.xlu0 %3061, %v3044
          %v3063 = vpop.permute.xlu0 %3062
          %3066 = vset.pattern.permute.xlu0 0
          %3067 = vperm.xlu0 %3066, %v3045
          %v3068 = vpop.permute.xlu0 %3067
          %3071 = vset.pattern.permute.xlu0 0
          %3072 = vperm.xlu0 %3071, %v3046
          %v3073 = vpop.permute.xlu0 %3072
          %3076 = vset.pattern.permute.xlu0 0
          %3077 = vperm.xlu0 %3076, %v3047
          %v3078 = vpop.permute.xlu0 %3077
          %v3080 = vmul.f32 %v3000, %v3063
          %v3081 = vmul.f32 %v3001, %v3068
          %v3082 = vmul.f32 %v3002, %v3073
          %v3083 = vmul.f32 %v3003, %v3078
          %3085 = vset.pattern.permute.xlu0 0
          %3086 = vperm.xlu0 %3085, %v3056
          %v3087 = vpop.permute.xlu0 %3086
          %3090 = vset.pattern.permute.xlu0 0
          %3091 = vperm.xlu0 %3090, %v3057
          %v3092 = vpop.permute.xlu0 %3091
          %3095 = vset.pattern.permute.xlu0 0
          %3096 = vperm.xlu0 %3095, %v3058
          %v3097 = vpop.permute.xlu0 %3096
          %3100 = vset.pattern.permute.xlu0 0
          %3101 = vperm.xlu0 %3100, %v3059
          %v3102 = vpop.permute.xlu0 %3101
          %v3104 = vadd.f32 %v3080, %v3087
          %v3105 = vadd.f32 %v3081, %v3092
          %v3106 = vadd.f32 %v3082, %v3097
          %v3107 = vadd.f32 %v3083, %v3102
          %v3108 = vld [vmem:[#allocation7 + $0x190] sm:$0xff]
          %v3109 = vld [vmem:[#allocation7 + $0x198] sm:$0xff]
          %v3110 = vld [vmem:[#allocation7 + $0x1a0] sm:$0xff]
          %v3111 = vld [vmem:[#allocation7 + $0x1a8] sm:$0xff]
          %3113 = vset.pattern.permute.xlu0 0
          %3114 = vperm.xlu0 %3113, %v3110
          %v3115 = vpop.permute.xlu0 %3114
          %3118 = vset.pattern.permute.xlu0 0
          %3119 = vperm.xlu0 %3118, %v3111
          %v3120 = vpop.permute.xlu0 %3119
          %v3123 = vsel %vm2508, %v3108, 0
          %v3126 = vsel %vm2508, %v3109, 0
          %3128 = vmatprep.subr.mxu0 0.0
          %3129 = vmatpush1.msra.mxu0 %v3104
          %3130 = vmatprep.subr.mxu0 0.0
          %3131 = vmatpush1.msra.mxu0 %v3105
          %3132 = vmatprep.subr.mxu0 0.0
          %3133 = vmatpush1.msra.mxu0 %v3106
          %3134 = vmatprep.subr.mxu0 0.0
          %3135 = vmatpush1.msra.mxu0 %v3107
          %3136 = vmatprep.subr.mxu0 0.0
          %3137 = vmatpush1.msra.mxu0 0.0
          %3138 = vmatprep.subr.mxu0 0.0
          %3139 = vmatpush1.msra.mxu0 0.0
          %3140 = vmatprep.subr.mxu0 0.0
          %3141 = vmatpush1.msra.mxu0 0.0
          %3142 = vmatprep.subr.mxu0 0.0
          %3143 = vmatpush1.msra.mxu0 0.0
          %3144 = vmatprep.subr.mxu0 0.0
          %3145 = vmatpush1.msra.mxu0 0.0
          %3146 = vmatprep.subr.mxu0 0.0
          %3147 = vmatpush1.msra.mxu0 0.0
          %3148 = vmatprep.subr.mxu0 0.0
          %3149 = vmatpush1.msra.mxu0 0.0
          %3150 = vmatprep.subr.mxu0 0.0
          %3151 = vmatpush1.msra.mxu0 0.0
          %3152 = vmatprep.subr.mxu0 0.0
          %3153 = vmatpush1.msra.mxu0 0.0
          %3154 = vmatprep.subr.mxu0 0.0
          %3155 = vmatpush1.msra.mxu0 0.0
          %3156 = vmatprep.subr.mxu0 0.0
          %3157 = vmatpush1.msra.mxu0 0.0
          %3158 = vmatprep.subr.mxu0 0.0
          %3159 = vmatpush1.msra.mxu0 0.0
          %3160 = vmatprep.subr.mxu0 0.0
          %3161 = vmatpush1.msra.mxu0 0.0
          %3162 = vmatprep.subr.mxu0 0.0
          %3163 = vmatpush1.msra.mxu0 0.0
          %3164 = vmatprep.subr.mxu0 0.0
          %3165 = vmatpush1.msra.mxu0 0.0
          %3166 = vmatprep.subr.mxu0 0.0
          %3167 = vmatpush1.msra.mxu0 0.0
          %3168 = vmatprep.subr.mxu0 0.0
          %3169 = vmatpush1.msra.mxu0 0.0
          %3170 = vmatprep.subr.mxu0 0.0
          %3171 = vmatpush1.msra.mxu0 0.0
          %3172 = vmatprep.subr.mxu0 0.0
          %3173 = vmatpush1.msra.mxu0 0.0
          %3174 = vmatprep.subr.mxu0 0.0
          %3175 = vmatpush1.msra.mxu0 0.0
          %3176 = vmatprep.subr.mxu0 0.0
          %3177 = vmatpush1.msra.mxu0 0.0
          %3178 = vmatprep.subr.mxu0 0.0
          %3179 = vmatpush1.msra.mxu0 0.0
          %3180 = vmatprep.subr.mxu0 0.0
          %3181 = vmatpush1.msra.mxu0 0.0
          %3182 = vmatprep.subr.mxu0 0.0
          %3183 = vmatpush1.msra.mxu0 0.0
          %3184 = vmatprep.subr.mxu0 0.0
          %3185 = vmatpush1.msra.mxu0 0.0
          %3186 = vmatprep.subr.mxu0 0.0
          %3187 = vmatpush1.msra.mxu0 0.0
          %3188 = vmatprep.subr.mxu0 0.0
          %3189 = vmatpush1.msra.mxu0 0.0
          %3190 = vmatprep.subr.mxu0 0.0
          %3191 = vmatpush1.msra.mxu0 0.0
          %3192 = vmatprep.mubr.f32.mxu0 0.0
          %3193 = vmatmul.mubr.f32.gmra.mrb[0].mxu0 %v3123
          %v3194 = vpop.f32.mrb[0].mxu0
          %v3195 = vadd.f32 %v3115, %v3194
          %v3196 = vpop.f32.mrb[0].mxu0
          %3197 = vmatprep.mubr.f32.mxu0 0.0
          %3198 = vmatmul.mubr.f32.gmra.mrb[0].mxu0 %v3126
          %v3199 = vpop.f32.mrb[0].mxu0
          %v3200 = vadd.f32 %v3120, %v3199
          %v3201 = vpop.f32.mrb[0].mxu0
          %3202 = vdwg.mxu0
          %3203 = vst [vmem:[%s252] sm:$0xff] %v2724
          %3204 = vst [vmem:[%s246] sm:$0xff] %v3195
          %3205 = vst [vmem:[%s246 + $0x8] sm:$0xff] %v3200
        $region106: #{refined_transaction_autoencoder.1} parent=61 // pred_fallthru
          _
        %p3206 = scmp.eq.s32.totalorder %s20, 4
        %s3207 = scalar_select %p3206, %s21, 0
        %p3208 = scmp.lt.s32.totalorder %s3207, 1
        %s3209 = scalar_select %p3208, %s3207, 1
        %s3210 = smul.addr %s3209, 8
        %s3211 = scalar_lea.vmem %s2, %s3210
        %s3212 = sand.u32 %s117, 1
        %s3213 = sand.u32 %s117, 1
        %s3214 = smul.addr %s3213, 16
        %s3215 = scalar_lea.vmem [#allocation9], %s3214
        // Predicated region
        $region107: #{refined_transaction_autoencoder.1} parent=61 // pred_check
          %p3216 = pneg %p97
        $region108: #{refined_transaction_autoencoder.1} parent=61 // pred_check_branch
          %3218 = sbr.rel (%p3216) target = $region110
        $region109: #{refined_transaction_autoencoder.1} parent=61 // pred_region
          %p3219 = scmp.eq.s32.totalorder %s20, 4
          %s3220 = scalar_select %p3219, %s21, 0
        $region110: #{refined_transaction_autoencoder.1} parent=61 // pred_fallthru
          _
        // Predicated region
        $region111: #{refined_transaction_autoencoder.1} parent=61 // pred_check
          %p3221 = pneg %p127
        $region112: #{refined_transaction_autoencoder.1} parent=61 // pred_check_branch
          %3223 = sbr.rel (%p3221) target = $region114
        $region113: #{refined_transaction_autoencoder.1} parent=61 // pred_region
          %p3224 = scmp.eq.s32.totalorder %s20, 4
          %s3225 = scalar_select %p3224, %s21, 0
          %s3226 = smul.addr %s3225, 8
          %s3227 = scalar_lea.vmem %s3, %s3226
          // Predicated region
          $region115: #{refined_transaction_autoencoder.1} parent=113 // pred_check
            _
          $region116: #{refined_transaction_autoencoder.1} parent=113 // pred_check_branch
            %3229 = sbr.rel (0) target = $region118
          $region117: #{refined_transaction_autoencoder.1} parent=113 // pred_region
            // Predicated region
            $region119: #{refined_transaction_autoencoder.1} parent=117 // pred_check
              _
            $region120: #{refined_transaction_autoencoder.1} parent=117 // pred_check_branch
              %3231 = sbr.rel (0) target = $region122
            $region121: #{refined_transaction_autoencoder.1} parent=117 // pred_region
              // Predicated region
              $region134: #{refined_transaction_autoencoder.1} parent=121 // pred_check
                _
              $region135: #{refined_transaction_autoencoder.1} parent=121 // pred_check_branch
                %3248 = sbr.rel (0) target = $region137
              $region136: #{refined_transaction_autoencoder.1} parent=121 // pred_region
                loop: start=0, step=1, limit=1
                $region138: #{refined_transaction_autoencoder.1} parent=136 // loop_pre_header
                  _
                $region139: #{refined_transaction_autoencoder.1} parent=136 // loop_header
                  %s3250 = sphi 0, %s3254
                  %p3251 = scmp.ge.s32.totalorder %s3250, 1
                  %s3255 = sphi %s3215, %s3215
                  %s3256 = sphi %s3227, %s3227
                $region140: #{refined_transaction_autoencoder.1} parent=136 // loop_header_branch
                  %3253 = sbr.rel (%p3251) target = $region144
                $region141: #{refined_transaction_autoencoder.1} parent=136 // loop_body
                  %v3257 = vld [vmem:[%s3255] sm:$0xff]
                  %3258 = vst [vmem:[%s3256] sm:$0xff] %v3257
                  %v3259 = vld [vmem:[%s3255 + $0x8] sm:$0xff]
                  %3260 = vst [vmem:[%s3256 + $0x10] sm:$0xff] %v3259
                $region142: #{refined_transaction_autoencoder.1} parent=136 // loop_footer
                  %s3254 = sadd.s32 1, %s3250
                $region143: #{refined_transaction_autoencoder.1} parent=136 // loop_footer_branch
                  %3249 = sbr.rel target = $region139
                $region144: #{refined_transaction_autoencoder.1} parent=136 // loop_exit
                  _
              $region137: #{refined_transaction_autoencoder.1} parent=121 // pred_fallthru
                _
              // Predicated region
              $region145: #{refined_transaction_autoencoder.1} parent=121 // pred_check
                _
              $region146: #{refined_transaction_autoencoder.1} parent=121 // pred_check_branch
                %3262 = sbr.rel target = $region148
              $region147: #{refined_transaction_autoencoder.1} parent=121 // pred_region
                _
              $region148: #{refined_transaction_autoencoder.1} parent=121 // pred_fallthru
                _
            $region122: #{refined_transaction_autoencoder.1} parent=117 // pred_fallthru
              _
            // Predicated region
            $region123: #{refined_transaction_autoencoder.1} parent=117 // pred_check
              _
            $region124: #{refined_transaction_autoencoder.1} parent=117 // pred_check_branch
              %3233 = sbr.rel target = $region126
            $region125: #{refined_transaction_autoencoder.1} parent=117 // pred_region
              loop: start=0, step=1, limit=1
              $region127: #{refined_transaction_autoencoder.1} parent=125 // loop_pre_header
                _
              $region128: #{refined_transaction_autoencoder.1} parent=125 // loop_header
                %s3236 = sphi 0, %s3240
                %p3237 = scmp.ge.s32.totalorder %s3236, 1
                %s3241 = sphi %s3215, %s3215
                %s3242 = sphi %s3227, %s3227
              $region129: #{refined_transaction_autoencoder.1} parent=125 // loop_header_branch
                %3239 = sbr.rel (%p3237) target = $region133
              $region130: #{refined_transaction_autoencoder.1} parent=125 // loop_body
                %v3243 = vld [vmem:[%s3241] sm:$0xff]
                %3244 = vst [vmem:[%s3242] sm:$0xff] %v3243
                %v3245 = vld [vmem:[%s3241 + $0x8] sm:$0xff]
                %3246 = vst [vmem:[%s3242 + $0x10] sm:$0xff] %v3245
              $region131: #{refined_transaction_autoencoder.1} parent=125 // loop_footer
                %s3240 = sadd.s32 1, %s3236
              $region132: #{refined_transaction_autoencoder.1} parent=125 // loop_footer_branch
                %3235 = sbr.rel target = $region128
              $region133: #{refined_transaction_autoencoder.1} parent=125 // loop_exit
                _
            $region126: #{refined_transaction_autoencoder.1} parent=117 // pred_fallthru
              _
          $region118: #{refined_transaction_autoencoder.1} parent=113 // pred_fallthru
            _
          %3263 = vnop
        $region114: #{refined_transaction_autoencoder.1} parent=61 // pred_fallthru
          _
      $region62: #{refined_transaction_autoencoder.1} parent=5 // pred_fallthru
        _
      %p3264 = scmp.le.s32.totalorder 2, %s11
      // Predicated region
      $region149: #{refined_transaction_autoencoder.1} parent=5 // pred_check
        %p3265 = pneg %p3264
      $region150: #{refined_transaction_autoencoder.1} parent=5 // pred_check_branch
        %3267 = sbr.rel (%p3265) target = $region152
      $region151: #{refined_transaction_autoencoder.1} parent=5 // pred_region
        %s3268 = ssub.s32 %s11, 2
        // Predicated region
        $region153: #{refined_transaction_autoencoder.1} parent=151 // pred_check
          %p3269 = pneg %p103
        $region154: #{refined_transaction_autoencoder.1} parent=151 // pred_check_branch
          %3271 = sbr.rel (%p3269) target = $region156
        $region155: #{refined_transaction_autoencoder.1} parent=151 // pred_region
          %p3272 = scmp.eq.s32.totalorder %s22, 4
          %s3273 = scalar_select %p3272, %s23, 0
          %p3274 = scmp.lt.s32.totalorder %s3273, 1
          %s3275 = scalar_select %p3274, %s3273, 1
          %s3276 = smul.addr %s3275, 8
          %s3277 = scalar_lea.vmem %s2, %s3276
        $region156: #{refined_transaction_autoencoder.1} parent=151 // pred_fallthru
          _
        // Predicated region
        $region157: #{refined_transaction_autoencoder.1} parent=151 // pred_check
          %p3278 = pneg %p133
        $region158: #{refined_transaction_autoencoder.1} parent=151 // pred_check_branch
          %3280 = sbr.rel (%p3278) target = $region160
        $region159: #{refined_transaction_autoencoder.1} parent=151 // pred_region
          %s3281 = sand.u32 %s118, 1
          %s3282 = sand.u32 %s118, 1
          %s3283 = smul.addr %s3282, 16
          %s3284 = scalar_lea.vmem [#allocation9], %s3283
        $region160: #{refined_transaction_autoencoder.1} parent=151 // pred_fallthru
          _
      $region152: #{refined_transaction_autoencoder.1} parent=5 // pred_fallthru
        _
    $region6: #{refined_transaction_autoencoder.1} parent=1 // loop_footer
      %s15 = sadd.s32 1, %s11
    $region7: #{refined_transaction_autoencoder.1} parent=1 // loop_footer_branch
      %10 = sbr.rel target = $region3
    $region8: #{refined_transaction_autoencoder.1} parent=1 // loop_exit
      _
    %3285 = vsyncpa [#allocation8], 1
    %s3286 = scalar_lea.sflag [#allocation8], 1
    %3287 = vsyncpa %s3286, 1

</llo_original>
